<compile_context>
chip_gen: v7x
topology: tpu7x:2x2x1
jax: 0.10.0
libtpu: 0.0.40
codegen_flags: <defaults>
</compile_context>

<pallas_src>
import functools

import jax
import jax.numpy as jnp
import numpy as np
from jax import lax
from jax.experimental import pallas as pl
from jax.experimental.pallas import tpu as pltpu


def _round_up(x, mult):
    return ((x + mult - 1) // mult) * mult


def _topk_row_mask(lam, k):
    """Exact top-k mask per row of lam (bsz, m); lowest-index tie-break
    (matches lax.top_k).  Scale-gated: pairwise rank for m <= 128, serial
    O(k*m) selection chain for larger m (avoids the (bsz, m, m) blow-up)."""
    _, m = lam.shape
    if k >= m:
        return jnp.ones_like(lam)
    if m <= 128:
        idx_self = lax.broadcasted_iota(jnp.int32, (m, m), 0)
        idx_other = lax.broadcasted_iota(jnp.int32, (m, m), 1)
        prior = (idx_other < idx_self)[None, :, :]            # lower index wins ties
        gt = lam[:, None, :] > lam[:, :, None]
        eq = lam[:, None, :] == lam[:, :, None]
        beats = jnp.logical_or(gt, jnp.logical_and(eq, prior))
        rank = jnp.sum(jnp.where(beats, 1.0, 0.0), axis=2)    # (bsz, m)
        return jnp.where(rank < float(k), 1.0, 0.0)
    # Large m: k iterations of (row max -> first arg-max -> mask), O(k*m).
    col = lax.broadcasted_iota(jnp.int32, lam.shape, 1)

    def body(_, carry):
        work, sel = carry
        vmax = jnp.max(work, axis=1, keepdims=True)
        first = jnp.min(jnp.where(work == vmax, col, m), axis=1, keepdims=True)
        newly = col == first
        sel = jnp.where(newly, 1.0, sel)
        work = jnp.where(newly, -jnp.inf, work)
        return work, sel

    _, sel = lax.fori_loop(0, k, body, (lam, jnp.zeros_like(lam)))
    return sel


def _rsm_seq_kernel(xa_ref, xb0_ref, phi0_ref, w_ref, wd_ref, bd_ref,
                    out_ref, xb_f_ref, phi_f_ref, psi_f_ref,
                    xcat_sc, phi_sc,
                    *, m, n, k, kwc, gamma, d_in_pad):
    """One recurrent step per grid index t (grid axis 0 = time, sequential).

    xa_ref:    (1, bsz_p, d_in_pad) this step's feed-forward input (zero-padded)
    xb0_ref:   (bsz_p, tc)          initial memory, flat cell-major (c = j*m+i)
    phi0_ref:  (bsz_p, n, m)        initial inhibition
    w_ref:     (d_in_pad+tc, tc)    fused [Wa | Wb] weight, cell-major outputs
    wd_ref:    (m, d_out_pad)       decode weight (zero-padded columns)
    bd_ref:    (1, d_out_pad)       decode bias   (zero-padded)
    out_ref:   (1, bsz_p, d_out_pad) per-step decoded prediction (lane-dense)
    xb_f_ref / phi_f_ref / psi_f_ref: final hidden state (written at t == T-1)
    xcat_sc:   (bsz_p, d_in_pad+tc) resident [x_a | x_b] matmul operand
    phi_sc:    (bsz_p, n, m)        resident inhibition state
    """
    mm_dtype = w_ref.dtype
    bsz_p = xb0_ref.shape[0]
    tc = m * n
    hp = jax.lax.Precision.HIGHEST
    t = pl.program_id(0)

    # t == 0: load the initial recurrent state into the persistent scratch.
    @pl.when(t == 0)
    def _init():
        xcat_sc[:, d_in_pad:] = xb0_ref[...].astype(mm_dtype)
        phi_sc[...] = phi0_ref[...]

    # Place this step's x_a next to the resident x_b (lane-aligned slice since
    # d_in_pad is a multiple of 128) -> sigma is ONE fused MXU matmul.
    xcat_sc[:, :d_in_pad] = xa_ref[0].astype(mm_dtype)

    sigma_flat = jnp.dot(xcat_sc[...], w_ref[...],
                         precision=hp,
                         preferred_element_type=jnp.float32)      # (bsz, tc)
    sigma = sigma_flat.reshape(bsz_p, n, m)                       # cells on sublanes, cols on lanes

    # Global sigma.min() over batch AND cells (matches torch sigma.min()).
    smin = jnp.min(sigma_flat, axis=1, keepdims=True)
    smin = jnp.min(smin, axis=0, keepdims=True).reshape(1, 1, 1)

    phi = phi_sc[...]                                             # (bsz, n, m)
    pi = (1.0 - phi) * (sigma - smin + 1.0)                       # rsm_inhibition

    lam = jnp.max(pi, axis=1)                                     # (bsz, m) column max
    m_lam = _topk_row_mask(lam, k)                                # k winning columns

    if kwc >= n:
        y_pre = m_lam[:, None, :] * sigma
    else:
        # top-k_winner_cells per column: pairwise rank over the tiny static
        # cell axis, vectorized as (bsz, n, m) ops (unrolled only over 'other').
        j_self = lax.broadcasted_iota(jnp.int32, (1, n, m), 1)
        rank = jnp.zeros_like(pi)
        for jp in range(n):
            other = pi[:, jp:jp + 1, :]                           # (bsz, 1, m)
            beats = jnp.logical_or(
                other > pi, jnp.logical_and(other == pi, jp < j_self))
            rank = rank + jnp.where(beats, 1.0, 0.0)
        m_pi = jnp.where(rank < float(kwc), 1.0, 0.0)
        y_pre = m_pi * m_lam[:, None, :] * sigma

    y3 = jnp.tanh(y_pre)                                          # (bsz, n, m)
    y_flat = y3.reshape(bsz_p, tc)
    phi_new = jnp.maximum(phi * gamma, y3)
    ymax = jnp.max(y3, axis=1)                                    # (bsz, m) column max

    # Decode from column max; lane-dense (d_out padded to 128) store per step.
    out_ref[0] = (jnp.dot(ymax, wd_ref[...], precision=hp,
                          preferred_element_type=jnp.float32)
                  + bd_ref[...])

    # Final hidden (written once).  psi = pre-update memory: read the scratch
    # BEFORE the recurrent update below overwrites it.
    @pl.when(t == pl.num_programs(0) - 1)
    def _finalize():
        psi_f_ref[...] = xcat_sc[:, d_in_pad:].astype(jnp.float32)
        xb_f_ref[...] = y_flat
        phi_f_ref[...] = phi_new

    # Recurrent state update (x_b_norm=False default -> x_b <- y).
    phi_sc[...] = phi_new
    xcat_sc[:, d_in_pad:] = y_flat.astype(mm_dtype)


def prepare_rsm_params(params, *, m, n, matmul_dtype=jnp.float32):
    """One-time (per weight set) re-layout, hoisted out of the recurrent path.

    * linear_a and linear_b fuse into ONE (d_in_pad+tc, tc) weight whose output
      columns are cell-major (c = j*m + i): Wa tiled n times + permuted Wb.
    * d_in / d_out are zero-padded to multiples of 128 (lane-aligned x_a write,
      lane-dense output stores) -- zero weight rows/cols keep values unchanged.
    * On v5e/v6e/v7x pass matmul_dtype=jnp.bfloat16 to halve weight DMA / VMEM
      bytes (elementwise math stays f32); validate tolerance first, the
      recurrent x_b then round-trips through bf16 every step.
    """
    tc = m * n
    f32 = jnp.float32
    wa_t = jnp.asarray(params["w_a"], f32).T                      # (d_in, m)
    d_in = wa_t.shape[0]
    d_in_pad = _round_up(d_in, 128)
    wa_pad = jnp.zeros((d_in_pad, m), f32).at[:d_in, :].set(wa_t)
    w_top = jnp.tile(wa_pad, (1, n))                              # col c=j*m+i -> Wa[:, i]
    wb_cm = (jnp.asarray(params["w_b"], f32).T
             .reshape(m, n, m, n).transpose(1, 0, 3, 2).reshape(tc, tc))
    w_fused = jnp.concatenate([w_top, wb_cm], axis=0).astype(matmul_dtype)

    wd_t = jnp.asarray(params["w_d"], f32).T                      # (m, d_out)
    d_out = wd_t.shape[1]
    d_out_pad = _round_up(d_out, 128)
    wd = jnp.zeros((m, d_out_pad), f32).at[:, :d_out].set(wd_t)
    bd = jnp.zeros((1, d_out_pad), f32).at[:, :d_out].set(
        jnp.asarray(params["b_d"], f32).reshape(1, -1))
    return dict(w_fused=w_fused, wd=wd, bd=bd, d_in=d_in, d_in_pad=d_in_pad,
                d_out=d_out, d_out_pad=d_out_pad, matmul_dtype=matmul_dtype)


def to_cell_major(x, *, m, n):
    b = x.shape[0]
    return x.reshape(b, m, n).transpose(0, 2, 1).reshape(b, m * n)


def to_group_major(x, *, m, n):
    b = x.shape[0]
    return x.reshape(b, n, m).transpose(0, 2, 1).reshape(b, m * n)


def rsm_forward_sequence_pallas(x_a_seq, hidden_cm, prep, *, m, n, k, kwc, gamma):
    """Run T recurrent RSM steps in ONE pallas_call.  Time is grid axis 0
    ('arbitrary' => sequential); the recurrent state lives in VMEM scratch and
    the fused weight has a constant index_map (DMA'd from HBM once)."""
    x_b_cm, _x_b_above, phi_cm, _psi_cm = hidden_cm
    T, bsz, d_in = x_a_seq.shape
    tc = m * n
    d_in_pad, d_out, d_out_pad = prep["d_in_pad"], prep["d_out"], prep["d_out_pad"]
    mm_dtype = prep["matmul_dtype"]

    # Sublane padding: replicate the last batch row up to a multiple of 8.
    # Replication (not zeros) keeps the batch-coupled global sigma.min()
    # bit-identical; duplicated rows evolve identically and are sliced off.
    bsz_p = max(8, _round_up(bsz, 8))

    def pad_batch(x, axis):
        pad = bsz_p - x.shape[axis]
        if pad == 0:
            return x
        cfg = [(0, 0)] * x.ndim
        cfg[axis] = (0, pad)
        return jnp.pad(x, cfg, mode="edge")

    xa = jnp.pad(x_a_seq, ((0, 0), (0, 0), (0, d_in_pad - d_in)))  # zero-pad features
    xa = pad_batch(xa, 1)
    xb0 = pad_batch(x_b_cm, 0)
    phi0 = pad_batch(phi_cm, 0).reshape(bsz_p, n, m)

    kernel = functools.partial(_rsm_seq_kernel, m=m, n=n, k=k, kwc=kwc,
                               gamma=gamma, d_in_pad=d_in_pad)
    const2 = lambda t: (0, 0)
    const3 = lambda t: (0, 0, 0)

    # NOTE: constant index_maps keep the weights / init state resident (no
    # per-step re-DMA).  pipeline_mode=pl.Buffered(1) on the weight would also
    # drop its second buffer -- only worth it once tc is large enough to
    # pressure VMEM (see module-level TODO).
    out_seq, xb_f, phi_f, psi_f = pl.pallas_call(
        kernel,
        grid=(T,),
        in_specs=[
            pl.BlockSpec((1, bsz_p, d_in_pad), lambda t: (t, 0, 0)),   # x_a[t]
            pl.BlockSpec((bsz_p, tc), const2),                         # x_b init
            pl.BlockSpec((bsz_p, n, m), const3),                       # phi init
            pl.BlockSpec((d_in_pad + tc, tc), const2),                 # fused W
            pl.BlockSpec((m, d_out_pad), const2),                      # W_d
            pl.BlockSpec((1, d_out_pad), const2),                      # b_d
        ],
        out_specs=[
            pl.BlockSpec((1, bsz_p, d_out_pad), lambda t: (t, 0, 0)),  # out[t]
            pl.BlockSpec((bsz_p, tc), const2),                         # x_b final
            pl.BlockSpec((bsz_p, n, m), const3),                       # phi final
            pl.BlockSpec((bsz_p, tc), const2),                         # psi final
        ],
        out_shape=[
            jax.ShapeDtypeStruct((T, bsz_p, d_out_pad), jnp.float32),
            jax.ShapeDtypeStruct((bsz_p, tc), jnp.float32),
            jax.ShapeDtypeStruct((bsz_p, n, m), jnp.float32),
            jax.ShapeDtypeStruct((bsz_p, tc), jnp.float32),
        ],
        scratch_shapes=[
            pltpu.VMEM((bsz_p, d_in_pad + tc), mm_dtype),   # resident [x_a | x_b]
            pltpu.VMEM((bsz_p, n, m), jnp.float32),         # resident phi
        ],
        compiler_params=pltpu.CompilerParams(
            dimension_semantics=("arbitrary",),             # recurrent => sequential
            vmem_limit_bytes=32 * 1024 * 1024),             # raises v5e's 16 MiB default
    )(xa, xb0, phi0, prep["w_fused"], prep["wd"], prep["bd"])

    out_seq = out_seq[:, :bsz, :d_out]
    xb_f = xb_f[:bsz]
    phi_f = phi_f[:bsz].reshape(bsz, tc)
    psi_f = psi_f[:bsz]
    return out_seq, (xb_f, phi_f, psi_f)


def rsm_forward_pallas(x_a, hidden_cm, prep, *, m, n, k, kwc, gamma):
    """Single-step forward (module semantics): the T=1 case of the fused kernel."""
    out_seq, hidden = rsm_forward_sequence_pallas(
        x_a[None], hidden_cm, prep, m=m, n=n, k=k, kwc=kwc, gamma=gamma)
    return out_seq[0], hidden


def rsm_reference(x_a, hidden, params, *, m, n, k, kwc, gamma):
    """Pure-JAX replication of RSMLayer.forward (default config) for checking."""
    x_b, _x_b_above, phi, _psi = hidden
    bsz = x_a.shape[0]
    tc = m * n
    hp = jax.lax.Precision.HIGHEST
    z_a = jnp.dot(x_a, params["w_a"].T, precision=hp)
    sigma = jnp.repeat(z_a, n, axis=1) + jnp.dot(x_b, params["w_b"].T, precision=hp)
    pi = (1.0 - phi) * (sigma - sigma.min() + 1.0)
    pig = pi.reshape(bsz, m, n)
    lam = pig.max(axis=2)
    if kwc >= n:
        m_pi = jnp.ones((bsz, tc), jnp.float32)
    else:
        _, gi = lax.top_k(pig, kwc)
        m_pi = jax.nn.one_hot(gi, n, dtype=jnp.float32).sum(axis=2).reshape(bsz, tc)
    _, ci = lax.top_k(lam, k)
    col_mask = jax.nn.one_hot(ci, m, dtype=jnp.float32).sum(axis=1)
    m_lambda = jnp.repeat(col_mask, n, axis=1)
    y = jnp.tanh(m_pi * m_lambda * sigma)
    phi_new = jnp.maximum(phi * gamma, y)
    dec_in = y.reshape(bsz, m, n).max(axis=2)
    out = jnp.dot(dec_in, params["w_d"].T, precision=hp) + params["b_d"]
    return out, (y, phi_new, x_b)


if __name__ == "__main__":
    M, N, K, KWC = 16, 4, 4, 1
    GAMMA = 0.5
    BSZ, D_IN, D_OUT, T = 2, 32, 32, 8
    TC = M * N

    key = jax.random.PRNGKey(0)
    ks = jax.random.split(key, 8)
    SD = 0.03  # matches _init_linear_weights normal_(0.0, 0.03)
    params = dict(
        w_a=SD * jax.random.normal(ks[0], (M, D_IN), jnp.float32),   # linear_a (no bias)
        w_b=SD * jax.random.normal(ks[1], (TC, TC), jnp.float32),    # linear_b (no bias)
        w_d=SD * jax.random.normal(ks[2], (D_OUT, M), jnp.float32),  # linear_d
        b_d=SD * jax.random.normal(ks[3], (D_OUT,), jnp.float32),    # linear_d bias
    )

    x_a_seq = jax.random.normal(ks[4], (T, BSZ, D_IN), jnp.float32)
    x_b = jax.random.uniform(ks[5], (BSZ, TC), dtype=jnp.float32)
    phi = jax.random.uniform(ks[6], (BSZ, TC), dtype=jnp.float32)
    psi = jax.random.uniform(ks[7], (BSZ, TC), dtype=jnp.float32)

    # One-time weight re-layout; hidden layout conversion at sequence
    # boundaries only.  Use matmul_dtype=jnp.bfloat16 at realistic sizes.
    prep = prepare_rsm_params(params, m=M, n=N, matmul_dtype=jnp.float32)
    hidden_cm = (to_cell_major(x_b, m=M, n=N), None,
                 to_cell_major(phi, m=M, n=N), to_cell_major(psi, m=M, n=N))

    out_seq, (xb_f, phi_f, psi_f) = rsm_forward_sequence_pallas(
        x_a_seq, hidden_cm, prep, m=M, n=N, k=K, kwc=KWC, gamma=GAMMA)
    jax.block_until_ready((out_seq, xb_f, phi_f, psi_f))

    # Reference: T sequential applications of the pure-JAX forward replica.
    hid = (x_b, None, phi, psi)
    ref_outs = []
    for t in range(T):
        o, (rxb, rphi, rpsi) = rsm_reference(
            x_a_seq[t], hid, params, m=M, n=N, k=K, kwc=KWC, gamma=GAMMA)
        ref_outs.append(o)
        hid = (rxb, None, rphi, rpsi)
    ref_out_seq = jnp.stack(ref_outs, axis=0)

    np.testing.assert_allclose(np.asarray(out_seq), np.asarray(ref_out_seq),
                               atol=2e-3, rtol=2e-3)
    np.testing.assert_allclose(np.asarray(to_group_major(xb_f, m=M, n=N)),
                               np.asarray(hid[0]), atol=2e-3, rtol=2e-3)
    np.testing.assert_allclose(np.asarray(to_group_major(phi_f, m=M, n=N)),
                               np.asarray(hid[2]), atol=2e-3, rtol=2e-3)
    np.testing.assert_allclose(np.asarray(to_group_major(psi_f, m=M, n=N)),
                               np.asarray(hid[3]), atol=2e-3, rtol=2e-3)

    print("KERNEL_OK")
</pallas_src>

<mosaic_0001>
module attributes {stable_mosaic.version = 11 : i64} {
  func.func @_rsm_seq_kernel(%arg0: i32, %arg1: memref<1x8x128xf32, #tpu.memory_space<vmem>>, %arg2: memref<8x64xf32, #tpu.memory_space<vmem>>, %arg3: memref<8x4x16xf32, #tpu.memory_space<vmem>>, %arg4: memref<192x64xf32, #tpu.memory_space<vmem>>, %arg5: memref<16x128xf32, #tpu.memory_space<vmem>>, %arg6: memref<1x128xf32, #tpu.memory_space<vmem>>, %arg7: memref<1x8x128xf32, #tpu.memory_space<vmem>>, %arg8: memref<8x64xf32, #tpu.memory_space<vmem>>, %arg9: memref<8x4x16xf32, #tpu.memory_space<vmem>>, %arg10: memref<8x64xf32, #tpu.memory_space<vmem>>, %arg11: memref<8x192xf32, #tpu.memory_space<vmem>>, %arg12: memref<8x4x16xf32, #tpu.memory_space<vmem>>) attributes {dimension_semantics = [#tpu.dimension_semantics<arbitrary>], iteration_bounds = array<i64: 8>, scalar_prefetch = 0 : i64, scratch_operands = 2 : i64, tpu.core_type = #tpu.core_type<tc>, window_params = [{transform_indices = @transform_0, window_bounds = array<i64: 1, 8, 128>}, {pipeline_mode = #tpu.pipeline_mode<synchronous>, transform_indices = @transform_1, window_bounds = array<i64: 8, 64>}, {pipeline_mode = #tpu.pipeline_mode<synchronous>, transform_indices = @transform_2, window_bounds = array<i64: 8, 4, 16>}, {pipeline_mode = #tpu.pipeline_mode<synchronous>, transform_indices = @transform_3, window_bounds = array<i64: 192, 64>}, {pipeline_mode = #tpu.pipeline_mode<synchronous>, transform_indices = @transform_4, window_bounds = array<i64: 16, 128>}, {pipeline_mode = #tpu.pipeline_mode<synchronous>, transform_indices = @transform_5, window_bounds = array<i64: 1, 128>}, {transform_indices = @transform_6, window_bounds = array<i64: 1, 8, 128>}, {pipeline_mode = #tpu.pipeline_mode<synchronous>, transform_indices = @transform_7, window_bounds = array<i64: 8, 64>}, {pipeline_mode = #tpu.pipeline_mode<synchronous>, transform_indices = @transform_8, window_bounds = array<i64: 8, 4, 16>}, {pipeline_mode = #tpu.pipeline_mode<synchronous>, transform_indices = @transform_9, window_bounds = array<i64: 8, 64>}]} {
    %c0_i32 = arith.constant 0 : i32
    %0 = arith.cmpi eq, %arg0, %c0_i32 : i32
    %1 = arith.extui %0 : i1 to i32
    %c0_i32_0 = arith.constant 0 : i32
    %2 = arith.cmpi ne, %1, %c0_i32_0 : i32
    scf.if %2 {
      %c0_51 = arith.constant 0 : index
      %c0_52 = arith.constant 0 : index
      %136 = vector.load %arg2[%c0_51, %c0_52] : memref<8x64xf32, #tpu.memory_space<vmem>>, vector<8x64xf32>
      %c0_53 = arith.constant 0 : index
      %c128_54 = arith.constant 128 : index
      %137 = vector.load %arg11[%c0_53, %c128_54] : memref<8x192xf32, #tpu.memory_space<vmem>>, vector<8x64xf32>
      tpu.vector_store %arg11[%c0_53, %c128_54], %136 {strides = array<i32>} : memref<8x192xf32, #tpu.memory_space<vmem>>, vector<8x64xf32>,
      %c0_55 = arith.constant 0 : index
      %c0_56 = arith.constant 0 : index
      %c0_57 = arith.constant 0 : index
      %138 = vector.load %arg3[%c0_55, %c0_56, %c0_57] : memref<8x4x16xf32, #tpu.memory_space<vmem>>, vector<8x4x16xf32>
      %c0_58 = arith.constant 0 : index
      %c0_59 = arith.constant 0 : index
      %c0_60 = arith.constant 0 : index
      %139 = vector.load %arg12[%c0_58, %c0_59, %c0_60] : memref<8x4x16xf32, #tpu.memory_space<vmem>>, vector<8x4x16xf32>
      tpu.vector_store %arg12[%c0_58, %c0_59, %c0_60], %138 {strides = array<i32>} : memref<8x4x16xf32, #tpu.memory_space<vmem>>, vector<8x4x16xf32>,
    } else {
    }
    %c0 = arith.constant 0 : index
    %c0_1 = arith.constant 0 : index
    %c0_2 = arith.constant 0 : index
    %3 = vector.load %arg1[%c0, %c0_1, %c0_2] : memref<1x8x128xf32, #tpu.memory_space<vmem>>, vector<1x8x128xf32>
    %4 = vector.shape_cast %3 : vector<1x8x128xf32> to vector<8x128xf32>
    %c0_3 = arith.constant 0 : index
    %c0_4 = arith.constant 0 : index
    %5 = vector.load %arg11[%c0_3, %c0_4] : memref<8x192xf32, #tpu.memory_space<vmem>>, vector<8x128xf32>
    tpu.vector_store %arg11[%c0_3, %c0_4], %4 {strides = array<i32>} : memref<8x192xf32, #tpu.memory_space<vmem>>, vector<8x128xf32>,
    %c0_5 = arith.constant 0 : index
    %c0_6 = arith.constant 0 : index
    %6 = vector.load %arg11[%c0_5, %c0_6] : memref<8x192xf32, #tpu.memory_space<vmem>>, vector<8x192xf32>
    %c0_7 = arith.constant 0 : index
    %c0_8 = arith.constant 0 : index
    %7 = vector.load %arg4[%c0_7, %c0_8] : memref<192x64xf32, #tpu.memory_space<vmem>>, vector<192x64xf32>
    %cst = arith.constant dense<0.000000e+00> : vector<8x64xf32>
    %8 = tpu.matmul %6, %7, %cst {dimension_numbers = #tpu.dot_dimension_numbers<[1], [0], [0], [1], [0, 0, 1, 1], [], []>, precision = #tpu.contract_precision<fp32>} : vector<8x192xf32>, vector<192x64xf32>, vector<8x64xf32> -> vector<8x64xf32>
    %9 = vector.shape_cast %8 : vector<8x64xf32> to vector<8x4x16xf32>
    %cst_9 = arith.constant dense<0x7F800000> : vector<8xf32>
    %10 = vector.multi_reduction <minimumf>, %8, %cst_9 [1] : vector<8x64xf32> to vector<8xf32>
    %11 = vector.shape_cast %10 : vector<8xf32> to vector<8x1xf32>
    %cst_10 = arith.constant dense<0x7F800000> : vector<1xf32>
    %12 = vector.multi_reduction <minimumf>, %11, %cst_10 [0] : vector<8x1xf32> to vector<1xf32>
    %13 = vector.shape_cast %12 : vector<1xf32> to vector<1x1xf32>
    %14 = vector.shape_cast %13 : vector<1x1xf32> to vector<1x1x1xf32>
    %c0_11 = arith.constant 0 : index
    %c0_12 = arith.constant 0 : index
    %c0_13 = arith.constant 0 : index
    %15 = vector.load %arg12[%c0_11, %c0_12, %c0_13] : memref<8x4x16xf32, #tpu.memory_space<vmem>>, vector<8x4x16xf32>
    %cst_14 = arith.constant 1.000000e+00 : f32
    %16 = vector.broadcast %cst_14 : f32 to vector<8x4x16xf32>
    %17 = arith.subf %16, %15 : vector<8x4x16xf32>
    %18 = vector.broadcast %14 : vector<1x1x1xf32> to vector<8x4x16xf32>
    %19 = arith.subf %9, %18 : vector<8x4x16xf32>
    %cst_15 = arith.constant 1.000000e+00 : f32
    %20 = vector.broadcast %cst_15 : f32 to vector<8x4x16xf32>
    %21 = arith.addf %19, %20 : vector<8x4x16xf32>
    %22 = arith.mulf %17, %21 : vector<8x4x16xf32>
    %cst_16 = arith.constant dense<0xFF800000> : vector<8x16xf32>
    %23 = vector.multi_reduction <maximumf>, %22, %cst_16 [1] : vector<8x4x16xf32> to vector<8x16xf32>
    %24 = tpu.iota {dimensions = array<i32: 0>} : vector<16x16xi32>
    %25 = tpu.iota {dimensions = array<i32: 1>} : vector<16x16xi32>
    %26 = arith.cmpi slt, %25, %24 : vector<16x16xi32>
    %27 = vector.shape_cast %26 : vector<16x16xi1> to vector<1x16x16xi1>
    %28 = vector.shape_cast %23 : vector<8x16xf32> to vector<8x1x16xf32>
    %29 = vector.shape_cast %23 : vector<8x16xf32> to vector<8x16x1xf32>
    %30 = vector.broadcast %28 : vector<8x1x16xf32> to vector<8x16x16xf32>
    %31 = vector.broadcast %29 : vector<8x16x1xf32> to vector<8x16x16xf32>
    %32 = arith.cmpf ogt, %30, %31 : vector<8x16x16xf32>
    %33 = vector.shape_cast %23 : vector<8x16xf32> to vector<8x1x16xf32>
    %34 = vector.shape_cast %23 : vector<8x16xf32> to vector<8x16x1xf32>
    %35 = vector.broadcast %33 : vector<8x1x16xf32> to vector<8x16x16xf32>
    %36 = vector.broadcast %34 : vector<8x16x1xf32> to vector<8x16x16xf32>
    %37 = arith.cmpf oeq, %35, %36 : vector<8x16x16xf32>
    %38 = vector.broadcast %27 : vector<1x16x16xi1> to vector<8x16x16xi1>
    %39 = arith.andi %37, %38 : vector<8x16x16xi1>
    %40 = arith.ori %32, %39 : vector<8x16x16xi1>
    %cst_17 = arith.constant 1.000000e+00 : f32
    %cst_18 = arith.constant 0.000000e+00 : f32
    %41 = vector.broadcast %cst_17 : f32 to vector<8x16x16xf32>
    %42 = vector.broadcast %cst_18 : f32 to vector<8x16x16xf32>
    %43 = arith.select %40, %41, %42 : vector<8x16x16xi1>, vector<8x16x16xf32>
    %cst_19 = arith.constant dense<0.000000e+00> : vector<8x16xf32>
    %44 = vector.multi_reduction <add>, %43, %cst_19 [2] : vector<8x16x16xf32> to vector<8x16xf32>
    %cst_20 = arith.constant 4.000000e+00 : f32
    %45 = vector.broadcast %cst_20 : f32 to vector<8x16xf32>
    %46 = arith.cmpf olt, %44, %45 : vector<8x16xf32>
    %cst_21 = arith.constant 1.000000e+00 : f32
    %cst_22 = arith.constant 0.000000e+00 : f32
    %47 = vector.broadcast %cst_21 : f32 to vector<8x16xf32>
    %48 = vector.broadcast %cst_22 : f32 to vector<8x16xf32>
    %49 = arith.select %46, %47, %48 : vector<8x16xi1>, vector<8x16xf32>
    %50 = tpu.iota {dimensions = array<i32: 1>} : vector<1x4x16xi32>
    %cst_23 = arith.constant 0.000000e+00 : f32
    %51 = vector.broadcast %cst_23 : f32 to vector<8x4x16xf32>
    %52 = vector.extract_strided_slice %22 {offsets = [0, 0, 0], sizes = [8, 1, 16], strides = [1, 1, 1]} : vector<8x4x16xf32> to vector<8x1x16xf32>
    %53 = vector.broadcast %52 : vector<8x1x16xf32> to vector<8x4x16xf32>
    %54 = arith.cmpf ogt, %53, %22 : vector<8x4x16xf32>
    %55 = vector.broadcast %52 : vector<8x1x16xf32> to vector<8x4x16xf32>
    %56 = arith.cmpf oeq, %55, %22 : vector<8x4x16xf32>
    %c0_i32_24 = arith.constant 0 : i32
    %57 = vector.broadcast %c0_i32_24 : i32 to vector<1x4x16xi32>
    %58 = arith.cmpi sgt, %50, %57 : vector<1x4x16xi32>
    %59 = vector.broadcast %58 : vector<1x4x16xi1> to vector<8x4x16xi1>
    %60 = arith.andi %56, %59 : vector<8x4x16xi1>
    %61 = arith.ori %54, %60 : vector<8x4x16xi1>
    %cst_25 = arith.constant 1.000000e+00 : f32
    %cst_26 = arith.constant 0.000000e+00 : f32
    %62 = vector.broadcast %cst_25 : f32 to vector<8x4x16xf32>
    %63 = vector.broadcast %cst_26 : f32 to vector<8x4x16xf32>
    %64 = arith.select %61, %62, %63 : vector<8x4x16xi1>, vector<8x4x16xf32>
    %65 = arith.addf %51, %64 : vector<8x4x16xf32>
    %66 = vector.extract_strided_slice %22 {offsets = [0, 1, 0], sizes = [8, 1, 16], strides = [1, 1, 1]} : vector<8x4x16xf32> to vector<8x1x16xf32>
    %67 = vector.broadcast %66 : vector<8x1x16xf32> to vector<8x4x16xf32>
    %68 = arith.cmpf ogt, %67, %22 : vector<8x4x16xf32>
    %69 = vector.broadcast %66 : vector<8x1x16xf32> to vector<8x4x16xf32>
    %70 = arith.cmpf oeq, %69, %22 : vector<8x4x16xf32>
    %c1_i32 = arith.constant 1 : i32
    %71 = vector.broadcast %c1_i32 : i32 to vector<1x4x16xi32>
    %72 = arith.cmpi sgt, %50, %71 : vector<1x4x16xi32>
    %73 = vector.broadcast %72 : vector<1x4x16xi1> to vector<8x4x16xi1>
    %74 = arith.andi %70, %73 : vector<8x4x16xi1>
    %75 = arith.ori %68, %74 : vector<8x4x16xi1>
    %cst_27 = arith.constant 1.000000e+00 : f32
    %cst_28 = arith.constant 0.000000e+00 : f32
    %76 = vector.broadcast %cst_27 : f32 to vector<8x4x16xf32>
    %77 = vector.broadcast %cst_28 : f32 to vector<8x4x16xf32>
    %78 = arith.select %75, %76, %77 : vector<8x4x16xi1>, vector<8x4x16xf32>
    %79 = arith.addf %65, %78 : vector<8x4x16xf32>
    %80 = vector.extract_strided_slice %22 {offsets = [0, 2, 0], sizes = [8, 1, 16], strides = [1, 1, 1]} : vector<8x4x16xf32> to vector<8x1x16xf32>
    %81 = vector.broadcast %80 : vector<8x1x16xf32> to vector<8x4x16xf32>
    %82 = arith.cmpf ogt, %81, %22 : vector<8x4x16xf32>
    %83 = vector.broadcast %80 : vector<8x1x16xf32> to vector<8x4x16xf32>
    %84 = arith.cmpf oeq, %83, %22 : vector<8x4x16xf32>
    %c2_i32 = arith.constant 2 : i32
    %85 = vector.broadcast %c2_i32 : i32 to vector<1x4x16xi32>
    %86 = arith.cmpi sgt, %50, %85 : vector<1x4x16xi32>
    %87 = vector.broadcast %86 : vector<1x4x16xi1> to vector<8x4x16xi1>
    %88 = arith.andi %84, %87 : vector<8x4x16xi1>
    %89 = arith.ori %82, %88 : vector<8x4x16xi1>
    %cst_29 = arith.constant 1.000000e+00 : f32
    %cst_30 = arith.constant 0.000000e+00 : f32
    %90 = vector.broadcast %cst_29 : f32 to vector<8x4x16xf32>
    %91 = vector.broadcast %cst_30 : f32 to vector<8x4x16xf32>
    %92 = arith.select %89, %90, %91 : vector<8x4x16xi1>, vector<8x4x16xf32>
    %93 = arith.addf %79, %92 : vector<8x4x16xf32>
    %94 = vector.extract_strided_slice %22 {offsets = [0, 3, 0], sizes = [8, 1, 16], strides = [1, 1, 1]} : vector<8x4x16xf32> to vector<8x1x16xf32>
    %95 = vector.broadcast %94 : vector<8x1x16xf32> to vector<8x4x16xf32>
    %96 = arith.cmpf ogt, %95, %22 : vector<8x4x16xf32>
    %97 = vector.broadcast %94 : vector<8x1x16xf32> to vector<8x4x16xf32>
    %98 = arith.cmpf oeq, %97, %22 : vector<8x4x16xf32>
    %c3_i32 = arith.constant 3 : i32
    %99 = vector.broadcast %c3_i32 : i32 to vector<1x4x16xi32>
    %100 = arith.cmpi sgt, %50, %99 : vector<1x4x16xi32>
    %101 = vector.broadcast %100 : vector<1x4x16xi1> to vector<8x4x16xi1>
    %102 = arith.andi %98, %101 : vector<8x4x16xi1>
    %103 = arith.ori %96, %102 : vector<8x4x16xi1>
    %cst_31 = arith.constant 1.000000e+00 : f32
    %cst_32 = arith.constant 0.000000e+00 : f32
    %104 = vector.broadcast %cst_31 : f32 to vector<8x4x16xf32>
    %105 = vector.broadcast %cst_32 : f32 to vector<8x4x16xf32>
    %106 = arith.select %103, %104, %105 : vector<8x4x16xi1>, vector<8x4x16xf32>
    %107 = arith.addf %93, %106 : vector<8x4x16xf32>
    %cst_33 = arith.constant 1.000000e+00 : f32
    %108 = vector.broadcast %cst_33 : f32 to vector<8x4x16xf32>
    %109 = arith.cmpf olt, %107, %108 : vector<8x4x16xf32>
    %cst_34 = arith.constant 1.000000e+00 : f32
    %cst_35 = arith.constant 0.000000e+00 : f32
    %110 = vector.broadcast %cst_34 : f32 to vector<8x4x16xf32>
    %111 = vector.broadcast %cst_35 : f32 to vector<8x4x16xf32>
    %112 = arith.select %109, %110, %111 : vector<8x4x16xi1>, vector<8x4x16xf32>
    %113 = vector.shape_cast %49 : vector<8x16xf32> to vector<8x1x16xf32>
    %114 = vector.broadcast %113 : vector<8x1x16xf32> to vector<8x4x16xf32>
    %115 = arith.mulf %112, %114 : vector<8x4x16xf32>
    %116 = arith.mulf %115, %9 : vector<8x4x16xf32>
    %117 = math.tanh %116 : vector<8x4x16xf32>
    %118 = vector.shape_cast %117 : vector<8x4x16xf32> to vector<8x64xf32>
    %cst_36 = arith.constant 5.000000e-01 : f32
    %119 = vector.broadcast %cst_36 : f32 to vector<8x4x16xf32>
    %120 = arith.mulf %15, %119 : vector<8x4x16xf32>
    %121 = arith.maximumf %120, %117 : vector<8x4x16xf32>
    %cst_37 = arith.constant dense<0xFF800000> : vector<8x16xf32>
    %122 = vector.multi_reduction <maximumf>, %117, %cst_37 [1] : vector<8x4x16xf32> to vector<8x16xf32>
    %c0_38 = arith.constant 0 : index
    %c0_39 = arith.constant 0 : index
    %123 = vector.load %arg5[%c0_38, %c0_39] : memref<16x128xf32, #tpu.memory_space<vmem>>, vector<16x128xf32>
    %cst_40 = arith.constant dense<0.000000e+00> : vector<8x128xf32>
    %124 = tpu.matmul %122, %123, %cst_40 {dimension_numbers = #tpu.dot_dimension_numbers<[1], [0], [0], [1], [0, 0, 1, 1], [], []>, precision = #tpu.contract_precision<fp32>} : vector<8x16xf32>, vector<16x128xf32>, vector<8x128xf32> -> vector<8x128xf32>
    %c0_41 = arith.constant 0 : index
    %c0_42 = arith.constant 0 : index
    %125 = vector.load %arg6[%c0_41, %c0_42] : memref<1x128xf32, #tpu.memory_space<vmem>>, vector<1x128xf32>
    %126 = vector.broadcast %125 : vector<1x128xf32> to vector<8x128xf32>
    %127 = arith.addf %124, %126 : vector<8x128xf32>
    %c0_43 = arith.constant 0 : index
    %c0_44 = arith.constant 0 : index
    %c0_45 = arith.constant 0 : index
    %128 = vector.load %arg7[%c0_43, %c0_44, %c0_45] : memref<1x8x128xf32, #tpu.memory_space<vmem>>, vector<1x8x128xf32>
    %129 = vector.shape_cast %128 : vector<1x8x128xf32> to vector<8x128xf32>
    %130 = vector.shape_cast %127 : vector<8x128xf32> to vector<1x8x128xf32>
    tpu.vector_store %arg7[%c0_43, %c0_44, %c0_45], %130 {strides = array<i32>} : memref<1x8x128xf32, #tpu.memory_space<vmem>>, vector<1x8x128xf32>,
    %c7_i32 = arith.constant 7 : i32
    %131 = arith.cmpi eq, %arg0, %c7_i32 : i32
    %132 = arith.extui %131 : i1 to i32
    %c0_i32_46 = arith.constant 0 : i32
    %133 = arith.cmpi ne, %132, %c0_i32_46 : i32
    scf.if %133 {
      %c0_51 = arith.constant 0 : index
      %c128_52 = arith.constant 128 : index
      %136 = vector.load %arg11[%c0_51, %c128_52] : memref<8x192xf32, #tpu.memory_space<vmem>>, vector<8x64xf32>
      %c0_53 = arith.constant 0 : index
      %c0_54 = arith.constant 0 : index
      %137 = vector.load %arg10[%c0_53, %c0_54] : memref<8x64xf32, #tpu.memory_space<vmem>>, vector<8x64xf32>
      tpu.vector_store %arg10[%c0_53, %c0_54], %136 {strides = array<i32>} : memref<8x64xf32, #tpu.memory_space<vmem>>, vector<8x64xf32>,
      %c0_55 = arith.constant 0 : index
      %c0_56 = arith.constant 0 : index
      %138 = vector.load %arg8[%c0_55, %c0_56] : memref<8x64xf32, #tpu.memory_space<vmem>>, vector<8x64xf32>
      tpu.vector_store %arg8[%c0_55, %c0_56], %118 {strides = array<i32>} : memref<8x64xf32, #tpu.memory_space<vmem>>, vector<8x64xf32>,
      %c0_57 = arith.constant 0 : index
      %c0_58 = arith.constant 0 : index
      %c0_59 = arith.constant 0 : index
      %139 = vector.load %arg9[%c0_57, %c0_58, %c0_59] : memref<8x4x16xf32, #tpu.memory_space<vmem>>, vector<8x4x16xf32>
      tpu.vector_store %arg9[%c0_57, %c0_58, %c0_59], %121 {strides = array<i32>} : memref<8x4x16xf32, #tpu.memory_space<vmem>>, vector<8x4x16xf32>,
    } else {
    }
    %c0_47 = arith.constant 0 : index
    %c0_48 = arith.constant 0 : index
    %c0_49 = arith.constant 0 : index
    %134 = vector.load %arg12[%c0_47, %c0_48, %c0_49] : memref<8x4x16xf32, #tpu.memory_space<vmem>>, vector<8x4x16xf32>
    tpu.vector_store %arg12[%c0_47, %c0_48, %c0_49], %121 {strides = array<i32>} : memref<8x4x16xf32, #tpu.memory_space<vmem>>, vector<8x4x16xf32>,
    %c0_50 = arith.constant 0 : index
    %c128 = arith.constant 128 : index
    %135 = vector.load %arg11[%c0_50, %c128] : memref<8x192xf32, #tpu.memory_space<vmem>>, vector<8x64xf32>
    tpu.vector_store %arg11[%c0_50, %c128], %118 {strides = array<i32>} : memref<8x192xf32, #tpu.memory_space<vmem>>, vector<8x64xf32>,
    return
  }
  func.func @transform_0(%arg0: i32) -> (i32, i32, i32) {
    %c0_i32 = arith.constant 0 : i32
    %c0_i32_0 = arith.constant 0 : i32
    %c0_i32_1 = arith.constant 0 : i32
    return %arg0, %c0_i32, %c0_i32_0 : i32, i32, i32
  }
  func.func @transform_1(%arg0: i32) -> (i32, i32) {
    %c0_i32 = arith.constant 0 : i32
    %c0_i32_0 = arith.constant 0 : i32
    %c0_i32_1 = arith.constant 0 : i32
    return %c0_i32, %c0_i32_0 : i32, i32
  }
  func.func @transform_2(%arg0: i32) -> (i32, i32, i32) {
    %c0_i32 = arith.constant 0 : i32
    %c0_i32_0 = arith.constant 0 : i32
    %c0_i32_1 = arith.constant 0 : i32
    %c0_i32_2 = arith.constant 0 : i32
    return %c0_i32, %c0_i32_0, %c0_i32_1 : i32, i32, i32
  }
  func.func @transform_3(%arg0: i32) -> (i32, i32) {
    %c0_i32 = arith.constant 0 : i32
    %c0_i32_0 = arith.constant 0 : i32
    %c0_i32_1 = arith.constant 0 : i32
    return %c0_i32, %c0_i32_0 : i32, i32
  }
  func.func @transform_4(%arg0: i32) -> (i32, i32) {
    %c0_i32 = arith.constant 0 : i32
    %c0_i32_0 = arith.constant 0 : i32
    %c0_i32_1 = arith.constant 0 : i32
    return %c0_i32, %c0_i32_0 : i32, i32
  }
  func.func @transform_5(%arg0: i32) -> (i32, i32) {
    %c0_i32 = arith.constant 0 : i32
    %c0_i32_0 = arith.constant 0 : i32
    %c0_i32_1 = arith.constant 0 : i32
    return %c0_i32, %c0_i32_0 : i32, i32
  }
  func.func @transform_6(%arg0: i32) -> (i32, i32, i32) {
    %c0_i32 = arith.constant 0 : i32
    %c0_i32_0 = arith.constant 0 : i32
    %c0_i32_1 = arith.constant 0 : i32
    return %arg0, %c0_i32, %c0_i32_0 : i32, i32, i32
  }
  func.func @transform_7(%arg0: i32) -> (i32, i32) {
    %c0_i32 = arith.constant 0 : i32
    %c0_i32_0 = arith.constant 0 : i32
    %c0_i32_1 = arith.constant 0 : i32
    return %c0_i32, %c0_i32_0 : i32, i32
  }
  func.func @transform_8(%arg0: i32) -> (i32, i32, i32) {
    %c0_i32 = arith.constant 0 : i32
    %c0_i32_0 = arith.constant 0 : i32
    %c0_i32_1 = arith.constant 0 : i32
    %c0_i32_2 = arith.constant 0 : i32
    return %c0_i32, %c0_i32_0, %c0_i32_1 : i32, i32, i32
  }
  func.func @transform_9(%arg0: i32) -> (i32, i32) {
    %c0_i32 = arith.constant 0 : i32
    %c0_i32_0 = arith.constant 0 : i32
    %c0_i32_1 = arith.constant 0 : i32
    return %c0_i32, %c0_i32_0 : i32, i32
  }
}

</mosaic_0001>

<llo_original>
// kernel: tpu_custom_call.1
$region0: #{tpu_custom_call.1}
  #allocation0 [shape = 'u32[]', space=smem, size = 0x4, offset = 0x4, fixed_abs, tag = 'smem constant byte address 0x4 - core index']
  #allocation1 [shape = 'u32[144,128]{1,0:T(1,128)}', space=vmem, size = 0x12000, scoped, tag = 'internal scratch']
  #allocation2 [shape = 'f32[8,192]{1,0:T(8,128)}', space=vmem, size = 0x2000, scoped, tag = 'scratch operand']
  #allocation3 [shape = 'f32[8,4,16]{2,1,0:T(4,128)}', space=vmem, size = 0x4000, scoped, tag = 'scratch operand']
  %s0 = inlined_call_operand.vmem [shape: f32[8,8,128], index: 0, kind: input, shape index: {}]
  %s1 = inlined_call_operand.vmem [shape: f32[8,64], index: 1, kind: input, shape index: {}]
  %s2 = inlined_call_operand.vmem [shape: f32[8,4,16], index: 2, kind: input, shape index: {}]
  %s3 = inlined_call_operand.vmem [shape: f32[192,64], index: 3, kind: input, shape index: {}]
  %s4 = inlined_call_operand.vmem [shape: f32[16,128], index: 4, kind: input, shape index: {}]
  %s5 = inlined_call_operand.vmem [shape: f32[1,128], index: 5, kind: input, shape index: {}]
  %s6 = inlined_call_operand.hbm [shape: f32[8,8,128], index: 6, kind: output, shape index: {0}]
  %s7 = inlined_call_operand.hbm [shape: f32[8,64], index: 7, kind: output, shape index: {1}]
  %s8 = inlined_call_operand.hbm [shape: f32[8,4,16], index: 8, kind: output, shape index: {2}]
  %s9 = inlined_call_operand.hbm [shape: f32[8,64], index: 9, kind: output, shape index: {3}]
  %10 = xla_tuple %s6, %s7, %s8, %s9
  %s11 = sld [smem:[#allocation0]]
  $region89: #{tpu_custom_call.1} parent=0
    _
  %s13 = ssub.s32 1, %s11
  %s14 = scalar_select 0, %s13, %s11
  $region1: #{tpu_custom_call.1} parent=0
    #allocation4 [shape = 'u8[8192]{0}', space=vmem, size = 0x2000, scoped, tag = 'output window, operand 0']
    #allocation5 [shape = 's32[2]{0}', space=sflag, size = 0x8, scoped, tag = 'scoped memory for tpu_custom_call.1']
    #allocation6 [shape = 'u8[4096]{0}', space=vmem, size = 0x1000, scoped, tag = 'output window, operand 1, single buffered']
    #allocation7 [shape = 's32[1]{0}', space=sflag, size = 0x4, scoped, tag = 'scoped memory for tpu_custom_call.1']
    #allocation8 [shape = 'u8[16384]{0}', space=vmem, size = 0x4000, scoped, tag = 'output window, operand 2, single buffered']
    #allocation9 [shape = 'u8[4096]{0}', space=vmem, size = 0x1000, scoped, tag = 'output window, operand 3, single buffered']
    #allocation10 [shape = 's32[1]{0}', space=sflag, size = 0x4, scoped, tag = 'scoped memory for tpu_custom_call.1']
    %15 = vsyncpa [#allocation5], 0
    %s16 = scalar_lea.sflag [#allocation5], 1
    %17 = vsyncpa %s16, 0
    %18 = vsyncpa [#allocation7], 0
    %19 = vsyncpa [#allocation10], 0
    loop: start=0, step=1, limit=10
    $region2: #{tpu_custom_call.1} parent=1 // loop_pre_header
      _
    $region3: #{tpu_custom_call.1} parent=1 // loop_header
      %s21 = sphi 0, %s25
      %p22 = scmp.ge.s32.totalorder %s21, 10
      %s31 = sphi 0, %s33
      %s34 = sphi 0, %s31
      %s35 = sphi 0, %s34
      %s51 = sphi 0, %s35
      %s55 = sphi 0, %s55
      %s57 = sphi 0, %s55
      %s58 = sphi 0, %s57
      %s72 = sphi 0, %s58
      %s76 = sphi 0, %s76
      %s78 = sphi 0, %s76
      %s79 = sphi 0, %s78
      %s93 = sphi 0, %s79
      %s97 = sphi 0, %s97
      %s99 = sphi 0, %s97
      %s100 = sphi 0, %s99
      %s114 = sphi 0, %s100
      %s118 = sphi 0, %s118
      %s120 = sphi 0, %s118
      %s121 = sphi 0, %s120
      %s135 = sphi 0, %s121
      %s139 = sphi 0, %s139
      %s141 = sphi 0, %s139
      %s142 = sphi 0, %s141
      %s156 = sphi 0, %s142
      %s162 = sphi 0, %s164
      %s165 = sphi 0, %s162
      %s166 = sphi 0, %s165
      %s182 = sphi 0, %s166
      %s186 = sphi 0, %s186
      %s188 = sphi 0, %s186
      %s189 = sphi 0, %s188
      %s203 = sphi 0, %s189
      %s207 = sphi 0, %s207
      %s209 = sphi 0, %s207
      %s210 = sphi 0, %s209
      %s224 = sphi 0, %s210
      %s228 = sphi 0, %s228
      %s230 = sphi 0, %s228
      %s231 = sphi 0, %s230
      %s245 = sphi 0, %s231
    $region4: #{tpu_custom_call.1} parent=1 // loop_header_branch
      %24 = sbr.rel (%p22) target = $region8
    $region5: #{tpu_custom_call.1} parent=1 // loop_body
      %s26 = ssub.s32 %s21, 1
      %s27 = ssub.s32 %s21, 2
      %s28 = sadd.s32 %s21, 1
      %s29 = ssub.s32 %s21, %s28
      %p30 = scmp.eq.s32.totalorder %s29, 0
      %s32 = sadd.s32 %s31, 1
      %s33 = scalar_select %p30, %s31, %s32
      %p36 = pneg %p30
      %p37 = scmp.eq.s32.totalorder %s21, 7
      %p38 = por %p36, %p37
      %p39 = scmp.ne.s32.totalorder %s31, %s34
      %p40 = scmp.eq.s32.totalorder %s21, 0
      %p41 = por %p39, %p40
      %p42 = scmp.ne.s32.totalorder %s31, %s34
      %p43 = scmp.eq.s32.totalorder %s26, 7
      %p44 = por %p42, %p43
      %p45 = scmp.ne.s32.totalorder %s34, %s35
      %p46 = scmp.eq.s32.totalorder %s26, 0
      %p47 = por %p45, %p46
      %p48 = scmp.ne.s32.totalorder %s34, %s35
      %p49 = scmp.eq.s32.totalorder %s27, 7
      %p50 = por %p48, %p49
      %p52 = scmp.ne.s32.totalorder %s35, %s51
      %p53 = scmp.eq.s32.totalorder %s27, 0
      %p54 = por %p52, %p53
      %s56 = sadd.s32 %s55, 1
      %p59 = scmp.eq.s32.totalorder %s21, 7
      %p60 = scmp.ne.s32.totalorder %s55, %s57
      %p61 = scmp.eq.s32.totalorder %s21, 0
      %p62 = por %p60, %p61
      %p63 = scmp.ne.s32.totalorder %s55, %s57
      %p64 = scmp.eq.s32.totalorder %s26, 7
      %p65 = por %p63, %p64
      %p66 = scmp.ne.s32.totalorder %s57, %s58
      %p67 = scmp.eq.s32.totalorder %s26, 0
      %p68 = por %p66, %p67
      %p69 = scmp.ne.s32.totalorder %s57, %s58
      %p70 = scmp.eq.s32.totalorder %s27, 7
      %p71 = por %p69, %p70
      %p73 = scmp.ne.s32.totalorder %s58, %s72
      %p74 = scmp.eq.s32.totalorder %s27, 0
      %p75 = por %p73, %p74
      %s77 = sadd.s32 %s76, 1
      %p80 = scmp.eq.s32.totalorder %s21, 7
      %p81 = scmp.ne.s32.totalorder %s76, %s78
      %p82 = scmp.eq.s32.totalorder %s21, 0
      %p83 = por %p81, %p82
      %p84 = scmp.ne.s32.totalorder %s76, %s78
      %p85 = scmp.eq.s32.totalorder %s26, 7
      %p86 = por %p84, %p85
      %p87 = scmp.ne.s32.totalorder %s78, %s79
      %p88 = scmp.eq.s32.totalorder %s26, 0
      %p89 = por %p87, %p88
      %p90 = scmp.ne.s32.totalorder %s78, %s79
      %p91 = scmp.eq.s32.totalorder %s27, 7
      %p92 = por %p90, %p91
      %p94 = scmp.ne.s32.totalorder %s79, %s93
      %p95 = scmp.eq.s32.totalorder %s27, 0
      %p96 = por %p94, %p95
      %s98 = sadd.s32 %s97, 1
      %p101 = scmp.eq.s32.totalorder %s21, 7
      %p102 = scmp.ne.s32.totalorder %s97, %s99
      %p103 = scmp.eq.s32.totalorder %s21, 0
      %p104 = por %p102, %p103
      %p105 = scmp.ne.s32.totalorder %s97, %s99
      %p106 = scmp.eq.s32.totalorder %s26, 7
      %p107 = por %p105, %p106
      %p108 = scmp.ne.s32.totalorder %s99, %s100
      %p109 = scmp.eq.s32.totalorder %s26, 0
      %p110 = por %p108, %p109
      %p111 = scmp.ne.s32.totalorder %s99, %s100
      %p112 = scmp.eq.s32.totalorder %s27, 7
      %p113 = por %p111, %p112
      %p115 = scmp.ne.s32.totalorder %s100, %s114
      %p116 = scmp.eq.s32.totalorder %s27, 0
      %p117 = por %p115, %p116
      %s119 = sadd.s32 %s118, 1
      %p122 = scmp.eq.s32.totalorder %s21, 7
      %p123 = scmp.ne.s32.totalorder %s118, %s120
      %p124 = scmp.eq.s32.totalorder %s21, 0
      %p125 = por %p123, %p124
      %p126 = scmp.ne.s32.totalorder %s118, %s120
      %p127 = scmp.eq.s32.totalorder %s26, 7
      %p128 = por %p126, %p127
      %p129 = scmp.ne.s32.totalorder %s120, %s121
      %p130 = scmp.eq.s32.totalorder %s26, 0
      %p131 = por %p129, %p130
      %p132 = scmp.ne.s32.totalorder %s120, %s121
      %p133 = scmp.eq.s32.totalorder %s27, 7
      %p134 = por %p132, %p133
      %p136 = scmp.ne.s32.totalorder %s121, %s135
      %p137 = scmp.eq.s32.totalorder %s27, 0
      %p138 = por %p136, %p137
      %s140 = sadd.s32 %s139, 1
      %p143 = scmp.eq.s32.totalorder %s21, 7
      %p144 = scmp.ne.s32.totalorder %s139, %s141
      %p145 = scmp.eq.s32.totalorder %s21, 0
      %p146 = por %p144, %p145
      %p147 = scmp.ne.s32.totalorder %s139, %s141
      %p148 = scmp.eq.s32.totalorder %s26, 7
      %p149 = por %p147, %p148
      %p150 = scmp.ne.s32.totalorder %s141, %s142
      %p151 = scmp.eq.s32.totalorder %s26, 0
      %p152 = por %p150, %p151
      %p153 = scmp.ne.s32.totalorder %s141, %s142
      %p154 = scmp.eq.s32.totalorder %s27, 7
      %p155 = por %p153, %p154
      %p157 = scmp.ne.s32.totalorder %s142, %s156
      %p158 = scmp.eq.s32.totalorder %s27, 0
      %p159 = por %p157, %p158
      %s160 = ssub.s32 %s21, %s28
      %p161 = scmp.eq.s32.totalorder %s160, 0
      %s163 = sadd.s32 %s162, 1
      %s164 = scalar_select %p161, %s162, %s163
      %p167 = pneg %p161
      %p168 = scmp.eq.s32.totalorder %s21, 7
      %p169 = por %p167, %p168
      %p170 = scmp.ne.s32.totalorder %s162, %s165
      %p171 = scmp.eq.s32.totalorder %s21, 0
      %p172 = por %p170, %p171
      %p173 = scmp.ne.s32.totalorder %s162, %s165
      %p174 = scmp.eq.s32.totalorder %s26, 7
      %p175 = por %p173, %p174
      %p176 = scmp.ne.s32.totalorder %s165, %s166
      %p177 = scmp.eq.s32.totalorder %s26, 0
      %p178 = por %p176, %p177
      %p179 = scmp.ne.s32.totalorder %s165, %s166
      %p180 = scmp.eq.s32.totalorder %s27, 7
      %p181 = por %p179, %p180
      %p183 = scmp.ne.s32.totalorder %s166, %s182
      %p184 = scmp.eq.s32.totalorder %s27, 0
      %p185 = por %p183, %p184
      %s187 = sadd.s32 %s186, 1
      %p190 = scmp.eq.s32.totalorder %s21, 7
      %p191 = scmp.ne.s32.totalorder %s186, %s188
      %p192 = scmp.eq.s32.totalorder %s21, 0
      %p193 = por %p191, %p192
      %p194 = scmp.ne.s32.totalorder %s186, %s188
      %p195 = scmp.eq.s32.totalorder %s26, 7
      %p196 = por %p194, %p195
      %p197 = scmp.ne.s32.totalorder %s188, %s189
      %p198 = scmp.eq.s32.totalorder %s26, 0
      %p199 = por %p197, %p198
      %p200 = scmp.ne.s32.totalorder %s188, %s189
      %p201 = scmp.eq.s32.totalorder %s27, 7
      %p202 = por %p200, %p201
      %p204 = scmp.ne.s32.totalorder %s189, %s203
      %p205 = scmp.eq.s32.totalorder %s27, 0
      %p206 = por %p204, %p205
      %s208 = sadd.s32 %s207, 1
      %p211 = scmp.eq.s32.totalorder %s21, 7
      %p212 = scmp.ne.s32.totalorder %s207, %s209
      %p213 = scmp.eq.s32.totalorder %s21, 0
      %p214 = por %p212, %p213
      %p215 = scmp.ne.s32.totalorder %s207, %s209
      %p216 = scmp.eq.s32.totalorder %s26, 7
      %p217 = por %p215, %p216
      %p218 = scmp.ne.s32.totalorder %s209, %s210
      %p219 = scmp.eq.s32.totalorder %s26, 0
      %p220 = por %p218, %p219
      %p221 = scmp.ne.s32.totalorder %s209, %s210
      %p222 = scmp.eq.s32.totalorder %s27, 7
      %p223 = por %p221, %p222
      %p225 = scmp.ne.s32.totalorder %s210, %s224
      %p226 = scmp.eq.s32.totalorder %s27, 0
      %p227 = por %p225, %p226
      %s229 = sadd.s32 %s228, 1
      %p232 = scmp.eq.s32.totalorder %s21, 7
      %p233 = scmp.ne.s32.totalorder %s228, %s230
      %p234 = scmp.eq.s32.totalorder %s21, 0
      %p235 = por %p233, %p234
      %p236 = scmp.ne.s32.totalorder %s228, %s230
      %p237 = scmp.eq.s32.totalorder %s26, 7
      %p238 = por %p236, %p237
      %p239 = scmp.ne.s32.totalorder %s230, %s231
      %p240 = scmp.eq.s32.totalorder %s26, 0
      %p241 = por %p239, %p240
      %p242 = scmp.ne.s32.totalorder %s230, %s231
      %p243 = scmp.eq.s32.totalorder %s27, 7
      %p244 = por %p242, %p243
      %p246 = scmp.ne.s32.totalorder %s231, %s245
      %p247 = scmp.eq.s32.totalorder %s27, 0
      %p248 = por %p246, %p247
      %p249 = scmp.le.s32.totalorder 1, %s21
      %p250 = scmp.lt.s32.totalorder %s21, 9
      %p251 = pnand %p249, %p250
      %p252 = pneg %p251
      // Predicated region
      $region9: #{tpu_custom_call.1} parent=5 // pred_check
        _
      $region10: #{tpu_custom_call.1} parent=5 // pred_check_branch
        %254 = sbr.rel (%p251) target = $region12
      $region11: #{tpu_custom_call.1} parent=5 // pred_region
        %s255 = ssub.s32 %s21, 1
        // Predicated region
        $region13: #{tpu_custom_call.1} parent=11 // pred_check
          %p256 = pneg %p68
        $region14: #{tpu_custom_call.1} parent=11 // pred_check_branch
          %258 = sbr.rel (%p256) target = $region16
        $region15: #{tpu_custom_call.1} parent=11 // pred_region
          _
        $region16: #{tpu_custom_call.1} parent=11 // pred_fallthru
          _
        // Predicated region
        $region17: #{tpu_custom_call.1} parent=11 // pred_check
          %p259 = pneg %p89
        $region18: #{tpu_custom_call.1} parent=11 // pred_check_branch
          %261 = sbr.rel (%p259) target = $region20
        $region19: #{tpu_custom_call.1} parent=11 // pred_region
          _
        $region20: #{tpu_custom_call.1} parent=11 // pred_fallthru
          _
        // Predicated region
        $region21: #{tpu_custom_call.1} parent=11 // pred_check
          %p262 = pneg %p110
        $region22: #{tpu_custom_call.1} parent=11 // pred_check_branch
          %264 = sbr.rel (%p262) target = $region24
        $region23: #{tpu_custom_call.1} parent=11 // pred_region
          _
        $region24: #{tpu_custom_call.1} parent=11 // pred_fallthru
          _
        // Predicated region
        $region25: #{tpu_custom_call.1} parent=11 // pred_check
          %p265 = pneg %p131
        $region26: #{tpu_custom_call.1} parent=11 // pred_check_branch
          %267 = sbr.rel (%p265) target = $region28
        $region27: #{tpu_custom_call.1} parent=11 // pred_region
          _
        $region28: #{tpu_custom_call.1} parent=11 // pred_fallthru
          _
        // Predicated region
        $region29: #{tpu_custom_call.1} parent=11 // pred_check
          %p268 = pneg %p152
        $region30: #{tpu_custom_call.1} parent=11 // pred_check_branch
          %270 = sbr.rel (%p268) target = $region32
        $region31: #{tpu_custom_call.1} parent=11 // pred_region
          _
        $region32: #{tpu_custom_call.1} parent=11 // pred_fallthru
          _
      $region12: #{tpu_custom_call.1} parent=5 // pred_fallthru
        _
      %p271 = scmp.lt.s32.totalorder %s21, 8
      // Predicated region
      $region33: #{tpu_custom_call.1} parent=5 // pred_check
        %p272 = pneg %p271
      $region34: #{tpu_custom_call.1} parent=5 // pred_check_branch
        %274 = sbr.rel (%p272) target = $region36
      $region35: #{tpu_custom_call.1} parent=5 // pred_region
        // Predicated region
        $region37: #{tpu_custom_call.1} parent=35 // pred_check
          %p275 = pneg %p41
        $region38: #{tpu_custom_call.1} parent=35 // pred_check_branch
          %277 = sbr.rel (%p275) target = $region40
        $region39: #{tpu_custom_call.1} parent=35 // pred_region
          %p278 = scmp.lt.s32.totalorder %s21, 7
          %s279 = scalar_select %p278, %s21, 7
          %s280 = smul.addr %s279, 8
          %s281 = scalar_lea.vmem %s0, %s280
        $region40: #{tpu_custom_call.1} parent=35 // pred_fallthru
          _
      $region36: #{tpu_custom_call.1} parent=5 // pred_fallthru
        _
      %p282 = scmp.le.s32.totalorder 1, %s21
      %p283 = scmp.lt.s32.totalorder %s21, 9
      %p284 = pnand %p282, %p283
      %p285 = pneg %p284
      // Predicated region
      $region41: #{tpu_custom_call.1} parent=5 // pred_check
        _
      $region42: #{tpu_custom_call.1} parent=5 // pred_check_branch
        %287 = sbr.rel (%p284) target = $region44
      $region43: #{tpu_custom_call.1} parent=5 // pred_region
        %s288 = ssub.s32 %s21, 1
        %p289 = scmp.lt.s32.totalorder %s26, 7
        %s290 = scalar_select %p289, %s26, 7
        %s291 = smul.addr %s290, 8
        %s292 = scalar_lea.vmem %s0, %s291
        %p293 = pneg %p47
        %p294 = pneg %p44
        %p295 = pneg %p68
        %p296 = pneg %p65
        %p297 = pneg %p89
        %p298 = pneg %p86
        %p299 = pneg %p110
        %p300 = pneg %p107
        %p301 = pneg %p131
        %p302 = pneg %p128
        %p303 = pneg %p152
        %p304 = pneg %p149
        %p305 = pneg %p178
        %p306 = pneg %p175
        %s307 = sand.u32 %s165, 1
        %s308 = scalar_lea.sflag [#allocation5], %s307
        %s309 = sand.u32 %s165, 1
        %s310 = smul.addr %s309, 8
        %s311 = scalar_lea.vmem [#allocation4], %s310
        %p312 = pneg %p199
        %p313 = pneg %p196
        %p314 = pneg %p220
        %p315 = pneg %p217
        %p316 = pneg %p241
        %p317 = pneg %p238
        %p318 = scmp.lt.s32.totalorder %s26, 7
        %s319 = scalar_select %p318, %s26, 7
        %s320 = smul.addr %s319, 8
        %s321 = scalar_lea.vmem %s0, %s320
        %p322 = scmp.eq.s32.totalorder %s26, 0
        // Predicated region
        $region45: #{tpu_custom_call.1} parent=43 // pred_check
          %p323 = pneg %p322
        $region46: #{tpu_custom_call.1} parent=43 // pred_check_branch
          %325 = sbr.rel (%p323) target = $region48
        $region47: #{tpu_custom_call.1} parent=43 // pred_region
          %v326 = vld [vmem:[%s1] sm:$0xff]
          %vm327 = vcmask 523264
          %328 = vst.msk [vmem:[#allocation2 + $0x8] sm:$0xff] %vm327, %v326
          %v329 = vld [vmem:[%s2] sm:$0xf]
          %v330 = vld [vmem:[%s2 + $0x4] sm:$0xf]
          %v331 = vld [vmem:[%s2 + $0x8] sm:$0xf]
          %v332 = vld [vmem:[%s2 + $0xc] sm:$0xf]
          %v333 = vld [vmem:[%s2 + $0x10] sm:$0xf]
          %v334 = vld [vmem:[%s2 + $0x14] sm:$0xf]
          %v335 = vld [vmem:[%s2 + $0x18] sm:$0xf]
          %v336 = vld [vmem:[%s2 + $0x1c] sm:$0xf]
          %vm337 = vcmask 125952
          %338 = vst.msk [vmem:[#allocation3] sm:$0xf] %vm337, %v329
          %339 = vst.msk [vmem:[#allocation3 + $0x4] sm:$0xf] %vm337, %v330
          %340 = vst.msk [vmem:[#allocation3 + $0x8] sm:$0xf] %vm337, %v331
          %341 = vst.msk [vmem:[#allocation3 + $0xc] sm:$0xf] %vm337, %v332
          %342 = vst.msk [vmem:[#allocation3 + $0x10] sm:$0xf] %vm337, %v333
          %343 = vst.msk [vmem:[#allocation3 + $0x14] sm:$0xf] %vm337, %v334
          %344 = vst.msk [vmem:[#allocation3 + $0x18] sm:$0xf] %vm337, %v335
          %345 = vst.msk [vmem:[#allocation3 + $0x1c] sm:$0xf] %vm337, %v336
        $region48: #{tpu_custom_call.1} parent=43 // pred_fallthru
          _
        %v346 = vld [vmem:[%s321] sm:$0xff]
        %347 = vst [vmem:[#allocation2] sm:$0xff] %v346
        %v348 = vld [vmem:[#allocation2] sm:$0xff]
        %v349 = vld [vmem:[#allocation2 + $0x8] sm:$0xff]
        %v350 = vld [vmem:[%s3] sm:$0xff]
        %v351 = vld [vmem:[%s3 + $0x8] sm:$0xff]
        %v352 = vld [vmem:[%s3 + $0x10] sm:$0xff]
        %v353 = vld [vmem:[%s3 + $0x18] sm:$0xff]
        %v354 = vld [vmem:[%s3 + $0x20] sm:$0xff]
        %v355 = vld [vmem:[%s3 + $0x28] sm:$0xff]
        %v356 = vld [vmem:[%s3 + $0x30] sm:$0xff]
        %v357 = vld [vmem:[%s3 + $0x38] sm:$0xff]
        %v358 = vld [vmem:[%s3 + $0x40] sm:$0xff]
        %v359 = vld [vmem:[%s3 + $0x48] sm:$0xff]
        %v360 = vld [vmem:[%s3 + $0x50] sm:$0xff]
        %v361 = vld [vmem:[%s3 + $0x58] sm:$0xff]
        %v362 = vld [vmem:[%s3 + $0x60] sm:$0xff]
        %v363 = vld [vmem:[%s3 + $0x68] sm:$0xff]
        %v364 = vld [vmem:[%s3 + $0x70] sm:$0xff]
        %v365 = vld [vmem:[%s3 + $0x78] sm:$0xff]
        %v366 = vld [vmem:[%s3 + $0x80] sm:$0xff]
        %v367 = vld [vmem:[%s3 + $0x88] sm:$0xff]
        %v368 = vld [vmem:[%s3 + $0x90] sm:$0xff]
        %v369 = vld [vmem:[%s3 + $0x98] sm:$0xff]
        %v370 = vld [vmem:[%s3 + $0xa0] sm:$0xff]
        %v371 = vld [vmem:[%s3 + $0xa8] sm:$0xff]
        %v372 = vld [vmem:[%s3 + $0xb0] sm:$0xff]
        %v373 = vld [vmem:[%s3 + $0xb8] sm:$0xff]
        %vm374 = vcmask 523264
        %v376 = vsel %vm374, %v349, 0
        %378 = vmatprep.subr.mxu0 0.0
        %v379 = vand.u32 %v350, 4294901760
        %380 = vmatpush1.msra.mxu0 %v379
        %381 = vmatprep.subr.mxu0 0.0
        %v382 = vand.u32 %v351, 4294901760
        %383 = vmatpush1.msra.mxu0 %v382
        %384 = vmatprep.subr.mxu0 0.0
        %v385 = vand.u32 %v352, 4294901760
        %386 = vmatpush1.msra.mxu0 %v385
        %387 = vmatprep.subr.mxu0 0.0
        %v388 = vand.u32 %v353, 4294901760
        %389 = vmatpush1.msra.mxu0 %v388
        %390 = vmatprep.subr.mxu0 0.0
        %v391 = vand.u32 %v354, 4294901760
        %392 = vmatpush1.msra.mxu0 %v391
        %393 = vmatprep.subr.mxu0 0.0
        %v394 = vand.u32 %v355, 4294901760
        %395 = vmatpush1.msra.mxu0 %v394
        %396 = vmatprep.subr.mxu0 0.0
        %v397 = vand.u32 %v356, 4294901760
        %398 = vmatpush1.msra.mxu0 %v397
        %399 = vmatprep.subr.mxu0 0.0
        %v400 = vand.u32 %v357, 4294901760
        %401 = vmatpush1.msra.mxu0 %v400
        %402 = vmatprep.subr.mxu0 0.0
        %v403 = vand.u32 %v358, 4294901760
        %404 = vmatpush1.msra.mxu0 %v403
        %405 = vmatprep.subr.mxu0 0.0
        %v406 = vand.u32 %v359, 4294901760
        %407 = vmatpush1.msra.mxu0 %v406
        %408 = vmatprep.subr.mxu0 0.0
        %v409 = vand.u32 %v360, 4294901760
        %410 = vmatpush1.msra.mxu0 %v409
        %411 = vmatprep.subr.mxu0 0.0
        %v412 = vand.u32 %v361, 4294901760
        %413 = vmatpush1.msra.mxu0 %v412
        %414 = vmatprep.subr.mxu0 0.0
        %v415 = vand.u32 %v362, 4294901760
        %416 = vmatpush1.msra.mxu0 %v415
        %417 = vmatprep.subr.mxu0 0.0
        %v418 = vand.u32 %v363, 4294901760
        %419 = vmatpush1.msra.mxu0 %v418
        %420 = vmatprep.subr.mxu0 0.0
        %v421 = vand.u32 %v364, 4294901760
        %422 = vmatpush1.msra.mxu0 %v421
        %423 = vmatprep.subr.mxu0 0.0
        %v424 = vand.u32 %v365, 4294901760
        %425 = vmatpush1.msra.mxu0 %v424
        %426 = vmatprep.subr.mxu0 0.0
        %v427 = vand.u32 %v366, 4294901760
        %428 = vmatpush1.msra.mxu0 %v427
        %429 = vmatprep.subr.mxu0 0.0
        %v430 = vand.u32 %v367, 4294901760
        %431 = vmatpush1.msra.mxu0 %v430
        %432 = vmatprep.subr.mxu0 0.0
        %v433 = vand.u32 %v368, 4294901760
        %434 = vmatpush1.msra.mxu0 %v433
        %435 = vmatprep.subr.mxu0 0.0
        %v436 = vand.u32 %v369, 4294901760
        %437 = vmatpush1.msra.mxu0 %v436
        %438 = vmatprep.subr.mxu0 0.0
        %v439 = vand.u32 %v370, 4294901760
        %440 = vmatpush1.msra.mxu0 %v439
        %441 = vmatprep.subr.mxu0 0.0
        %v442 = vand.u32 %v371, 4294901760
        %443 = vmatpush1.msra.mxu0 %v442
        %444 = vmatprep.subr.mxu0 0.0
        %v445 = vand.u32 %v372, 4294901760
        %446 = vmatpush1.msra.mxu0 %v445
        %447 = vmatprep.subr.mxu0 0.0
        %v448 = vand.u32 %v373, 4294901760
        %449 = vmatpush1.msra.mxu0 %v448
        %450 = vmatprep.subr.mxu0 0.0
        %451 = vmatpush1.msra.mxu0 0.0
        %452 = vmatprep.subr.mxu0 0.0
        %453 = vmatpush1.msra.mxu0 0.0
        %454 = vmatprep.subr.mxu0 0.0
        %455 = vmatpush1.msra.mxu0 0.0
        %456 = vmatprep.subr.mxu0 0.0
        %457 = vmatpush1.msra.mxu0 0.0
        %458 = vmatprep.subr.mxu0 0.0
        %459 = vmatpush1.msra.mxu0 0.0
        %460 = vmatprep.subr.mxu0 0.0
        %461 = vmatpush1.msra.mxu0 0.0
        %462 = vmatprep.subr.mxu0 0.0
        %463 = vmatpush1.msra.mxu0 0.0
        %464 = vmatprep.subr.mxu0 0.0
        %465 = vmatpush1.msra.mxu0 0.0
        %v466 = vand.u32 %v376, 4294901760
        %v467 = vsub.f32 %v376, %v466
        %v468 = vand.u32 %v467, 4294901760
        %v469 = vsub.f32 %v467, %v468
        %v470 = vand.u32 %v469, 4294901760
        %471 = vmatprep.mubr.f32.mxu0 %v470
        %v472 = vand.u32 %v348, 4294901760
        %v473 = vsub.f32 %v348, %v472
        %v474 = vand.u32 %v473, 4294901760
        %v475 = vsub.f32 %v473, %v474
        %v476 = vand.u32 %v475, 4294901760
        %477 = vmatmul.mubr.f32.gmra.mrb[0].mxu0 %v476
        %v478 = vpop.f32.mrb[0].mxu0
        %v479 = vadd.f32 0.0, %v478
        %v480 = vpop.f32.mrb[0].mxu0
        %481 = vdwg.mxu0
        %482 = vmatprep.subr.mxu0 0.0
        %v483 = vand.u32 %v350, 4294901760
        %v484 = vsub.f32 %v350, %v483
        %v485 = vand.u32 %v484, 4294901760
        %v486 = vsub.f32 %v484, %v485
        %v487 = vand.u32 %v486, 4294901760
        %488 = vmatpush1.msra.mxu0 %v487
        %489 = vmatprep.subr.mxu0 0.0
        %v490 = vand.u32 %v351, 4294901760
        %v491 = vsub.f32 %v351, %v490
        %v492 = vand.u32 %v491, 4294901760
        %v493 = vsub.f32 %v491, %v492
        %v494 = vand.u32 %v493, 4294901760
        %495 = vmatpush1.msra.mxu0 %v494
        %496 = vmatprep.subr.mxu0 0.0
        %v497 = vand.u32 %v352, 4294901760
        %v498 = vsub.f32 %v352, %v497
        %v499 = vand.u32 %v498, 4294901760
        %v500 = vsub.f32 %v498, %v499
        %v501 = vand.u32 %v500, 4294901760
        %502 = vmatpush1.msra.mxu0 %v501
        %503 = vmatprep.subr.mxu0 0.0
        %v504 = vand.u32 %v353, 4294901760
        %v505 = vsub.f32 %v353, %v504
        %v506 = vand.u32 %v505, 4294901760
        %v507 = vsub.f32 %v505, %v506
        %v508 = vand.u32 %v507, 4294901760
        %509 = vmatpush1.msra.mxu0 %v508
        %510 = vmatprep.subr.mxu0 0.0
        %v511 = vand.u32 %v354, 4294901760
        %v512 = vsub.f32 %v354, %v511
        %v513 = vand.u32 %v512, 4294901760
        %v514 = vsub.f32 %v512, %v513
        %v515 = vand.u32 %v514, 4294901760
        %516 = vmatpush1.msra.mxu0 %v515
        %517 = vmatprep.subr.mxu0 0.0
        %v518 = vand.u32 %v355, 4294901760
        %v519 = vsub.f32 %v355, %v518
        %v520 = vand.u32 %v519, 4294901760
        %v521 = vsub.f32 %v519, %v520
        %v522 = vand.u32 %v521, 4294901760
        %523 = vmatpush1.msra.mxu0 %v522
        %524 = vmatprep.subr.mxu0 0.0
        %v525 = vand.u32 %v356, 4294901760
        %v526 = vsub.f32 %v356, %v525
        %v527 = vand.u32 %v526, 4294901760
        %v528 = vsub.f32 %v526, %v527
        %v529 = vand.u32 %v528, 4294901760
        %530 = vmatpush1.msra.mxu0 %v529
        %531 = vmatprep.subr.mxu0 0.0
        %v532 = vand.u32 %v357, 4294901760
        %v533 = vsub.f32 %v357, %v532
        %v534 = vand.u32 %v533, 4294901760
        %v535 = vsub.f32 %v533, %v534
        %v536 = vand.u32 %v535, 4294901760
        %537 = vmatpush1.msra.mxu0 %v536
        %538 = vmatprep.subr.mxu0 0.0
        %v539 = vand.u32 %v358, 4294901760
        %v540 = vsub.f32 %v358, %v539
        %v541 = vand.u32 %v540, 4294901760
        %v542 = vsub.f32 %v540, %v541
        %v543 = vand.u32 %v542, 4294901760
        %544 = vmatpush1.msra.mxu0 %v543
        %545 = vmatprep.subr.mxu0 0.0
        %v546 = vand.u32 %v359, 4294901760
        %v547 = vsub.f32 %v359, %v546
        %v548 = vand.u32 %v547, 4294901760
        %v549 = vsub.f32 %v547, %v548
        %v550 = vand.u32 %v549, 4294901760
        %551 = vmatpush1.msra.mxu0 %v550
        %552 = vmatprep.subr.mxu0 0.0
        %v553 = vand.u32 %v360, 4294901760
        %v554 = vsub.f32 %v360, %v553
        %v555 = vand.u32 %v554, 4294901760
        %v556 = vsub.f32 %v554, %v555
        %v557 = vand.u32 %v556, 4294901760
        %558 = vmatpush1.msra.mxu0 %v557
        %559 = vmatprep.subr.mxu0 0.0
        %v560 = vand.u32 %v361, 4294901760
        %v561 = vsub.f32 %v361, %v560
        %v562 = vand.u32 %v561, 4294901760
        %v563 = vsub.f32 %v561, %v562
        %v564 = vand.u32 %v563, 4294901760
        %565 = vmatpush1.msra.mxu0 %v564
        %566 = vmatprep.subr.mxu0 0.0
        %v567 = vand.u32 %v362, 4294901760
        %v568 = vsub.f32 %v362, %v567
        %v569 = vand.u32 %v568, 4294901760
        %v570 = vsub.f32 %v568, %v569
        %v571 = vand.u32 %v570, 4294901760
        %572 = vmatpush1.msra.mxu0 %v571
        %573 = vmatprep.subr.mxu0 0.0
        %v574 = vand.u32 %v363, 4294901760
        %v575 = vsub.f32 %v363, %v574
        %v576 = vand.u32 %v575, 4294901760
        %v577 = vsub.f32 %v575, %v576
        %v578 = vand.u32 %v577, 4294901760
        %579 = vmatpush1.msra.mxu0 %v578
        %580 = vmatprep.subr.mxu0 0.0
        %v581 = vand.u32 %v364, 4294901760
        %v582 = vsub.f32 %v364, %v581
        %v583 = vand.u32 %v582, 4294901760
        %v584 = vsub.f32 %v582, %v583
        %v585 = vand.u32 %v584, 4294901760
        %586 = vmatpush1.msra.mxu0 %v585
        %587 = vmatprep.subr.mxu0 0.0
        %v588 = vand.u32 %v365, 4294901760
        %v589 = vsub.f32 %v365, %v588
        %v590 = vand.u32 %v589, 4294901760
        %v591 = vsub.f32 %v589, %v590
        %v592 = vand.u32 %v591, 4294901760
        %593 = vmatpush1.msra.mxu0 %v592
        %594 = vmatprep.subr.mxu0 0.0
        %v595 = vand.u32 %v366, 4294901760
        %v596 = vsub.f32 %v366, %v595
        %v597 = vand.u32 %v596, 4294901760
        %v598 = vsub.f32 %v596, %v597
        %v599 = vand.u32 %v598, 4294901760
        %600 = vmatpush1.msra.mxu0 %v599
        %601 = vmatprep.subr.mxu0 0.0
        %v602 = vand.u32 %v367, 4294901760
        %v603 = vsub.f32 %v367, %v602
        %v604 = vand.u32 %v603, 4294901760
        %v605 = vsub.f32 %v603, %v604
        %v606 = vand.u32 %v605, 4294901760
        %607 = vmatpush1.msra.mxu0 %v606
        %608 = vmatprep.subr.mxu0 0.0
        %v609 = vand.u32 %v368, 4294901760
        %v610 = vsub.f32 %v368, %v609
        %v611 = vand.u32 %v610, 4294901760
        %v612 = vsub.f32 %v610, %v611
        %v613 = vand.u32 %v612, 4294901760
        %614 = vmatpush1.msra.mxu0 %v613
        %615 = vmatprep.subr.mxu0 0.0
        %v616 = vand.u32 %v369, 4294901760
        %v617 = vsub.f32 %v369, %v616
        %v618 = vand.u32 %v617, 4294901760
        %v619 = vsub.f32 %v617, %v618
        %v620 = vand.u32 %v619, 4294901760
        %621 = vmatpush1.msra.mxu0 %v620
        %622 = vmatprep.subr.mxu0 0.0
        %v623 = vand.u32 %v370, 4294901760
        %v624 = vsub.f32 %v370, %v623
        %v625 = vand.u32 %v624, 4294901760
        %v626 = vsub.f32 %v624, %v625
        %v627 = vand.u32 %v626, 4294901760
        %628 = vmatpush1.msra.mxu0 %v627
        %629 = vmatprep.subr.mxu0 0.0
        %v630 = vand.u32 %v371, 4294901760
        %v631 = vsub.f32 %v371, %v630
        %v632 = vand.u32 %v631, 4294901760
        %v633 = vsub.f32 %v631, %v632
        %v634 = vand.u32 %v633, 4294901760
        %635 = vmatpush1.msra.mxu0 %v634
        %636 = vmatprep.subr.mxu0 0.0
        %v637 = vand.u32 %v372, 4294901760
        %v638 = vsub.f32 %v372, %v637
        %v639 = vand.u32 %v638, 4294901760
        %v640 = vsub.f32 %v638, %v639
        %v641 = vand.u32 %v640, 4294901760
        %642 = vmatpush1.msra.mxu0 %v641
        %643 = vmatprep.subr.mxu0 0.0
        %v644 = vand.u32 %v373, 4294901760
        %v645 = vsub.f32 %v373, %v644
        %v646 = vand.u32 %v645, 4294901760
        %v647 = vsub.f32 %v645, %v646
        %v648 = vand.u32 %v647, 4294901760
        %649 = vmatpush1.msra.mxu0 %v648
        %650 = vmatprep.subr.mxu0 0.0
        %651 = vmatpush1.msra.mxu0 0.0
        %652 = vmatprep.subr.mxu0 0.0
        %653 = vmatpush1.msra.mxu0 0.0
        %654 = vmatprep.subr.mxu0 0.0
        %655 = vmatpush1.msra.mxu0 0.0
        %656 = vmatprep.subr.mxu0 0.0
        %657 = vmatpush1.msra.mxu0 0.0
        %658 = vmatprep.subr.mxu0 0.0
        %659 = vmatpush1.msra.mxu0 0.0
        %660 = vmatprep.subr.mxu0 0.0
        %661 = vmatpush1.msra.mxu0 0.0
        %662 = vmatprep.subr.mxu0 0.0
        %663 = vmatpush1.msra.mxu0 0.0
        %664 = vmatprep.subr.mxu0 0.0
        %665 = vmatpush1.msra.mxu0 0.0
        %v666 = vand.u32 %v376, 4294901760
        %667 = vmatprep.mubr.f32.mxu0 %v666
        %v668 = vand.u32 %v348, 4294901760
        %669 = vmatmul.mubr.f32.gmra.mrb[0].mxu0 %v668
        %v670 = vpop.f32.mrb[0].mxu0
        %v671 = vadd.f32 %v479, %v670
        %v672 = vpop.f32.mrb[0].mxu0
        %673 = vdwg.mxu0
        %674 = vmatprep.subr.mxu0 0.0
        %v675 = vand.u32 %v350, 4294901760
        %v676 = vsub.f32 %v350, %v675
        %677 = vmatpush1.msra.mxu0 %v676
        %678 = vmatprep.subr.mxu0 0.0
        %v679 = vand.u32 %v351, 4294901760
        %v680 = vsub.f32 %v351, %v679
        %681 = vmatpush1.msra.mxu0 %v680
        %682 = vmatprep.subr.mxu0 0.0
        %v683 = vand.u32 %v352, 4294901760
        %v684 = vsub.f32 %v352, %v683
        %685 = vmatpush1.msra.mxu0 %v684
        %686 = vmatprep.subr.mxu0 0.0
        %v687 = vand.u32 %v353, 4294901760
        %v688 = vsub.f32 %v353, %v687
        %689 = vmatpush1.msra.mxu0 %v688
        %690 = vmatprep.subr.mxu0 0.0
        %v691 = vand.u32 %v354, 4294901760
        %v692 = vsub.f32 %v354, %v691
        %693 = vmatpush1.msra.mxu0 %v692
        %694 = vmatprep.subr.mxu0 0.0
        %v695 = vand.u32 %v355, 4294901760
        %v696 = vsub.f32 %v355, %v695
        %697 = vmatpush1.msra.mxu0 %v696
        %698 = vmatprep.subr.mxu0 0.0
        %v699 = vand.u32 %v356, 4294901760
        %v700 = vsub.f32 %v356, %v699
        %701 = vmatpush1.msra.mxu0 %v700
        %702 = vmatprep.subr.mxu0 0.0
        %v703 = vand.u32 %v357, 4294901760
        %v704 = vsub.f32 %v357, %v703
        %705 = vmatpush1.msra.mxu0 %v704
        %706 = vmatprep.subr.mxu0 0.0
        %v707 = vand.u32 %v358, 4294901760
        %v708 = vsub.f32 %v358, %v707
        %709 = vmatpush1.msra.mxu0 %v708
        %710 = vmatprep.subr.mxu0 0.0
        %v711 = vand.u32 %v359, 4294901760
        %v712 = vsub.f32 %v359, %v711
        %713 = vmatpush1.msra.mxu0 %v712
        %714 = vmatprep.subr.mxu0 0.0
        %v715 = vand.u32 %v360, 4294901760
        %v716 = vsub.f32 %v360, %v715
        %717 = vmatpush1.msra.mxu0 %v716
        %718 = vmatprep.subr.mxu0 0.0
        %v719 = vand.u32 %v361, 4294901760
        %v720 = vsub.f32 %v361, %v719
        %721 = vmatpush1.msra.mxu0 %v720
        %722 = vmatprep.subr.mxu0 0.0
        %v723 = vand.u32 %v362, 4294901760
        %v724 = vsub.f32 %v362, %v723
        %725 = vmatpush1.msra.mxu0 %v724
        %726 = vmatprep.subr.mxu0 0.0
        %v727 = vand.u32 %v363, 4294901760
        %v728 = vsub.f32 %v363, %v727
        %729 = vmatpush1.msra.mxu0 %v728
        %730 = vmatprep.subr.mxu0 0.0
        %v731 = vand.u32 %v364, 4294901760
        %v732 = vsub.f32 %v364, %v731
        %733 = vmatpush1.msra.mxu0 %v732
        %734 = vmatprep.subr.mxu0 0.0
        %v735 = vand.u32 %v365, 4294901760
        %v736 = vsub.f32 %v365, %v735
        %737 = vmatpush1.msra.mxu0 %v736
        %738 = vmatprep.subr.mxu0 0.0
        %v739 = vand.u32 %v366, 4294901760
        %v740 = vsub.f32 %v366, %v739
        %741 = vmatpush1.msra.mxu0 %v740
        %742 = vmatprep.subr.mxu0 0.0
        %v743 = vand.u32 %v367, 4294901760
        %v744 = vsub.f32 %v367, %v743
        %745 = vmatpush1.msra.mxu0 %v744
        %746 = vmatprep.subr.mxu0 0.0
        %v747 = vand.u32 %v368, 4294901760
        %v748 = vsub.f32 %v368, %v747
        %749 = vmatpush1.msra.mxu0 %v748
        %750 = vmatprep.subr.mxu0 0.0
        %v751 = vand.u32 %v369, 4294901760
        %v752 = vsub.f32 %v369, %v751
        %753 = vmatpush1.msra.mxu0 %v752
        %754 = vmatprep.subr.mxu0 0.0
        %v755 = vand.u32 %v370, 4294901760
        %v756 = vsub.f32 %v370, %v755
        %757 = vmatpush1.msra.mxu0 %v756
        %758 = vmatprep.subr.mxu0 0.0
        %v759 = vand.u32 %v371, 4294901760
        %v760 = vsub.f32 %v371, %v759
        %761 = vmatpush1.msra.mxu0 %v760
        %762 = vmatprep.subr.mxu0 0.0
        %v763 = vand.u32 %v372, 4294901760
        %v764 = vsub.f32 %v372, %v763
        %765 = vmatpush1.msra.mxu0 %v764
        %766 = vmatprep.subr.mxu0 0.0
        %v767 = vand.u32 %v373, 4294901760
        %v768 = vsub.f32 %v373, %v767
        %769 = vmatpush1.msra.mxu0 %v768
        %770 = vmatprep.subr.mxu0 0.0
        %771 = vmatpush1.msra.mxu0 0.0
        %772 = vmatprep.subr.mxu0 0.0
        %773 = vmatpush1.msra.mxu0 0.0
        %774 = vmatprep.subr.mxu0 0.0
        %775 = vmatpush1.msra.mxu0 0.0
        %776 = vmatprep.subr.mxu0 0.0
        %777 = vmatpush1.msra.mxu0 0.0
        %778 = vmatprep.subr.mxu0 0.0
        %779 = vmatpush1.msra.mxu0 0.0
        %780 = vmatprep.subr.mxu0 0.0
        %781 = vmatpush1.msra.mxu0 0.0
        %782 = vmatprep.subr.mxu0 0.0
        %783 = vmatpush1.msra.mxu0 0.0
        %784 = vmatprep.subr.mxu0 0.0
        %785 = vmatpush1.msra.mxu0 0.0
        %v786 = vand.u32 %v376, 4294901760
        %v787 = vsub.f32 %v376, %v786
        %788 = vmatprep.mubr.f32.mxu0 %v787
        %v789 = vand.u32 %v348, 4294901760
        %v790 = vsub.f32 %v348, %v789
        %791 = vmatmul.mubr.f32.gmra.mrb[0].mxu0 %v790
        %v792 = vpop.f32.mrb[0].mxu0
        %v793 = vadd.f32 %v671, %v792
        %v794 = vpop.f32.mrb[0].mxu0
        %795 = vdwg.mxu0
        %796 = vmatprep.subr.mxu0 0.0
        %v797 = vand.u32 %v350, 4294901760
        %798 = vmatpush1.msra.mxu0 %v797
        %799 = vmatprep.subr.mxu0 0.0
        %v800 = vand.u32 %v351, 4294901760
        %801 = vmatpush1.msra.mxu0 %v800
        %802 = vmatprep.subr.mxu0 0.0
        %v803 = vand.u32 %v352, 4294901760
        %804 = vmatpush1.msra.mxu0 %v803
        %805 = vmatprep.subr.mxu0 0.0
        %v806 = vand.u32 %v353, 4294901760
        %807 = vmatpush1.msra.mxu0 %v806
        %808 = vmatprep.subr.mxu0 0.0
        %v809 = vand.u32 %v354, 4294901760
        %810 = vmatpush1.msra.mxu0 %v809
        %811 = vmatprep.subr.mxu0 0.0
        %v812 = vand.u32 %v355, 4294901760
        %813 = vmatpush1.msra.mxu0 %v812
        %814 = vmatprep.subr.mxu0 0.0
        %v815 = vand.u32 %v356, 4294901760
        %816 = vmatpush1.msra.mxu0 %v815
        %817 = vmatprep.subr.mxu0 0.0
        %v818 = vand.u32 %v357, 4294901760
        %819 = vmatpush1.msra.mxu0 %v818
        %820 = vmatprep.subr.mxu0 0.0
        %v821 = vand.u32 %v358, 4294901760
        %822 = vmatpush1.msra.mxu0 %v821
        %823 = vmatprep.subr.mxu0 0.0
        %v824 = vand.u32 %v359, 4294901760
        %825 = vmatpush1.msra.mxu0 %v824
        %826 = vmatprep.subr.mxu0 0.0
        %v827 = vand.u32 %v360, 4294901760
        %828 = vmatpush1.msra.mxu0 %v827
        %829 = vmatprep.subr.mxu0 0.0
        %v830 = vand.u32 %v361, 4294901760
        %831 = vmatpush1.msra.mxu0 %v830
        %832 = vmatprep.subr.mxu0 0.0
        %v833 = vand.u32 %v362, 4294901760
        %834 = vmatpush1.msra.mxu0 %v833
        %835 = vmatprep.subr.mxu0 0.0
        %v836 = vand.u32 %v363, 4294901760
        %837 = vmatpush1.msra.mxu0 %v836
        %838 = vmatprep.subr.mxu0 0.0
        %v839 = vand.u32 %v364, 4294901760
        %840 = vmatpush1.msra.mxu0 %v839
        %841 = vmatprep.subr.mxu0 0.0
        %v842 = vand.u32 %v365, 4294901760
        %843 = vmatpush1.msra.mxu0 %v842
        %844 = vmatprep.subr.mxu0 0.0
        %v845 = vand.u32 %v366, 4294901760
        %846 = vmatpush1.msra.mxu0 %v845
        %847 = vmatprep.subr.mxu0 0.0
        %v848 = vand.u32 %v367, 4294901760
        %849 = vmatpush1.msra.mxu0 %v848
        %850 = vmatprep.subr.mxu0 0.0
        %v851 = vand.u32 %v368, 4294901760
        %852 = vmatpush1.msra.mxu0 %v851
        %853 = vmatprep.subr.mxu0 0.0
        %v854 = vand.u32 %v369, 4294901760
        %855 = vmatpush1.msra.mxu0 %v854
        %856 = vmatprep.subr.mxu0 0.0
        %v857 = vand.u32 %v370, 4294901760
        %858 = vmatpush1.msra.mxu0 %v857
        %859 = vmatprep.subr.mxu0 0.0
        %v860 = vand.u32 %v371, 4294901760
        %861 = vmatpush1.msra.mxu0 %v860
        %862 = vmatprep.subr.mxu0 0.0
        %v863 = vand.u32 %v372, 4294901760
        %864 = vmatpush1.msra.mxu0 %v863
        %865 = vmatprep.subr.mxu0 0.0
        %v866 = vand.u32 %v373, 4294901760
        %867 = vmatpush1.msra.mxu0 %v866
        %868 = vmatprep.subr.mxu0 0.0
        %869 = vmatpush1.msra.mxu0 0.0
        %870 = vmatprep.subr.mxu0 0.0
        %871 = vmatpush1.msra.mxu0 0.0
        %872 = vmatprep.subr.mxu0 0.0
        %873 = vmatpush1.msra.mxu0 0.0
        %874 = vmatprep.subr.mxu0 0.0
        %875 = vmatpush1.msra.mxu0 0.0
        %876 = vmatprep.subr.mxu0 0.0
        %877 = vmatpush1.msra.mxu0 0.0
        %878 = vmatprep.subr.mxu0 0.0
        %879 = vmatpush1.msra.mxu0 0.0
        %880 = vmatprep.subr.mxu0 0.0
        %881 = vmatpush1.msra.mxu0 0.0
        %882 = vmatprep.subr.mxu0 0.0
        %883 = vmatpush1.msra.mxu0 0.0
        %v884 = vand.u32 %v376, 4294901760
        %v885 = vsub.f32 %v376, %v884
        %v886 = vand.u32 %v885, 4294901760
        %887 = vmatprep.mubr.f32.mxu0 %v886
        %v888 = vand.u32 %v348, 4294901760
        %v889 = vsub.f32 %v348, %v888
        %v890 = vand.u32 %v889, 4294901760
        %891 = vmatmul.mubr.f32.gmra.mrb[0].mxu0 %v890
        %v892 = vpop.f32.mrb[0].mxu0
        %v893 = vadd.f32 %v793, %v892
        %v894 = vpop.f32.mrb[0].mxu0
        %895 = vdwg.mxu0
        %896 = vmatprep.subr.mxu0 0.0
        %v897 = vand.u32 %v350, 4294901760
        %v898 = vsub.f32 %v350, %v897
        %v899 = vand.u32 %v898, 4294901760
        %900 = vmatpush1.msra.mxu0 %v899
        %901 = vmatprep.subr.mxu0 0.0
        %v902 = vand.u32 %v351, 4294901760
        %v903 = vsub.f32 %v351, %v902
        %v904 = vand.u32 %v903, 4294901760
        %905 = vmatpush1.msra.mxu0 %v904
        %906 = vmatprep.subr.mxu0 0.0
        %v907 = vand.u32 %v352, 4294901760
        %v908 = vsub.f32 %v352, %v907
        %v909 = vand.u32 %v908, 4294901760
        %910 = vmatpush1.msra.mxu0 %v909
        %911 = vmatprep.subr.mxu0 0.0
        %v912 = vand.u32 %v353, 4294901760
        %v913 = vsub.f32 %v353, %v912
        %v914 = vand.u32 %v913, 4294901760
        %915 = vmatpush1.msra.mxu0 %v914
        %916 = vmatprep.subr.mxu0 0.0
        %v917 = vand.u32 %v354, 4294901760
        %v918 = vsub.f32 %v354, %v917
        %v919 = vand.u32 %v918, 4294901760
        %920 = vmatpush1.msra.mxu0 %v919
        %921 = vmatprep.subr.mxu0 0.0
        %v922 = vand.u32 %v355, 4294901760
        %v923 = vsub.f32 %v355, %v922
        %v924 = vand.u32 %v923, 4294901760
        %925 = vmatpush1.msra.mxu0 %v924
        %926 = vmatprep.subr.mxu0 0.0
        %v927 = vand.u32 %v356, 4294901760
        %v928 = vsub.f32 %v356, %v927
        %v929 = vand.u32 %v928, 4294901760
        %930 = vmatpush1.msra.mxu0 %v929
        %931 = vmatprep.subr.mxu0 0.0
        %v932 = vand.u32 %v357, 4294901760
        %v933 = vsub.f32 %v357, %v932
        %v934 = vand.u32 %v933, 4294901760
        %935 = vmatpush1.msra.mxu0 %v934
        %936 = vmatprep.subr.mxu0 0.0
        %v937 = vand.u32 %v358, 4294901760
        %v938 = vsub.f32 %v358, %v937
        %v939 = vand.u32 %v938, 4294901760
        %940 = vmatpush1.msra.mxu0 %v939
        %941 = vmatprep.subr.mxu0 0.0
        %v942 = vand.u32 %v359, 4294901760
        %v943 = vsub.f32 %v359, %v942
        %v944 = vand.u32 %v943, 4294901760
        %945 = vmatpush1.msra.mxu0 %v944
        %946 = vmatprep.subr.mxu0 0.0
        %v947 = vand.u32 %v360, 4294901760
        %v948 = vsub.f32 %v360, %v947
        %v949 = vand.u32 %v948, 4294901760
        %950 = vmatpush1.msra.mxu0 %v949
        %951 = vmatprep.subr.mxu0 0.0
        %v952 = vand.u32 %v361, 4294901760
        %v953 = vsub.f32 %v361, %v952
        %v954 = vand.u32 %v953, 4294901760
        %955 = vmatpush1.msra.mxu0 %v954
        %956 = vmatprep.subr.mxu0 0.0
        %v957 = vand.u32 %v362, 4294901760
        %v958 = vsub.f32 %v362, %v957
        %v959 = vand.u32 %v958, 4294901760
        %960 = vmatpush1.msra.mxu0 %v959
        %961 = vmatprep.subr.mxu0 0.0
        %v962 = vand.u32 %v363, 4294901760
        %v963 = vsub.f32 %v363, %v962
        %v964 = vand.u32 %v963, 4294901760
        %965 = vmatpush1.msra.mxu0 %v964
        %966 = vmatprep.subr.mxu0 0.0
        %v967 = vand.u32 %v364, 4294901760
        %v968 = vsub.f32 %v364, %v967
        %v969 = vand.u32 %v968, 4294901760
        %970 = vmatpush1.msra.mxu0 %v969
        %971 = vmatprep.subr.mxu0 0.0
        %v972 = vand.u32 %v365, 4294901760
        %v973 = vsub.f32 %v365, %v972
        %v974 = vand.u32 %v973, 4294901760
        %975 = vmatpush1.msra.mxu0 %v974
        %976 = vmatprep.subr.mxu0 0.0
        %v977 = vand.u32 %v366, 4294901760
        %v978 = vsub.f32 %v366, %v977
        %v979 = vand.u32 %v978, 4294901760
        %980 = vmatpush1.msra.mxu0 %v979
        %981 = vmatprep.subr.mxu0 0.0
        %v982 = vand.u32 %v367, 4294901760
        %v983 = vsub.f32 %v367, %v982
        %v984 = vand.u32 %v983, 4294901760
        %985 = vmatpush1.msra.mxu0 %v984
        %986 = vmatprep.subr.mxu0 0.0
        %v987 = vand.u32 %v368, 4294901760
        %v988 = vsub.f32 %v368, %v987
        %v989 = vand.u32 %v988, 4294901760
        %990 = vmatpush1.msra.mxu0 %v989
        %991 = vmatprep.subr.mxu0 0.0
        %v992 = vand.u32 %v369, 4294901760
        %v993 = vsub.f32 %v369, %v992
        %v994 = vand.u32 %v993, 4294901760
        %995 = vmatpush1.msra.mxu0 %v994
        %996 = vmatprep.subr.mxu0 0.0
        %v997 = vand.u32 %v370, 4294901760
        %v998 = vsub.f32 %v370, %v997
        %v999 = vand.u32 %v998, 4294901760
        %1000 = vmatpush1.msra.mxu0 %v999
        %1001 = vmatprep.subr.mxu0 0.0
        %v1002 = vand.u32 %v371, 4294901760
        %v1003 = vsub.f32 %v371, %v1002
        %v1004 = vand.u32 %v1003, 4294901760
        %1005 = vmatpush1.msra.mxu0 %v1004
        %1006 = vmatprep.subr.mxu0 0.0
        %v1007 = vand.u32 %v372, 4294901760
        %v1008 = vsub.f32 %v372, %v1007
        %v1009 = vand.u32 %v1008, 4294901760
        %1010 = vmatpush1.msra.mxu0 %v1009
        %1011 = vmatprep.subr.mxu0 0.0
        %v1012 = vand.u32 %v373, 4294901760
        %v1013 = vsub.f32 %v373, %v1012
        %v1014 = vand.u32 %v1013, 4294901760
        %1015 = vmatpush1.msra.mxu0 %v1014
        %1016 = vmatprep.subr.mxu0 0.0
        %1017 = vmatpush1.msra.mxu0 0.0
        %1018 = vmatprep.subr.mxu0 0.0
        %1019 = vmatpush1.msra.mxu0 0.0
        %1020 = vmatprep.subr.mxu0 0.0
        %1021 = vmatpush1.msra.mxu0 0.0
        %1022 = vmatprep.subr.mxu0 0.0
        %1023 = vmatpush1.msra.mxu0 0.0
        %1024 = vmatprep.subr.mxu0 0.0
        %1025 = vmatpush1.msra.mxu0 0.0
        %1026 = vmatprep.subr.mxu0 0.0
        %1027 = vmatpush1.msra.mxu0 0.0
        %1028 = vmatprep.subr.mxu0 0.0
        %1029 = vmatpush1.msra.mxu0 0.0
        %1030 = vmatprep.subr.mxu0 0.0
        %1031 = vmatpush1.msra.mxu0 0.0
        %v1032 = vand.u32 %v376, 4294901760
        %1033 = vmatprep.mubr.f32.mxu0 %v1032
        %v1034 = vand.u32 %v348, 4294901760
        %1035 = vmatmul.mubr.f32.gmra.mrb[0].mxu0 %v1034
        %v1036 = vpop.f32.mrb[0].mxu0
        %v1037 = vadd.f32 %v893, %v1036
        %v1038 = vpop.f32.mrb[0].mxu0
        %1039 = vdwg.mxu0
        %1040 = vmatprep.subr.mxu0 0.0
        %v1041 = vand.u32 %v350, 4294901760
        %1042 = vmatpush1.msra.mxu0 %v1041
        %1043 = vmatprep.subr.mxu0 0.0
        %v1044 = vand.u32 %v351, 4294901760
        %1045 = vmatpush1.msra.mxu0 %v1044
        %1046 = vmatprep.subr.mxu0 0.0
        %v1047 = vand.u32 %v352, 4294901760
        %1048 = vmatpush1.msra.mxu0 %v1047
        %1049 = vmatprep.subr.mxu0 0.0
        %v1050 = vand.u32 %v353, 4294901760
        %1051 = vmatpush1.msra.mxu0 %v1050
        %1052 = vmatprep.subr.mxu0 0.0
        %v1053 = vand.u32 %v354, 4294901760
        %1054 = vmatpush1.msra.mxu0 %v1053
        %1055 = vmatprep.subr.mxu0 0.0
        %v1056 = vand.u32 %v355, 4294901760
        %1057 = vmatpush1.msra.mxu0 %v1056
        %1058 = vmatprep.subr.mxu0 0.0
        %v1059 = vand.u32 %v356, 4294901760
        %1060 = vmatpush1.msra.mxu0 %v1059
        %1061 = vmatprep.subr.mxu0 0.0
        %v1062 = vand.u32 %v357, 4294901760
        %1063 = vmatpush1.msra.mxu0 %v1062
        %1064 = vmatprep.subr.mxu0 0.0
        %v1065 = vand.u32 %v358, 4294901760
        %1066 = vmatpush1.msra.mxu0 %v1065
        %1067 = vmatprep.subr.mxu0 0.0
        %v1068 = vand.u32 %v359, 4294901760
        %1069 = vmatpush1.msra.mxu0 %v1068
        %1070 = vmatprep.subr.mxu0 0.0
        %v1071 = vand.u32 %v360, 4294901760
        %1072 = vmatpush1.msra.mxu0 %v1071
        %1073 = vmatprep.subr.mxu0 0.0
        %v1074 = vand.u32 %v361, 4294901760
        %1075 = vmatpush1.msra.mxu0 %v1074
        %1076 = vmatprep.subr.mxu0 0.0
        %v1077 = vand.u32 %v362, 4294901760
        %1078 = vmatpush1.msra.mxu0 %v1077
        %1079 = vmatprep.subr.mxu0 0.0
        %v1080 = vand.u32 %v363, 4294901760
        %1081 = vmatpush1.msra.mxu0 %v1080
        %1082 = vmatprep.subr.mxu0 0.0
        %v1083 = vand.u32 %v364, 4294901760
        %1084 = vmatpush1.msra.mxu0 %v1083
        %1085 = vmatprep.subr.mxu0 0.0
        %v1086 = vand.u32 %v365, 4294901760
        %1087 = vmatpush1.msra.mxu0 %v1086
        %1088 = vmatprep.subr.mxu0 0.0
        %v1089 = vand.u32 %v366, 4294901760
        %1090 = vmatpush1.msra.mxu0 %v1089
        %1091 = vmatprep.subr.mxu0 0.0
        %v1092 = vand.u32 %v367, 4294901760
        %1093 = vmatpush1.msra.mxu0 %v1092
        %1094 = vmatprep.subr.mxu0 0.0
        %v1095 = vand.u32 %v368, 4294901760
        %1096 = vmatpush1.msra.mxu0 %v1095
        %1097 = vmatprep.subr.mxu0 0.0
        %v1098 = vand.u32 %v369, 4294901760
        %1099 = vmatpush1.msra.mxu0 %v1098
        %1100 = vmatprep.subr.mxu0 0.0
        %v1101 = vand.u32 %v370, 4294901760
        %1102 = vmatpush1.msra.mxu0 %v1101
        %1103 = vmatprep.subr.mxu0 0.0
        %v1104 = vand.u32 %v371, 4294901760
        %1105 = vmatpush1.msra.mxu0 %v1104
        %1106 = vmatprep.subr.mxu0 0.0
        %v1107 = vand.u32 %v372, 4294901760
        %1108 = vmatpush1.msra.mxu0 %v1107
        %1109 = vmatprep.subr.mxu0 0.0
        %v1110 = vand.u32 %v373, 4294901760
        %1111 = vmatpush1.msra.mxu0 %v1110
        %1112 = vmatprep.subr.mxu0 0.0
        %1113 = vmatpush1.msra.mxu0 0.0
        %1114 = vmatprep.subr.mxu0 0.0
        %1115 = vmatpush1.msra.mxu0 0.0
        %1116 = vmatprep.subr.mxu0 0.0
        %1117 = vmatpush1.msra.mxu0 0.0
        %1118 = vmatprep.subr.mxu0 0.0
        %1119 = vmatpush1.msra.mxu0 0.0
        %1120 = vmatprep.subr.mxu0 0.0
        %1121 = vmatpush1.msra.mxu0 0.0
        %1122 = vmatprep.subr.mxu0 0.0
        %1123 = vmatpush1.msra.mxu0 0.0
        %1124 = vmatprep.subr.mxu0 0.0
        %1125 = vmatpush1.msra.mxu0 0.0
        %1126 = vmatprep.subr.mxu0 0.0
        %1127 = vmatpush1.msra.mxu0 0.0
        %v1128 = vand.u32 %v376, 4294901760
        %1129 = vmatprep.mubr.f32.mxu0 %v1128
        %v1130 = vand.u32 %v348, 4294901760
        %1131 = vmatmul.mubr.f32.gmra.mrb[0].mxu0 %v1130
        %v1132 = vpop.f32.mrb[0].mxu0
        %v1133 = vadd.f32 %v1037, %v1132
        %v1134 = vpop.f32.mrb[0].mxu0
        %1135 = vdwg.mxu0
        %1137 = vrot.lane.b32.xlu0 %v1133, 112
        %v1138 = vpop.permute.xlu0 %1137
        %1140 = vrot.lane.b32.xlu0 %v1133, 96
        %v1141 = vpop.permute.xlu0 %1140
        %1143 = vrot.lane.b32.xlu0 %v1133, 80
        %v1144 = vpop.permute.xlu0 %1143
        %v1146 = vcombine.low %v1133, %v1141
        %v1147 = vcombine.high %v1133, %v1141
        %v1149 = vunpack.c.l.s4 1983009808
        %v1150 = vunpack.c.0.s8 %v1149
        %v1151 = vlaneseq
        %v1152 = vshrl.u32 %v1151, 7
        %v1153 = vsub.s32 %v1150, %v1152
        %v1154 = vrot.slane %v1146, %v1153
        %v1156 = vunpack.c.l.s4 1983009808
        %v1157 = vunpack.c.0.s8 %v1156
        %v1158 = vlaneseq
        %v1159 = vshrl.u32 %v1158, 7
        %v1160 = vsub.s32 %v1157, %v1159
        %v1161 = vrot.slane %v1147, %v1160
        %v1162 = vcombine.low %v1138, %v1144
        %v1163 = vcombine.high %v1138, %v1144
        %v1165 = vunpack.c.l.s4 1983009808
        %v1166 = vunpack.c.0.s8 %v1165
        %v1167 = vlaneseq
        %v1168 = vshrl.u32 %v1167, 7
        %v1169 = vsub.s32 %v1166, %v1168
        %v1170 = vrot.slane %v1162, %v1169
        %v1172 = vunpack.c.l.s4 1983009808
        %v1173 = vunpack.c.0.s8 %v1172
        %v1174 = vlaneseq
        %v1175 = vshrl.u32 %v1174, 7
        %v1176 = vsub.s32 %v1173, %v1175
        %v1177 = vrot.slane %v1163, %v1176
        %v1178 = vcombine.low %v1154, %v1170
        %v1179 = vcombine.high %v1154, %v1170
        %v1181 = vunpack.c.l.s4 1934713408
        %v1182 = vunpack.c.0.s8 %v1181
        %v1183 = vlaneseq
        %v1184 = vshrl.u32 %v1183, 7
        %v1185 = vsub.s32 %v1182, %v1184
        %v1186 = vrot.slane %v1178, %v1185
        %v1188 = vunpack.c.l.s4 1934713408
        %v1189 = vunpack.c.0.s8 %v1188
        %v1190 = vlaneseq
        %v1191 = vshrl.u32 %v1190, 7
        %v1192 = vsub.s32 %v1189, %v1191
        %v1193 = vrot.slane %v1179, %v1192
        %v1194 = vcombine.low %v1161, %v1177
        %v1195 = vcombine.high %v1161, %v1177
        %v1197 = vunpack.c.l.s4 1934713408
        %v1198 = vunpack.c.0.s8 %v1197
        %v1199 = vlaneseq
        %v1200 = vshrl.u32 %v1199, 7
        %v1201 = vsub.s32 %v1198, %v1200
        %v1202 = vrot.slane %v1194, %v1201
        %v1204 = vunpack.c.l.s4 1934713408
        %v1205 = vunpack.c.0.s8 %v1204
        %v1206 = vlaneseq
        %v1207 = vshrl.u32 %v1206, 7
        %v1208 = vsub.s32 %v1205, %v1207
        %v1209 = vrot.slane %v1195, %v1208
        %v1210 = vcombine.high %v1186, 0.0
        %v1211 = vcombine.high %v1193, 0.0
        %v1212 = vcombine.high %v1202, 0.0
        %v1213 = vcombine.high %v1209, 0.0
        %v1214 = vsel %vm374, %v1133, inf
        %1215 = vmin.xlane.f32.xlu0 %v1214
        %v1216 = vpop.xlane.xlu0 %1215
        %v1217 = vrot.slane %v1216, 4
        %v1218 = vmin.f32 %v1216, %v1217
        %v1219 = vrot.slane %v1218, 2
        %v1220 = vmin.f32 %v1218, %v1219
        %v1221 = vrot.slane %v1220, 1
        %v1222 = vmin.f32 %v1220, %v1221
        %v1223 = vld [vmem:[#allocation3] sm:$0xf]
        %v1224 = vld [vmem:[#allocation3 + $0x4] sm:$0xf]
        %v1225 = vld [vmem:[#allocation3 + $0x8] sm:$0xf]
        %v1226 = vld [vmem:[#allocation3 + $0xc] sm:$0xf]
        %v1227 = vld [vmem:[#allocation3 + $0x10] sm:$0xf]
        %v1228 = vld [vmem:[#allocation3 + $0x14] sm:$0xf]
        %v1229 = vld [vmem:[#allocation3 + $0x18] sm:$0xf]
        %v1230 = vld [vmem:[#allocation3 + $0x1c] sm:$0xf]
        %v1231 = vsub.f32 1.0, %v1223
        %v1232 = vsub.f32 1.0, %v1224
        %v1233 = vsub.f32 1.0, %v1225
        %v1234 = vsub.f32 1.0, %v1226
        %v1235 = vsub.f32 1.0, %v1227
        %v1236 = vsub.f32 1.0, %v1228
        %v1237 = vsub.f32 1.0, %v1229
        %v1238 = vsub.f32 1.0, %v1230
        %v1239 = vsub.f32 %v1186, %v1222
        %v1240 = vsub.f32 %v1210, %v1222
        %v1241 = vsub.f32 %v1193, %v1222
        %v1242 = vsub.f32 %v1211, %v1222
        %v1243 = vsub.f32 %v1202, %v1222
        %v1244 = vsub.f32 %v1212, %v1222
        %v1245 = vsub.f32 %v1209, %v1222
        %v1246 = vsub.f32 %v1213, %v1222
        %v1247 = vadd.f32 %v1239, 1.0
        %v1248 = vadd.f32 %v1240, 1.0
        %v1249 = vadd.f32 %v1241, 1.0
        %v1250 = vadd.f32 %v1242, 1.0
        %v1251 = vadd.f32 %v1243, 1.0
        %v1252 = vadd.f32 %v1244, 1.0
        %v1253 = vadd.f32 %v1245, 1.0
        %v1254 = vadd.f32 %v1246, 1.0
        %v1255 = vmul.f32 %v1231, %v1247
        %v1256 = vmul.f32 %v1232, %v1248
        %v1257 = vmul.f32 %v1233, %v1249
        %v1258 = vmul.f32 %v1234, %v1250
        %v1259 = vmul.f32 %v1235, %v1251
        %v1260 = vmul.f32 %v1236, %v1252
        %v1261 = vmul.f32 %v1237, %v1253
        %v1262 = vmul.f32 %v1238, %v1254
        %vm1263 = vcmask 125952
        %v1264 = vsel %vm1263, %v1255, -inf
        %v1265 = vrot.slane %v1264, 4
        %v1266 = vmax.f32 %v1264, %v1265
        %v1267 = vrot.slane %v1266, 2
        %v1268 = vmax.f32 %v1266, %v1267
        %v1269 = vrot.slane %v1268, 1
        %v1270 = vmax.f32 %v1268, %v1269
        %v1271 = vsel %vm1263, %v1256, -inf
        %v1272 = vrot.slane %v1271, 4
        %v1273 = vmax.f32 %v1271, %v1272
        %v1274 = vrot.slane %v1273, 2
        %v1275 = vmax.f32 %v1273, %v1274
        %v1276 = vrot.slane %v1275, 1
        %v1277 = vmax.f32 %v1275, %v1276
        %v1278 = vsel %vm1263, %v1257, -inf
        %v1279 = vrot.slane %v1278, 4
        %v1280 = vmax.f32 %v1278, %v1279
        %v1281 = vrot.slane %v1280, 2
        %v1282 = vmax.f32 %v1280, %v1281
        %v1283 = vrot.slane %v1282, 1
        %v1284 = vmax.f32 %v1282, %v1283
        %v1285 = vsel %vm1263, %v1258, -inf
        %v1286 = vrot.slane %v1285, 4
        %v1287 = vmax.f32 %v1285, %v1286
        %v1288 = vrot.slane %v1287, 2
        %v1289 = vmax.f32 %v1287, %v1288
        %v1290 = vrot.slane %v1289, 1
        %v1291 = vmax.f32 %v1289, %v1290
        %v1292 = vsel %vm1263, %v1259, -inf
        %v1293 = vrot.slane %v1292, 4
        %v1294 = vmax.f32 %v1292, %v1293
        %v1295 = vrot.slane %v1294, 2
        %v1296 = vmax.f32 %v1294, %v1295
        %v1297 = vrot.slane %v1296, 1
        %v1298 = vmax.f32 %v1296, %v1297
        %v1299 = vsel %vm1263, %v1260, -inf
        %v1300 = vrot.slane %v1299, 4
        %v1301 = vmax.f32 %v1299, %v1300
        %v1302 = vrot.slane %v1301, 2
        %v1303 = vmax.f32 %v1301, %v1302
        %v1304 = vrot.slane %v1303, 1
        %v1305 = vmax.f32 %v1303, %v1304
        %v1306 = vsel %vm1263, %v1261, -inf
        %v1307 = vrot.slane %v1306, 4
        %v1308 = vmax.f32 %v1306, %v1307
        %v1309 = vrot.slane %v1308, 2
        %v1310 = vmax.f32 %v1308, %v1309
        %v1311 = vrot.slane %v1310, 1
        %v1312 = vmax.f32 %v1310, %v1311
        %v1313 = vsel %vm1263, %v1262, -inf
        %v1314 = vrot.slane %v1313, 4
        %v1315 = vmax.f32 %v1313, %v1314
        %v1316 = vrot.slane %v1315, 2
        %v1317 = vmax.f32 %v1315, %v1316
        %v1318 = vrot.slane %v1317, 1
        %v1319 = vmax.f32 %v1317, %v1318
        %v1320 = vlaneseq
        %v1321 = vshrl.u32 %v1320, 7
        %v1322 = vadd.s32 %v1321, 8
        %v1323 = vlaneseq
        %v1324 = vand.u32 %v1323, 127
        %vm1325 = vcmp.lt.s32.totalorder %v1324, %v1321
        %vm1326 = vcmp.lt.s32.totalorder %v1324, %v1322
        %1328 = vbcast.lane.b32.xlu0 %v1270, 256
        %v1329 = vpop.permute.xlu0 %1328
        %s1331 = sor.u32 256, 8
        %1332 = vbcast.lane.b32.xlu0 %v1270, %s1331
        %v1333 = vpop.permute.xlu0 %1332
        %1335 = vbcast.lane.b32.xlu0 %v1277, 256
        %v1336 = vpop.permute.xlu0 %1335
        %s1338 = sor.u32 256, 8
        %1339 = vbcast.lane.b32.xlu0 %v1277, %s1338
        %v1340 = vpop.permute.xlu0 %1339
        %1342 = vbcast.lane.b32.xlu0 %v1284, 256
        %v1343 = vpop.permute.xlu0 %1342
        %s1345 = sor.u32 256, 8
        %1346 = vbcast.lane.b32.xlu0 %v1284, %s1345
        %v1347 = vpop.permute.xlu0 %1346
        %1349 = vbcast.lane.b32.xlu0 %v1291, 256
        %v1350 = vpop.permute.xlu0 %1349
        %s1352 = sor.u32 256, 8
        %1353 = vbcast.lane.b32.xlu0 %v1291, %s1352
        %v1354 = vpop.permute.xlu0 %1353
        %1356 = vbcast.lane.b32.xlu0 %v1298, 256
        %v1357 = vpop.permute.xlu0 %1356
        %s1359 = sor.u32 256, 8
        %1360 = vbcast.lane.b32.xlu0 %v1298, %s1359
        %v1361 = vpop.permute.xlu0 %1360
        %1363 = vbcast.lane.b32.xlu0 %v1305, 256
        %v1364 = vpop.permute.xlu0 %1363
        %s1366 = sor.u32 256, 8
        %1367 = vbcast.lane.b32.xlu0 %v1305, %s1366
        %v1368 = vpop.permute.xlu0 %1367
        %1370 = vbcast.lane.b32.xlu0 %v1312, 256
        %v1371 = vpop.permute.xlu0 %1370
        %s1373 = sor.u32 256, 8
        %1374 = vbcast.lane.b32.xlu0 %v1312, %s1373
        %v1375 = vpop.permute.xlu0 %1374
        %1377 = vbcast.lane.b32.xlu0 %v1319, 256
        %v1378 = vpop.permute.xlu0 %1377
        %s1380 = sor.u32 256, 8
        %1381 = vbcast.lane.b32.xlu0 %v1319, %s1380
        %v1382 = vpop.permute.xlu0 %1381
        %vm1383 = vcmp.gt.f32.partialorder %v1270, %v1329
        %vm1384 = vcmp.gt.f32.partialorder %v1270, %v1333
        %vm1385 = vcmp.gt.f32.partialorder %v1277, %v1336
        %vm1386 = vcmp.gt.f32.partialorder %v1277, %v1340
        %vm1387 = vcmp.gt.f32.partialorder %v1284, %v1343
        %vm1388 = vcmp.gt.f32.partialorder %v1284, %v1347
        %vm1389 = vcmp.gt.f32.partialorder %v1291, %v1350
        %vm1390 = vcmp.gt.f32.partialorder %v1291, %v1354
        %vm1391 = vcmp.gt.f32.partialorder %v1298, %v1357
        %vm1392 = vcmp.gt.f32.partialorder %v1298, %v1361
        %vm1393 = vcmp.gt.f32.partialorder %v1305, %v1364
        %vm1394 = vcmp.gt.f32.partialorder %v1305, %v1368
        %vm1395 = vcmp.gt.f32.partialorder %v1312, %v1371
        %vm1396 = vcmp.gt.f32.partialorder %v1312, %v1375
        %vm1397 = vcmp.gt.f32.partialorder %v1319, %v1378
        %vm1398 = vcmp.gt.f32.partialorder %v1319, %v1382
        %vm1399 = vcmp.eq.f32.partialorder %v1270, %v1329
        %vm1400 = vcmp.eq.f32.partialorder %v1270, %v1333
        %vm1401 = vcmp.eq.f32.partialorder %v1277, %v1336
        %vm1402 = vcmp.eq.f32.partialorder %v1277, %v1340
        %vm1403 = vcmp.eq.f32.partialorder %v1284, %v1343
        %vm1404 = vcmp.eq.f32.partialorder %v1284, %v1347
        %vm1405 = vcmp.eq.f32.partialorder %v1291, %v1350
        %vm1406 = vcmp.eq.f32.partialorder %v1291, %v1354
        %vm1407 = vcmp.eq.f32.partialorder %v1298, %v1357
        %vm1408 = vcmp.eq.f32.partialorder %v1298, %v1361
        %vm1409 = vcmp.eq.f32.partialorder %v1305, %v1364
        %vm1410 = vcmp.eq.f32.partialorder %v1305, %v1368
        %vm1411 = vcmp.eq.f32.partialorder %v1312, %v1371
        %vm1412 = vcmp.eq.f32.partialorder %v1312, %v1375
        %vm1413 = vcmp.eq.f32.partialorder %v1319, %v1378
        %vm1414 = vcmp.eq.f32.partialorder %v1319, %v1382
        %v1415 = vsel %vm1325, 1, 0
        %v1416 = vsel %vm1326, 1, 0
        %vm1417 = vcmp.eq.s32.totalorder %v1415, 1
        %vm1418 = vcmp.eq.s32.totalorder %v1416, 1
        %vm1419 = vmand %vm1399, %vm1417
        %vm1420 = vmand %vm1400, %vm1418
        %vm1421 = vmand %vm1401, %vm1417
        %vm1422 = vmand %vm1402, %vm1418
        %vm1423 = vmand %vm1403, %vm1417
        %vm1424 = vmand %vm1404, %vm1418
        %vm1425 = vmand %vm1405, %vm1417
        %vm1426 = vmand %vm1406, %vm1418
        %vm1427 = vmand %vm1407, %vm1417
        %vm1428 = vmand %vm1408, %vm1418
        %vm1429 = vmand %vm1409, %vm1417
        %vm1430 = vmand %vm1410, %vm1418
        %vm1431 = vmand %vm1411, %vm1417
        %vm1432 = vmand %vm1412, %vm1418
        %vm1433 = vmand %vm1413, %vm1417
        %vm1434 = vmand %vm1414, %vm1418
        %vm1435 = vmor %vm1383, %vm1419
        %vm1436 = vmor %vm1384, %vm1420
        %vm1437 = vmor %vm1385, %vm1421
        %vm1438 = vmor %vm1386, %vm1422
        %vm1439 = vmor %vm1387, %vm1423
        %vm1440 = vmor %vm1388, %vm1424
        %vm1441 = vmor %vm1389, %vm1425
        %vm1442 = vmor %vm1390, %vm1426
        %vm1443 = vmor %vm1391, %vm1427
        %vm1444 = vmor %vm1392, %vm1428
        %vm1445 = vmor %vm1393, %vm1429
        %vm1446 = vmor %vm1394, %vm1430
        %vm1447 = vmor %vm1395, %vm1431
        %vm1448 = vmor %vm1396, %vm1432
        %vm1449 = vmor %vm1397, %vm1433
        %vm1450 = vmor %vm1398, %vm1434
        %v1451 = vsel %vm1435, 1.0, 0.0
        %v1452 = vsel %vm1436, 1.0, 0.0
        %v1453 = vsel %vm1437, 1.0, 0.0
        %v1454 = vsel %vm1438, 1.0, 0.0
        %v1455 = vsel %vm1439, 1.0, 0.0
        %v1456 = vsel %vm1440, 1.0, 0.0
        %v1457 = vsel %vm1441, 1.0, 0.0
        %v1458 = vsel %vm1442, 1.0, 0.0
        %v1459 = vsel %vm1443, 1.0, 0.0
        %v1460 = vsel %vm1444, 1.0, 0.0
        %v1461 = vsel %vm1445, 1.0, 0.0
        %v1462 = vsel %vm1446, 1.0, 0.0
        %v1463 = vsel %vm1447, 1.0, 0.0
        %v1464 = vsel %vm1448, 1.0, 0.0
        %v1465 = vsel %vm1449, 1.0, 0.0
        %v1466 = vsel %vm1450, 1.0, 0.0
        %vm1467 = vcmask 130048
        %v1468 = vsel %vm1467, %v1451, 0.0
        %1469 = vadd.xlane.f32.xlu0 %v1468
        %v1470 = vpop.xlane.xlu0 %1469
        %v1471 = vsel %vm1467, %v1452, 0.0
        %1472 = vadd.xlane.f32.xlu0 %v1471
        %v1473 = vpop.xlane.xlu0 %1472
        %v1474 = vsel %vm1467, %v1453, 0.0
        %1475 = vadd.xlane.f32.xlu0 %v1474
        %v1476 = vpop.xlane.xlu0 %1475
        %v1477 = vsel %vm1467, %v1454, 0.0
        %1478 = vadd.xlane.f32.xlu0 %v1477
        %v1479 = vpop.xlane.xlu0 %1478
        %v1480 = vsel %vm1467, %v1455, 0.0
        %1481 = vadd.xlane.f32.xlu0 %v1480
        %v1482 = vpop.xlane.xlu0 %1481
        %v1483 = vsel %vm1467, %v1456, 0.0
        %1484 = vadd.xlane.f32.xlu0 %v1483
        %v1485 = vpop.xlane.xlu0 %1484
        %v1486 = vsel %vm1467, %v1457, 0.0
        %1487 = vadd.xlane.f32.xlu0 %v1486
        %v1488 = vpop.xlane.xlu0 %1487
        %v1489 = vsel %vm1467, %v1458, 0.0
        %1490 = vadd.xlane.f32.xlu0 %v1489
        %v1491 = vpop.xlane.xlu0 %1490
        %v1492 = vsel %vm1467, %v1459, 0.0
        %1493 = vadd.xlane.f32.xlu0 %v1492
        %v1494 = vpop.xlane.xlu0 %1493
        %v1495 = vsel %vm1467, %v1460, 0.0
        %1496 = vadd.xlane.f32.xlu0 %v1495
        %v1497 = vpop.xlane.xlu0 %1496
        %v1498 = vsel %vm1467, %v1461, 0.0
        %1499 = vadd.xlane.f32.xlu0 %v1498
        %v1500 = vpop.xlane.xlu0 %1499
        %v1501 = vsel %vm1467, %v1462, 0.0
        %1502 = vadd.xlane.f32.xlu0 %v1501
        %v1503 = vpop.xlane.xlu0 %1502
        %v1504 = vsel %vm1467, %v1463, 0.0
        %1505 = vadd.xlane.f32.xlu0 %v1504
        %v1506 = vpop.xlane.xlu0 %1505
        %v1507 = vsel %vm1467, %v1464, 0.0
        %1508 = vadd.xlane.f32.xlu0 %v1507
        %v1509 = vpop.xlane.xlu0 %1508
        %v1510 = vsel %vm1467, %v1465, 0.0
        %1511 = vadd.xlane.f32.xlu0 %v1510
        %v1512 = vpop.xlane.xlu0 %1511
        %v1513 = vsel %vm1467, %v1466, 0.0
        %1514 = vadd.xlane.f32.xlu0 %v1513
        %v1515 = vpop.xlane.xlu0 %1514
        %vm1516 = vcmp.lt.f32.partialorder %v1470, 4.0
        %vm1517 = vcmp.lt.f32.partialorder %v1473, 4.0
        %vm1518 = vcmp.lt.f32.partialorder %v1476, 4.0
        %vm1519 = vcmp.lt.f32.partialorder %v1479, 4.0
        %vm1520 = vcmp.lt.f32.partialorder %v1482, 4.0
        %vm1521 = vcmp.lt.f32.partialorder %v1485, 4.0
        %vm1522 = vcmp.lt.f32.partialorder %v1488, 4.0
        %vm1523 = vcmp.lt.f32.partialorder %v1491, 4.0
        %vm1524 = vcmp.lt.f32.partialorder %v1494, 4.0
        %vm1525 = vcmp.lt.f32.partialorder %v1497, 4.0
        %vm1526 = vcmp.lt.f32.partialorder %v1500, 4.0
        %vm1527 = vcmp.lt.f32.partialorder %v1503, 4.0
        %vm1528 = vcmp.lt.f32.partialorder %v1506, 4.0
        %vm1529 = vcmp.lt.f32.partialorder %v1509, 4.0
        %vm1530 = vcmp.lt.f32.partialorder %v1512, 4.0
        %vm1531 = vcmp.lt.f32.partialorder %v1515, 4.0
        %v1532 = vsel %vm1516, 1.0, 0.0
        %v1533 = vsel %vm1517, 1.0, 0.0
        %v1534 = vsel %vm1518, 1.0, 0.0
        %v1535 = vsel %vm1519, 1.0, 0.0
        %v1536 = vsel %vm1520, 1.0, 0.0
        %v1537 = vsel %vm1521, 1.0, 0.0
        %v1538 = vsel %vm1522, 1.0, 0.0
        %v1539 = vsel %vm1523, 1.0, 0.0
        %v1540 = vsel %vm1524, 1.0, 0.0
        %v1541 = vsel %vm1525, 1.0, 0.0
        %v1542 = vsel %vm1526, 1.0, 0.0
        %v1543 = vsel %vm1527, 1.0, 0.0
        %v1544 = vsel %vm1528, 1.0, 0.0
        %v1545 = vsel %vm1529, 1.0, 0.0
        %v1546 = vsel %vm1530, 1.0, 0.0
        %v1547 = vsel %vm1531, 1.0, 0.0
        %v1548 = vlaneseq
        %v1549 = vshrl.u32 %v1548, 7
        %v1550 = vsub.s32 0, %v1549
        %v1551 = vrot.slane %v1255, %v1550
        %v1552 = vlaneseq
        %v1553 = vshrl.u32 %v1552, 7
        %v1554 = vsub.s32 0, %v1553
        %v1555 = vrot.slane %v1256, %v1554
        %v1556 = vlaneseq
        %v1557 = vshrl.u32 %v1556, 7
        %v1558 = vsub.s32 0, %v1557
        %v1559 = vrot.slane %v1257, %v1558
        %v1560 = vlaneseq
        %v1561 = vshrl.u32 %v1560, 7
        %v1562 = vsub.s32 0, %v1561
        %v1563 = vrot.slane %v1258, %v1562
        %v1564 = vlaneseq
        %v1565 = vshrl.u32 %v1564, 7
        %v1566 = vsub.s32 0, %v1565
        %v1567 = vrot.slane %v1259, %v1566
        %v1568 = vlaneseq
        %v1569 = vshrl.u32 %v1568, 7
        %v1570 = vsub.s32 0, %v1569
        %v1571 = vrot.slane %v1260, %v1570
        %v1572 = vlaneseq
        %v1573 = vshrl.u32 %v1572, 7
        %v1574 = vsub.s32 0, %v1573
        %v1575 = vrot.slane %v1261, %v1574
        %v1576 = vlaneseq
        %v1577 = vshrl.u32 %v1576, 7
        %v1578 = vsub.s32 0, %v1577
        %v1579 = vrot.slane %v1262, %v1578
        %vm1580 = vcmp.gt.f32.partialorder %v1551, %v1255
        %vm1581 = vcmp.gt.f32.partialorder %v1555, %v1256
        %vm1582 = vcmp.gt.f32.partialorder %v1559, %v1257
        %vm1583 = vcmp.gt.f32.partialorder %v1563, %v1258
        %vm1584 = vcmp.gt.f32.partialorder %v1567, %v1259
        %vm1585 = vcmp.gt.f32.partialorder %v1571, %v1260
        %vm1586 = vcmp.gt.f32.partialorder %v1575, %v1261
        %vm1587 = vcmp.gt.f32.partialorder %v1579, %v1262
        %vm1588 = vcmp.eq.f32.partialorder %v1551, %v1255
        %vm1589 = vcmp.eq.f32.partialorder %v1555, %v1256
        %vm1590 = vcmp.eq.f32.partialorder %v1559, %v1257
        %vm1591 = vcmp.eq.f32.partialorder %v1563, %v1258
        %vm1592 = vcmp.eq.f32.partialorder %v1567, %v1259
        %vm1593 = vcmp.eq.f32.partialorder %v1571, %v1260
        %vm1594 = vcmp.eq.f32.partialorder %v1575, %v1261
        %vm1595 = vcmp.eq.f32.partialorder %v1579, %v1262
        %vm1596 = vcmp.gt.s32.totalorder %v1321, 0
        %v1597 = vsel %vm1596, 1, 0
        %vm1598 = vcmp.eq.s32.totalorder %v1597, 1
        %vm1599 = vmand %vm1588, %vm1598
        %vm1600 = vmand %vm1589, %vm1598
        %vm1601 = vmand %vm1590, %vm1598
        %vm1602 = vmand %vm1591, %vm1598
        %vm1603 = vmand %vm1592, %vm1598
        %vm1604 = vmand %vm1593, %vm1598
        %vm1605 = vmand %vm1594, %vm1598
        %vm1606 = vmand %vm1595, %vm1598
        %vm1607 = vmor %vm1580, %vm1599
        %vm1608 = vmor %vm1581, %vm1600
        %vm1609 = vmor %vm1582, %vm1601
        %vm1610 = vmor %vm1583, %vm1602
        %vm1611 = vmor %vm1584, %vm1603
        %vm1612 = vmor %vm1585, %vm1604
        %vm1613 = vmor %vm1586, %vm1605
        %vm1614 = vmor %vm1587, %vm1606
        %v1615 = vsel %vm1607, 1.0, 0.0
        %v1616 = vsel %vm1608, 1.0, 0.0
        %v1617 = vsel %vm1609, 1.0, 0.0
        %v1618 = vsel %vm1610, 1.0, 0.0
        %v1619 = vsel %vm1611, 1.0, 0.0
        %v1620 = vsel %vm1612, 1.0, 0.0
        %v1621 = vsel %vm1613, 1.0, 0.0
        %v1622 = vsel %vm1614, 1.0, 0.0
        %v1623 = vadd.f32 %v1615, 0.0
        %v1624 = vadd.f32 %v1616, 0.0
        %v1625 = vadd.f32 %v1617, 0.0
        %v1626 = vadd.f32 %v1618, 0.0
        %v1627 = vadd.f32 %v1619, 0.0
        %v1628 = vadd.f32 %v1620, 0.0
        %v1629 = vadd.f32 %v1621, 0.0
        %v1630 = vadd.f32 %v1622, 0.0
        %v1631 = vlaneseq
        %v1632 = vshrl.u32 %v1631, 7
        %v1633 = vsub.s32 1, %v1632
        %v1634 = vrot.slane %v1255, %v1633
        %v1635 = vlaneseq
        %v1636 = vshrl.u32 %v1635, 7
        %v1637 = vsub.s32 1, %v1636
        %v1638 = vrot.slane %v1256, %v1637
        %v1639 = vlaneseq
        %v1640 = vshrl.u32 %v1639, 7
        %v1641 = vsub.s32 1, %v1640
        %v1642 = vrot.slane %v1257, %v1641
        %v1643 = vlaneseq
        %v1644 = vshrl.u32 %v1643, 7
        %v1645 = vsub.s32 1, %v1644
        %v1646 = vrot.slane %v1258, %v1645
        %v1647 = vlaneseq
        %v1648 = vshrl.u32 %v1647, 7
        %v1649 = vsub.s32 1, %v1648
        %v1650 = vrot.slane %v1259, %v1649
        %v1651 = vlaneseq
        %v1652 = vshrl.u32 %v1651, 7
        %v1653 = vsub.s32 1, %v1652
        %v1654 = vrot.slane %v1260, %v1653
        %v1655 = vlaneseq
        %v1656 = vshrl.u32 %v1655, 7
        %v1657 = vsub.s32 1, %v1656
        %v1658 = vrot.slane %v1261, %v1657
        %v1659 = vlaneseq
        %v1660 = vshrl.u32 %v1659, 7
        %v1661 = vsub.s32 1, %v1660
        %v1662 = vrot.slane %v1262, %v1661
        %vm1663 = vcmp.gt.f32.partialorder %v1634, %v1255
        %vm1664 = vcmp.gt.f32.partialorder %v1638, %v1256
        %vm1665 = vcmp.gt.f32.partialorder %v1642, %v1257
        %vm1666 = vcmp.gt.f32.partialorder %v1646, %v1258
        %vm1667 = vcmp.gt.f32.partialorder %v1650, %v1259
        %vm1668 = vcmp.gt.f32.partialorder %v1654, %v1260
        %vm1669 = vcmp.gt.f32.partialorder %v1658, %v1261
        %vm1670 = vcmp.gt.f32.partialorder %v1662, %v1262
        %vm1671 = vcmp.eq.f32.partialorder %v1634, %v1255
        %vm1672 = vcmp.eq.f32.partialorder %v1638, %v1256
        %vm1673 = vcmp.eq.f32.partialorder %v1642, %v1257
        %vm1674 = vcmp.eq.f32.partialorder %v1646, %v1258
        %vm1675 = vcmp.eq.f32.partialorder %v1650, %v1259
        %vm1676 = vcmp.eq.f32.partialorder %v1654, %v1260
        %vm1677 = vcmp.eq.f32.partialorder %v1658, %v1261
        %vm1678 = vcmp.eq.f32.partialorder %v1662, %v1262
        %vm1679 = vcmp.gt.s32.totalorder %v1321, 1
        %v1680 = vsel %vm1679, 1, 0
        %vm1681 = vcmp.eq.s32.totalorder %v1680, 1
        %vm1682 = vmand %vm1671, %vm1681
        %vm1683 = vmand %vm1672, %vm1681
        %vm1684 = vmand %vm1673, %vm1681
        %vm1685 = vmand %vm1674, %vm1681
        %vm1686 = vmand %vm1675, %vm1681
        %vm1687 = vmand %vm1676, %vm1681
        %vm1688 = vmand %vm1677, %vm1681
        %vm1689 = vmand %vm1678, %vm1681
        %vm1690 = vmor %vm1663, %vm1682
        %vm1691 = vmor %vm1664, %vm1683
        %vm1692 = vmor %vm1665, %vm1684
        %vm1693 = vmor %vm1666, %vm1685
        %vm1694 = vmor %vm1667, %vm1686
        %vm1695 = vmor %vm1668, %vm1687
        %vm1696 = vmor %vm1669, %vm1688
        %vm1697 = vmor %vm1670, %vm1689
        %v1698 = vsel %vm1690, 1.0, 0.0
        %v1699 = vsel %vm1691, 1.0, 0.0
        %v1700 = vsel %vm1692, 1.0, 0.0
        %v1701 = vsel %vm1693, 1.0, 0.0
        %v1702 = vsel %vm1694, 1.0, 0.0
        %v1703 = vsel %vm1695, 1.0, 0.0
        %v1704 = vsel %vm1696, 1.0, 0.0
        %v1705 = vsel %vm1697, 1.0, 0.0
        %v1706 = vadd.f32 %v1623, %v1698
        %v1707 = vadd.f32 %v1624, %v1699
        %v1708 = vadd.f32 %v1625, %v1700
        %v1709 = vadd.f32 %v1626, %v1701
        %v1710 = vadd.f32 %v1627, %v1702
        %v1711 = vadd.f32 %v1628, %v1703
        %v1712 = vadd.f32 %v1629, %v1704
        %v1713 = vadd.f32 %v1630, %v1705
        %v1714 = vlaneseq
        %v1715 = vshrl.u32 %v1714, 7
        %v1716 = vsub.s32 2, %v1715
        %v1717 = vrot.slane %v1255, %v1716
        %v1718 = vlaneseq
        %v1719 = vshrl.u32 %v1718, 7
        %v1720 = vsub.s32 2, %v1719
        %v1721 = vrot.slane %v1256, %v1720
        %v1722 = vlaneseq
        %v1723 = vshrl.u32 %v1722, 7
        %v1724 = vsub.s32 2, %v1723
        %v1725 = vrot.slane %v1257, %v1724
        %v1726 = vlaneseq
        %v1727 = vshrl.u32 %v1726, 7
        %v1728 = vsub.s32 2, %v1727
        %v1729 = vrot.slane %v1258, %v1728
        %v1730 = vlaneseq
        %v1731 = vshrl.u32 %v1730, 7
        %v1732 = vsub.s32 2, %v1731
        %v1733 = vrot.slane %v1259, %v1732
        %v1734 = vlaneseq
        %v1735 = vshrl.u32 %v1734, 7
        %v1736 = vsub.s32 2, %v1735
        %v1737 = vrot.slane %v1260, %v1736
        %v1738 = vlaneseq
        %v1739 = vshrl.u32 %v1738, 7
        %v1740 = vsub.s32 2, %v1739
        %v1741 = vrot.slane %v1261, %v1740
        %v1742 = vlaneseq
        %v1743 = vshrl.u32 %v1742, 7
        %v1744 = vsub.s32 2, %v1743
        %v1745 = vrot.slane %v1262, %v1744
        %vm1746 = vcmp.gt.f32.partialorder %v1717, %v1255
        %vm1747 = vcmp.gt.f32.partialorder %v1721, %v1256
        %vm1748 = vcmp.gt.f32.partialorder %v1725, %v1257
        %vm1749 = vcmp.gt.f32.partialorder %v1729, %v1258
        %vm1750 = vcmp.gt.f32.partialorder %v1733, %v1259
        %vm1751 = vcmp.gt.f32.partialorder %v1737, %v1260
        %vm1752 = vcmp.gt.f32.partialorder %v1741, %v1261
        %vm1753 = vcmp.gt.f32.partialorder %v1745, %v1262
        %vm1754 = vcmp.eq.f32.partialorder %v1717, %v1255
        %vm1755 = vcmp.eq.f32.partialorder %v1721, %v1256
        %vm1756 = vcmp.eq.f32.partialorder %v1725, %v1257
        %vm1757 = vcmp.eq.f32.partialorder %v1729, %v1258
        %vm1758 = vcmp.eq.f32.partialorder %v1733, %v1259
        %vm1759 = vcmp.eq.f32.partialorder %v1737, %v1260
        %vm1760 = vcmp.eq.f32.partialorder %v1741, %v1261
        %vm1761 = vcmp.eq.f32.partialorder %v1745, %v1262
        %vm1762 = vcmp.gt.s32.totalorder %v1321, 2
        %v1763 = vsel %vm1762, 1, 0
        %vm1764 = vcmp.eq.s32.totalorder %v1763, 1
        %vm1765 = vmand %vm1754, %vm1764
        %vm1766 = vmand %vm1755, %vm1764
        %vm1767 = vmand %vm1756, %vm1764
        %vm1768 = vmand %vm1757, %vm1764
        %vm1769 = vmand %vm1758, %vm1764
        %vm1770 = vmand %vm1759, %vm1764
        %vm1771 = vmand %vm1760, %vm1764
        %vm1772 = vmand %vm1761, %vm1764
        %vm1773 = vmor %vm1746, %vm1765
        %vm1774 = vmor %vm1747, %vm1766
        %vm1775 = vmor %vm1748, %vm1767
        %vm1776 = vmor %vm1749, %vm1768
        %vm1777 = vmor %vm1750, %vm1769
        %vm1778 = vmor %vm1751, %vm1770
        %vm1779 = vmor %vm1752, %vm1771
        %vm1780 = vmor %vm1753, %vm1772
        %v1781 = vsel %vm1773, 1.0, 0.0
        %v1782 = vsel %vm1774, 1.0, 0.0
        %v1783 = vsel %vm1775, 1.0, 0.0
        %v1784 = vsel %vm1776, 1.0, 0.0
        %v1785 = vsel %vm1777, 1.0, 0.0
        %v1786 = vsel %vm1778, 1.0, 0.0
        %v1787 = vsel %vm1779, 1.0, 0.0
        %v1788 = vsel %vm1780, 1.0, 0.0
        %v1789 = vadd.f32 %v1706, %v1781
        %v1790 = vadd.f32 %v1707, %v1782
        %v1791 = vadd.f32 %v1708, %v1783
        %v1792 = vadd.f32 %v1709, %v1784
        %v1793 = vadd.f32 %v1710, %v1785
        %v1794 = vadd.f32 %v1711, %v1786
        %v1795 = vadd.f32 %v1712, %v1787
        %v1796 = vadd.f32 %v1713, %v1788
        %v1797 = vlaneseq
        %v1798 = vshrl.u32 %v1797, 7
        %v1799 = vsub.s32 3, %v1798
        %v1800 = vrot.slane %v1255, %v1799
        %v1801 = vlaneseq
        %v1802 = vshrl.u32 %v1801, 7
        %v1803 = vsub.s32 3, %v1802
        %v1804 = vrot.slane %v1256, %v1803
        %v1805 = vlaneseq
        %v1806 = vshrl.u32 %v1805, 7
        %v1807 = vsub.s32 3, %v1806
        %v1808 = vrot.slane %v1257, %v1807
        %v1809 = vlaneseq
        %v1810 = vshrl.u32 %v1809, 7
        %v1811 = vsub.s32 3, %v1810
        %v1812 = vrot.slane %v1258, %v1811
        %v1813 = vlaneseq
        %v1814 = vshrl.u32 %v1813, 7
        %v1815 = vsub.s32 3, %v1814
        %v1816 = vrot.slane %v1259, %v1815
        %v1817 = vlaneseq
        %v1818 = vshrl.u32 %v1817, 7
        %v1819 = vsub.s32 3, %v1818
        %v1820 = vrot.slane %v1260, %v1819
        %v1821 = vlaneseq
        %v1822 = vshrl.u32 %v1821, 7
        %v1823 = vsub.s32 3, %v1822
        %v1824 = vrot.slane %v1261, %v1823
        %v1825 = vlaneseq
        %v1826 = vshrl.u32 %v1825, 7
        %v1827 = vsub.s32 3, %v1826
        %v1828 = vrot.slane %v1262, %v1827
        %vm1829 = vcmp.gt.f32.partialorder %v1800, %v1255
        %vm1830 = vcmp.gt.f32.partialorder %v1804, %v1256
        %vm1831 = vcmp.gt.f32.partialorder %v1808, %v1257
        %vm1832 = vcmp.gt.f32.partialorder %v1812, %v1258
        %vm1833 = vcmp.gt.f32.partialorder %v1816, %v1259
        %vm1834 = vcmp.gt.f32.partialorder %v1820, %v1260
        %vm1835 = vcmp.gt.f32.partialorder %v1824, %v1261
        %vm1836 = vcmp.gt.f32.partialorder %v1828, %v1262
        %vm1837 = vcmp.eq.f32.partialorder %v1800, %v1255
        %vm1838 = vcmp.eq.f32.partialorder %v1804, %v1256
        %vm1839 = vcmp.eq.f32.partialorder %v1808, %v1257
        %vm1840 = vcmp.eq.f32.partialorder %v1812, %v1258
        %vm1841 = vcmp.eq.f32.partialorder %v1816, %v1259
        %vm1842 = vcmp.eq.f32.partialorder %v1820, %v1260
        %vm1843 = vcmp.eq.f32.partialorder %v1824, %v1261
        %vm1844 = vcmp.eq.f32.partialorder %v1828, %v1262
        %vm1845 = vcmp.gt.s32.totalorder %v1321, 3
        %v1846 = vsel %vm1845, 1, 0
        %vm1847 = vcmp.eq.s32.totalorder %v1846, 1
        %vm1848 = vmand %vm1837, %vm1847
        %vm1849 = vmand %vm1838, %vm1847
        %vm1850 = vmand %vm1839, %vm1847
        %vm1851 = vmand %vm1840, %vm1847
        %vm1852 = vmand %vm1841, %vm1847
        %vm1853 = vmand %vm1842, %vm1847
        %vm1854 = vmand %vm1843, %vm1847
        %vm1855 = vmand %vm1844, %vm1847
        %vm1856 = vmor %vm1829, %vm1848
        %vm1857 = vmor %vm1830, %vm1849
        %vm1858 = vmor %vm1831, %vm1850
        %vm1859 = vmor %vm1832, %vm1851
        %vm1860 = vmor %vm1833, %vm1852
        %vm1861 = vmor %vm1834, %vm1853
        %vm1862 = vmor %vm1835, %vm1854
        %vm1863 = vmor %vm1836, %vm1855
        %v1864 = vsel %vm1856, 1.0, 0.0
        %v1865 = vsel %vm1857, 1.0, 0.0
        %v1866 = vsel %vm1858, 1.0, 0.0
        %v1867 = vsel %vm1859, 1.0, 0.0
        %v1868 = vsel %vm1860, 1.0, 0.0
        %v1869 = vsel %vm1861, 1.0, 0.0
        %v1870 = vsel %vm1862, 1.0, 0.0
        %v1871 = vsel %vm1863, 1.0, 0.0
        %v1872 = vadd.f32 %v1789, %v1864
        %v1873 = vadd.f32 %v1790, %v1865
        %v1874 = vadd.f32 %v1791, %v1866
        %v1875 = vadd.f32 %v1792, %v1867
        %v1876 = vadd.f32 %v1793, %v1868
        %v1877 = vadd.f32 %v1794, %v1869
        %v1878 = vadd.f32 %v1795, %v1870
        %v1879 = vadd.f32 %v1796, %v1871
        %vm1880 = vcmp.lt.f32.partialorder %v1872, 1.0
        %vm1881 = vcmp.lt.f32.partialorder %v1873, 1.0
        %vm1882 = vcmp.lt.f32.partialorder %v1874, 1.0
        %vm1883 = vcmp.lt.f32.partialorder %v1875, 1.0
        %vm1884 = vcmp.lt.f32.partialorder %v1876, 1.0
        %vm1885 = vcmp.lt.f32.partialorder %v1877, 1.0
        %vm1886 = vcmp.lt.f32.partialorder %v1878, 1.0
        %vm1887 = vcmp.lt.f32.partialorder %v1879, 1.0
        %v1888 = vsel %vm1880, 1.0, 0.0
        %v1889 = vsel %vm1881, 1.0, 0.0
        %v1890 = vsel %vm1882, 1.0, 0.0
        %v1891 = vsel %vm1883, 1.0, 0.0
        %v1892 = vsel %vm1884, 1.0, 0.0
        %v1893 = vsel %vm1885, 1.0, 0.0
        %v1894 = vsel %vm1886, 1.0, 0.0
        %v1895 = vsel %vm1887, 1.0, 0.0
        %v1912 = vlaneseq
        %v1913 = vshrl.u32 %v1912, 7
        %v1914 = vsub.s32 %v1324, %v1913
        %v1915 = vrot.slane %v1532, %v1914
        %v1916 = vadd.s32 %v1324, 4294967288
        %v1917 = vlaneseq
        %v1918 = vshrl.u32 %v1917, 7
        %v1919 = vsub.s32 %v1916, %v1918
        %v1920 = vrot.slane %v1533, %v1919
        %vm1921 = vcmask 130112
        %v1922 = vsel %vm1921, %v1920, %v1915
        %v1923 = vlaneseq
        %v1924 = vshrl.u32 %v1923, 7
        %v1925 = vsub.s32 %v1324, %v1924
        %v1926 = vrot.slane %v1534, %v1925
        %v1927 = vlaneseq
        %v1928 = vshrl.u32 %v1927, 7
        %v1929 = vsub.s32 %v1916, %v1928
        %v1930 = vrot.slane %v1535, %v1929
        %v1931 = vsel %vm1921, %v1930, %v1926
        %v1932 = vlaneseq
        %v1933 = vshrl.u32 %v1932, 7
        %v1934 = vsub.s32 %v1324, %v1933
        %v1935 = vrot.slane %v1536, %v1934
        %v1936 = vlaneseq
        %v1937 = vshrl.u32 %v1936, 7
        %v1938 = vsub.s32 %v1916, %v1937
        %v1939 = vrot.slane %v1537, %v1938
        %v1940 = vsel %vm1921, %v1939, %v1935
        %v1941 = vlaneseq
        %v1942 = vshrl.u32 %v1941, 7
        %v1943 = vsub.s32 %v1324, %v1942
        %v1944 = vrot.slane %v1538, %v1943
        %v1945 = vlaneseq
        %v1946 = vshrl.u32 %v1945, 7
        %v1947 = vsub.s32 %v1916, %v1946
        %v1948 = vrot.slane %v1539, %v1947
        %v1949 = vsel %vm1921, %v1948, %v1944
        %v1950 = vlaneseq
        %v1951 = vshrl.u32 %v1950, 7
        %v1952 = vsub.s32 %v1324, %v1951
        %v1953 = vrot.slane %v1540, %v1952
        %v1954 = vlaneseq
        %v1955 = vshrl.u32 %v1954, 7
        %v1956 = vsub.s32 %v1916, %v1955
        %v1957 = vrot.slane %v1541, %v1956
        %v1958 = vsel %vm1921, %v1957, %v1953
        %v1959 = vlaneseq
        %v1960 = vshrl.u32 %v1959, 7
        %v1961 = vsub.s32 %v1324, %v1960
        %v1962 = vrot.slane %v1542, %v1961
        %v1963 = vlaneseq
        %v1964 = vshrl.u32 %v1963, 7
        %v1965 = vsub.s32 %v1916, %v1964
        %v1966 = vrot.slane %v1543, %v1965
        %v1967 = vsel %vm1921, %v1966, %v1962
        %v1968 = vlaneseq
        %v1969 = vshrl.u32 %v1968, 7
        %v1970 = vsub.s32 %v1324, %v1969
        %v1971 = vrot.slane %v1544, %v1970
        %v1972 = vlaneseq
        %v1973 = vshrl.u32 %v1972, 7
        %v1974 = vsub.s32 %v1916, %v1973
        %v1975 = vrot.slane %v1545, %v1974
        %v1976 = vsel %vm1921, %v1975, %v1971
        %v1977 = vlaneseq
        %v1978 = vshrl.u32 %v1977, 7
        %v1979 = vsub.s32 %v1324, %v1978
        %v1980 = vrot.slane %v1546, %v1979
        %v1981 = vlaneseq
        %v1982 = vshrl.u32 %v1981, 7
        %v1983 = vsub.s32 %v1916, %v1982
        %v1984 = vrot.slane %v1547, %v1983
        %v1985 = vsel %vm1921, %v1984, %v1980
        %vm1986 = vcmask 1041409
        %vm1987 = vcmask 1042434
        %v1988 = vsel %vm1987, %v1922, %v1922
        %vm1989 = vcmask 1043459
        %v1990 = vsel %vm1989, %v1922, %v1988
        %v1991 = vsel %vm1987, %v1931, %v1931
        %v1992 = vsel %vm1989, %v1931, %v1991
        %v1993 = vsel %vm1987, %v1940, %v1940
        %v1994 = vsel %vm1989, %v1940, %v1993
        %v1995 = vsel %vm1987, %v1949, %v1949
        %v1996 = vsel %vm1989, %v1949, %v1995
        %v1997 = vsel %vm1987, %v1958, %v1958
        %v1998 = vsel %vm1989, %v1958, %v1997
        %v1999 = vsel %vm1987, %v1967, %v1967
        %v2000 = vsel %vm1989, %v1967, %v1999
        %v2001 = vsel %vm1987, %v1976, %v1976
        %v2002 = vsel %vm1989, %v1976, %v2001
        %v2003 = vsel %vm1987, %v1985, %v1985
        %v2004 = vsel %vm1989, %v1985, %v2003
        %v2013 = vmul.f32 %v1888, %v1990
        %v2014 = vmul.f32 %v1889, %v1992
        %v2015 = vmul.f32 %v1890, %v1994
        %v2016 = vmul.f32 %v1891, %v1996
        %v2017 = vmul.f32 %v1892, %v1998
        %v2018 = vmul.f32 %v1893, %v2000
        %v2019 = vmul.f32 %v1894, %v2002
        %v2020 = vmul.f32 %v1895, %v2004
        %v2021 = vmul.f32 %v2013, %v1186
        %v2022 = vmul.f32 %v2014, %v1210
        %v2023 = vmul.f32 %v2015, %v1193
        %v2024 = vmul.f32 %v2016, %v1211
        %v2025 = vmul.f32 %v2017, %v1202
        %v2026 = vmul.f32 %v2018, %v1212
        %v2027 = vmul.f32 %v2019, %v1209
        %v2028 = vmul.f32 %v2020, %v1213
        %v2029 = vtanh.pop %v2021
        %v2030 = vtanh.pop %v2022
        %v2031 = vtanh.pop %v2023
        %v2032 = vtanh.pop %v2024
        %v2033 = vtanh.pop %v2025
        %v2034 = vtanh.pop %v2026
        %v2035 = vtanh.pop %v2027
        %v2036 = vtanh.pop %v2028
        %v2037 = vcombine.low %v2029, %v2031
        %v2039 = vunpack.c.l.s4 1983009808
        %v2040 = vunpack.c.0.s8 %v2039
        %v2041 = vlaneseq
        %v2042 = vshrl.u32 %v2041, 7
        %v2043 = vsub.s32 %v2040, %v2042
        %v2044 = vrot.slane %v2037, %v2043
        %v2045 = vcombine.low %v2030, %v2032
        %v2047 = vunpack.c.l.s4 1983009808
        %v2048 = vunpack.c.0.s8 %v2047
        %v2049 = vlaneseq
        %v2050 = vshrl.u32 %v2049, 7
        %v2051 = vsub.s32 %v2048, %v2050
        %v2052 = vrot.slane %v2045, %v2051
        %v2053 = vcombine.low %v2033, %v2035
        %v2055 = vunpack.c.l.s4 1983009808
        %v2056 = vunpack.c.0.s8 %v2055
        %v2057 = vlaneseq
        %v2058 = vshrl.u32 %v2057, 7
        %v2059 = vsub.s32 %v2056, %v2058
        %v2060 = vrot.slane %v2053, %v2059
        %v2061 = vcombine.low %v2034, %v2036
        %v2063 = vunpack.c.l.s4 1983009808
        %v2064 = vunpack.c.0.s8 %v2063
        %v2065 = vlaneseq
        %v2066 = vshrl.u32 %v2065, 7
        %v2067 = vsub.s32 %v2064, %v2066
        %v2068 = vrot.slane %v2061, %v2067
        %v2069 = vcombine.low %v2044, %v2052
        %v2070 = vcombine.high %v2044, %v2052
        %v2072 = vunpack.c.l.s4 1934713408
        %v2073 = vunpack.c.0.s8 %v2072
        %v2074 = vlaneseq
        %v2075 = vshrl.u32 %v2074, 7
        %v2076 = vsub.s32 %v2073, %v2075
        %v2077 = vrot.slane %v2069, %v2076
        %v2079 = vunpack.c.l.s4 1934713408
        %v2080 = vunpack.c.0.s8 %v2079
        %v2081 = vlaneseq
        %v2082 = vshrl.u32 %v2081, 7
        %v2083 = vsub.s32 %v2080, %v2082
        %v2084 = vrot.slane %v2070, %v2083
        %v2085 = vcombine.low %v2060, %v2068
        %v2086 = vcombine.high %v2060, %v2068
        %v2088 = vunpack.c.l.s4 1934713408
        %v2089 = vunpack.c.0.s8 %v2088
        %v2090 = vlaneseq
        %v2091 = vshrl.u32 %v2090, 7
        %v2092 = vsub.s32 %v2089, %v2091
        %v2093 = vrot.slane %v2085, %v2092
        %v2095 = vunpack.c.l.s4 1934713408
        %v2096 = vunpack.c.0.s8 %v2095
        %v2097 = vlaneseq
        %v2098 = vshrl.u32 %v2097, 7
        %v2099 = vsub.s32 %v2096, %v2098
        %v2100 = vrot.slane %v2086, %v2099
        %v2101 = vcombine.low %v2077, %v2093
        %v2102 = vcombine.high %v2077, %v2093
        %v2103 = vcombine.low %v2084, %v2100
        %v2104 = vcombine.high %v2084, %v2100
        %2106 = vrot.lane.b32.xlu0 %v2102, 16
        %v2107 = vpop.permute.xlu0 %2106
        %2110 = vrot.lane.b32.xlu0 %v2103, 32
        %v2111 = vpop.permute.xlu0 %2110
        %2114 = vrot.lane.b32.xlu0 %v2104, 48
        %v2115 = vpop.permute.xlu0 %2114
        %v2117 = vsel %vm1467, %v2101, %v2107
        %vm2118 = vcmask 261120
        %v2119 = vsel %vm2118, %v2117, %v2111
        %vm2120 = vcmask 392192
        %v2121 = vsel %vm2120, %v2119, %v2115
        %v2122 = vmul.f32 %v1223, 0.5
        %v2123 = vmul.f32 %v1224, 0.5
        %v2124 = vmul.f32 %v1225, 0.5
        %v2125 = vmul.f32 %v1226, 0.5
        %v2126 = vmul.f32 %v1227, 0.5
        %v2127 = vmul.f32 %v1228, 0.5
        %v2128 = vmul.f32 %v1229, 0.5
        %v2129 = vmul.f32 %v1230, 0.5
        %v2130 = vmax.f32 %v2122, %v2029
        %v2131 = vmax.f32 %v2123, %v2030
        %v2132 = vmax.f32 %v2124, %v2031
        %v2133 = vmax.f32 %v2125, %v2032
        %v2134 = vmax.f32 %v2126, %v2033
        %v2135 = vmax.f32 %v2127, %v2034
        %v2136 = vmax.f32 %v2128, %v2035
        %v2137 = vmax.f32 %v2129, %v2036
        %v2138 = vsel %vm1263, %v2029, -inf
        %v2139 = vrot.slane %v2138, 4
        %v2140 = vmax.f32 %v2138, %v2139
        %v2141 = vrot.slane %v2140, 2
        %v2142 = vmax.f32 %v2140, %v2141
        %v2143 = vrot.slane %v2142, 1
        %v2144 = vmax.f32 %v2142, %v2143
        %v2145 = vsel %vm1263, %v2030, -inf
        %v2146 = vrot.slane %v2145, 4
        %v2147 = vmax.f32 %v2145, %v2146
        %v2148 = vrot.slane %v2147, 2
        %v2149 = vmax.f32 %v2147, %v2148
        %v2150 = vrot.slane %v2149, 1
        %v2151 = vmax.f32 %v2149, %v2150
        %v2152 = vsel %vm1263, %v2031, -inf
        %v2153 = vrot.slane %v2152, 4
        %v2154 = vmax.f32 %v2152, %v2153
        %v2155 = vrot.slane %v2154, 2
        %v2156 = vmax.f32 %v2154, %v2155
        %v2157 = vrot.slane %v2156, 1
        %v2158 = vmax.f32 %v2156, %v2157
        %v2159 = vsel %vm1263, %v2032, -inf
        %v2160 = vrot.slane %v2159, 4
        %v2161 = vmax.f32 %v2159, %v2160
        %v2162 = vrot.slane %v2161, 2
        %v2163 = vmax.f32 %v2161, %v2162
        %v2164 = vrot.slane %v2163, 1
        %v2165 = vmax.f32 %v2163, %v2164
        %v2166 = vsel %vm1263, %v2033, -inf
        %v2167 = vrot.slane %v2166, 4
        %v2168 = vmax.f32 %v2166, %v2167
        %v2169 = vrot.slane %v2168, 2
        %v2170 = vmax.f32 %v2168, %v2169
        %v2171 = vrot.slane %v2170, 1
        %v2172 = vmax.f32 %v2170, %v2171
        %v2173 = vsel %vm1263, %v2034, -inf
        %v2174 = vrot.slane %v2173, 4
        %v2175 = vmax.f32 %v2173, %v2174
        %v2176 = vrot.slane %v2175, 2
        %v2177 = vmax.f32 %v2175, %v2176
        %v2178 = vrot.slane %v2177, 1
        %v2179 = vmax.f32 %v2177, %v2178
        %v2180 = vsel %vm1263, %v2035, -inf
        %v2181 = vrot.slane %v2180, 4
        %v2182 = vmax.f32 %v2180, %v2181
        %v2183 = vrot.slane %v2182, 2
        %v2184 = vmax.f32 %v2182, %v2183
        %v2185 = vrot.slane %v2184, 1
        %v2186 = vmax.f32 %v2184, %v2185
        %v2187 = vsel %vm1263, %v2036, -inf
        %v2188 = vrot.slane %v2187, 4
        %v2189 = vmax.f32 %v2187, %v2188
        %v2190 = vrot.slane %v2189, 2
        %v2191 = vmax.f32 %v2189, %v2190
        %v2192 = vrot.slane %v2191, 1
        %v2193 = vmax.f32 %v2191, %v2192
        %v2194 = vld [vmem:[%s4] sm:$0xff]
        %v2195 = vld [vmem:[%s4 + $0x8] sm:$0xff]
        %v2196 = vld [vmem:[%s5] sm:$0x1]
        %v2198 = vlaneseq
        %v2199 = vshrl.u32 %v2198, 7
        %v2200 = vsub.s32 0, %v2199
        %v2201 = vrot.slane %v2196, %v2200
        %v2211 = vsel %vm1986, %v2151, %v2144
        %v2212 = vsel %vm1987, %v2158, %v2211
        %v2213 = vsel %vm1989, %v2165, %v2212
        %vm2214 = vcmask 1044484
        %v2215 = vsel %vm2214, %v2172, %v2213
        %vm2216 = vcmask 1045509
        %v2217 = vsel %vm2216, %v2179, %v2215
        %vm2218 = vcmask 1046534
        %v2219 = vsel %vm2218, %v2186, %v2217
        %vm2220 = vcmask 1047559
        %v2221 = vsel %vm2220, %v2193, %v2219
        %v2222 = vsel %vm1467, %v2221, 0
        %2224 = vmatprep.subr.mxu0 0.0
        %v2225 = vand.u32 %v2194, 4294901760
        %2226 = vmatpush1.msra.mxu0 %v2225
        %2227 = vmatprep.subr.mxu0 0.0
        %v2228 = vand.u32 %v2195, 4294901760
        %2229 = vmatpush1.msra.mxu0 %v2228
        %2230 = vmatprep.subr.mxu0 0.0
        %2231 = vmatpush1.msra.mxu0 0.0
        %2232 = vmatprep.subr.mxu0 0.0
        %2233 = vmatpush1.msra.mxu0 0.0
        %2234 = vmatprep.subr.mxu0 0.0
        %2235 = vmatpush1.msra.mxu0 0.0
        %2236 = vmatprep.subr.mxu0 0.0
        %2237 = vmatpush1.msra.mxu0 0.0
        %2238 = vmatprep.subr.mxu0 0.0
        %2239 = vmatpush1.msra.mxu0 0.0
        %2240 = vmatprep.subr.mxu0 0.0
        %2241 = vmatpush1.msra.mxu0 0.0
        %2242 = vmatprep.subr.mxu0 0.0
        %2243 = vmatpush1.msra.mxu0 0.0
        %2244 = vmatprep.subr.mxu0 0.0
        %2245 = vmatpush1.msra.mxu0 0.0
        %2246 = vmatprep.subr.mxu0 0.0
        %2247 = vmatpush1.msra.mxu0 0.0
        %2248 = vmatprep.subr.mxu0 0.0
        %2249 = vmatpush1.msra.mxu0 0.0
        %2250 = vmatprep.subr.mxu0 0.0
        %2251 = vmatpush1.msra.mxu0 0.0
        %2252 = vmatprep.subr.mxu0 0.0
        %2253 = vmatpush1.msra.mxu0 0.0
        %2254 = vmatprep.subr.mxu0 0.0
        %2255 = vmatpush1.msra.mxu0 0.0
        %2256 = vmatprep.subr.mxu0 0.0
        %2257 = vmatpush1.msra.mxu0 0.0
        %2258 = vmatprep.subr.mxu0 0.0
        %2259 = vmatpush1.msra.mxu0 0.0
        %2260 = vmatprep.subr.mxu0 0.0
        %2261 = vmatpush1.msra.mxu0 0.0
        %2262 = vmatprep.subr.mxu0 0.0
        %2263 = vmatpush1.msra.mxu0 0.0
        %2264 = vmatprep.subr.mxu0 0.0
        %2265 = vmatpush1.msra.mxu0 0.0
        %2266 = vmatprep.subr.mxu0 0.0
        %2267 = vmatpush1.msra.mxu0 0.0
        %2268 = vmatprep.subr.mxu0 0.0
        %2269 = vmatpush1.msra.mxu0 0.0
        %2270 = vmatprep.subr.mxu0 0.0
        %2271 = vmatpush1.msra.mxu0 0.0
        %2272 = vmatprep.subr.mxu0 0.0
        %2273 = vmatpush1.msra.mxu0 0.0
        %2274 = vmatprep.subr.mxu0 0.0
        %2275 = vmatpush1.msra.mxu0 0.0
        %2276 = vmatprep.subr.mxu0 0.0
        %2277 = vmatpush1.msra.mxu0 0.0
        %2278 = vmatprep.subr.mxu0 0.0
        %2279 = vmatpush1.msra.mxu0 0.0
        %2280 = vmatprep.subr.mxu0 0.0
        %2281 = vmatpush1.msra.mxu0 0.0
        %2282 = vmatprep.subr.mxu0 0.0
        %2283 = vmatpush1.msra.mxu0 0.0
        %2284 = vmatprep.subr.mxu0 0.0
        %2285 = vmatpush1.msra.mxu0 0.0
        %2286 = vmatprep.subr.mxu0 0.0
        %2287 = vmatpush1.msra.mxu0 0.0
        %2288 = vmatprep.subr.mxu0 0.0
        %2289 = vmatpush1.msra.mxu0 0.0
        %2290 = vmatprep.mubr.f32.mxu0 0.0
        %v2291 = vand.u32 %v2222, 4294901760
        %v2292 = vsub.f32 %v2222, %v2291
        %v2293 = vand.u32 %v2292, 4294901760
        %v2294 = vsub.f32 %v2292, %v2293
        %v2295 = vand.u32 %v2294, 4294901760
        %2296 = vmatmul.mubr.f32.gmra.mrb[0].mxu0 %v2295
        %v2297 = vpop.f32.mrb[0].mxu0
        %v2298 = vadd.f32 %v2201, %v2297
        %v2299 = vpop.f32.mrb[0].mxu0
        %2300 = vdwg.mxu0
        %2301 = vmatprep.subr.mxu0 0.0
        %v2302 = vand.u32 %v2194, 4294901760
        %v2303 = vsub.f32 %v2194, %v2302
        %v2304 = vand.u32 %v2303, 4294901760
        %v2305 = vsub.f32 %v2303, %v2304
        %v2306 = vand.u32 %v2305, 4294901760
        %2307 = vmatpush1.msra.mxu0 %v2306
        %2308 = vmatprep.subr.mxu0 0.0
        %v2309 = vand.u32 %v2195, 4294901760
        %v2310 = vsub.f32 %v2195, %v2309
        %v2311 = vand.u32 %v2310, 4294901760
        %v2312 = vsub.f32 %v2310, %v2311
        %v2313 = vand.u32 %v2312, 4294901760
        %2314 = vmatpush1.msra.mxu0 %v2313
        %2315 = vmatprep.subr.mxu0 0.0
        %2316 = vmatpush1.msra.mxu0 0.0
        %2317 = vmatprep.subr.mxu0 0.0
        %2318 = vmatpush1.msra.mxu0 0.0
        %2319 = vmatprep.subr.mxu0 0.0
        %2320 = vmatpush1.msra.mxu0 0.0
        %2321 = vmatprep.subr.mxu0 0.0
        %2322 = vmatpush1.msra.mxu0 0.0
        %2323 = vmatprep.subr.mxu0 0.0
        %2324 = vmatpush1.msra.mxu0 0.0
        %2325 = vmatprep.subr.mxu0 0.0
        %2326 = vmatpush1.msra.mxu0 0.0
        %2327 = vmatprep.subr.mxu0 0.0
        %2328 = vmatpush1.msra.mxu0 0.0
        %2329 = vmatprep.subr.mxu0 0.0
        %2330 = vmatpush1.msra.mxu0 0.0
        %2331 = vmatprep.subr.mxu0 0.0
        %2332 = vmatpush1.msra.mxu0 0.0
        %2333 = vmatprep.subr.mxu0 0.0
        %2334 = vmatpush1.msra.mxu0 0.0
        %2335 = vmatprep.subr.mxu0 0.0
        %2336 = vmatpush1.msra.mxu0 0.0
        %2337 = vmatprep.subr.mxu0 0.0
        %2338 = vmatpush1.msra.mxu0 0.0
        %2339 = vmatprep.subr.mxu0 0.0
        %2340 = vmatpush1.msra.mxu0 0.0
        %2341 = vmatprep.subr.mxu0 0.0
        %2342 = vmatpush1.msra.mxu0 0.0
        %2343 = vmatprep.subr.mxu0 0.0
        %2344 = vmatpush1.msra.mxu0 0.0
        %2345 = vmatprep.subr.mxu0 0.0
        %2346 = vmatpush1.msra.mxu0 0.0
        %2347 = vmatprep.subr.mxu0 0.0
        %2348 = vmatpush1.msra.mxu0 0.0
        %2349 = vmatprep.subr.mxu0 0.0
        %2350 = vmatpush1.msra.mxu0 0.0
        %2351 = vmatprep.subr.mxu0 0.0
        %2352 = vmatpush1.msra.mxu0 0.0
        %2353 = vmatprep.subr.mxu0 0.0
        %2354 = vmatpush1.msra.mxu0 0.0
        %2355 = vmatprep.subr.mxu0 0.0
        %2356 = vmatpush1.msra.mxu0 0.0
        %2357 = vmatprep.subr.mxu0 0.0
        %2358 = vmatpush1.msra.mxu0 0.0
        %2359 = vmatprep.subr.mxu0 0.0
        %2360 = vmatpush1.msra.mxu0 0.0
        %2361 = vmatprep.subr.mxu0 0.0
        %2362 = vmatpush1.msra.mxu0 0.0
        %2363 = vmatprep.subr.mxu0 0.0
        %2364 = vmatpush1.msra.mxu0 0.0
        %2365 = vmatprep.subr.mxu0 0.0
        %2366 = vmatpush1.msra.mxu0 0.0
        %2367 = vmatprep.subr.mxu0 0.0
        %2368 = vmatpush1.msra.mxu0 0.0
        %2369 = vmatprep.subr.mxu0 0.0
        %2370 = vmatpush1.msra.mxu0 0.0
        %2371 = vmatprep.subr.mxu0 0.0
        %2372 = vmatpush1.msra.mxu0 0.0
        %2373 = vmatprep.subr.mxu0 0.0
        %2374 = vmatpush1.msra.mxu0 0.0
        %2375 = vmatprep.mubr.f32.mxu0 0.0
        %v2376 = vand.u32 %v2222, 4294901760
        %2377 = vmatmul.mubr.f32.gmra.mrb[0].mxu0 %v2376
        %v2378 = vpop.f32.mrb[0].mxu0
        %v2379 = vadd.f32 %v2298, %v2378
        %v2380 = vpop.f32.mrb[0].mxu0
        %2381 = vdwg.mxu0
        %2382 = vmatprep.subr.mxu0 0.0
        %v2383 = vand.u32 %v2194, 4294901760
        %v2384 = vsub.f32 %v2194, %v2383
        %2385 = vmatpush1.msra.mxu0 %v2384
        %2386 = vmatprep.subr.mxu0 0.0
        %v2387 = vand.u32 %v2195, 4294901760
        %v2388 = vsub.f32 %v2195, %v2387
        %2389 = vmatpush1.msra.mxu0 %v2388
        %2390 = vmatprep.subr.mxu0 0.0
        %2391 = vmatpush1.msra.mxu0 0.0
        %2392 = vmatprep.subr.mxu0 0.0
        %2393 = vmatpush1.msra.mxu0 0.0
        %2394 = vmatprep.subr.mxu0 0.0
        %2395 = vmatpush1.msra.mxu0 0.0
        %2396 = vmatprep.subr.mxu0 0.0
        %2397 = vmatpush1.msra.mxu0 0.0
        %2398 = vmatprep.subr.mxu0 0.0
        %2399 = vmatpush1.msra.mxu0 0.0
        %2400 = vmatprep.subr.mxu0 0.0
        %2401 = vmatpush1.msra.mxu0 0.0
        %2402 = vmatprep.subr.mxu0 0.0
        %2403 = vmatpush1.msra.mxu0 0.0
        %2404 = vmatprep.subr.mxu0 0.0
        %2405 = vmatpush1.msra.mxu0 0.0
        %2406 = vmatprep.subr.mxu0 0.0
        %2407 = vmatpush1.msra.mxu0 0.0
        %2408 = vmatprep.subr.mxu0 0.0
        %2409 = vmatpush1.msra.mxu0 0.0
        %2410 = vmatprep.subr.mxu0 0.0
        %2411 = vmatpush1.msra.mxu0 0.0
        %2412 = vmatprep.subr.mxu0 0.0
        %2413 = vmatpush1.msra.mxu0 0.0
        %2414 = vmatprep.subr.mxu0 0.0
        %2415 = vmatpush1.msra.mxu0 0.0
        %2416 = vmatprep.subr.mxu0 0.0
        %2417 = vmatpush1.msra.mxu0 0.0
        %2418 = vmatprep.subr.mxu0 0.0
        %2419 = vmatpush1.msra.mxu0 0.0
        %2420 = vmatprep.subr.mxu0 0.0
        %2421 = vmatpush1.msra.mxu0 0.0
        %2422 = vmatprep.subr.mxu0 0.0
        %2423 = vmatpush1.msra.mxu0 0.0
        %2424 = vmatprep.subr.mxu0 0.0
        %2425 = vmatpush1.msra.mxu0 0.0
        %2426 = vmatprep.subr.mxu0 0.0
        %2427 = vmatpush1.msra.mxu0 0.0
        %2428 = vmatprep.subr.mxu0 0.0
        %2429 = vmatpush1.msra.mxu0 0.0
        %2430 = vmatprep.subr.mxu0 0.0
        %2431 = vmatpush1.msra.mxu0 0.0
        %2432 = vmatprep.subr.mxu0 0.0
        %2433 = vmatpush1.msra.mxu0 0.0
        %2434 = vmatprep.subr.mxu0 0.0
        %2435 = vmatpush1.msra.mxu0 0.0
        %2436 = vmatprep.subr.mxu0 0.0
        %2437 = vmatpush1.msra.mxu0 0.0
        %2438 = vmatprep.subr.mxu0 0.0
        %2439 = vmatpush1.msra.mxu0 0.0
        %2440 = vmatprep.subr.mxu0 0.0
        %2441 = vmatpush1.msra.mxu0 0.0
        %2442 = vmatprep.subr.mxu0 0.0
        %2443 = vmatpush1.msra.mxu0 0.0
        %2444 = vmatprep.subr.mxu0 0.0
        %2445 = vmatpush1.msra.mxu0 0.0
        %2446 = vmatprep.subr.mxu0 0.0
        %2447 = vmatpush1.msra.mxu0 0.0
        %2448 = vmatprep.subr.mxu0 0.0
        %2449 = vmatpush1.msra.mxu0 0.0
        %2450 = vmatprep.mubr.f32.mxu0 0.0
        %v2451 = vand.u32 %v2222, 4294901760
        %v2452 = vsub.f32 %v2222, %v2451
        %2453 = vmatmul.mubr.f32.gmra.mrb[0].mxu0 %v2452
        %v2454 = vpop.f32.mrb[0].mxu0
        %v2455 = vadd.f32 %v2379, %v2454
        %v2456 = vpop.f32.mrb[0].mxu0
        %2457 = vdwg.mxu0
        %2458 = vmatprep.subr.mxu0 0.0
        %v2459 = vand.u32 %v2194, 4294901760
        %2460 = vmatpush1.msra.mxu0 %v2459
        %2461 = vmatprep.subr.mxu0 0.0
        %v2462 = vand.u32 %v2195, 4294901760
        %2463 = vmatpush1.msra.mxu0 %v2462
        %2464 = vmatprep.subr.mxu0 0.0
        %2465 = vmatpush1.msra.mxu0 0.0
        %2466 = vmatprep.subr.mxu0 0.0
        %2467 = vmatpush1.msra.mxu0 0.0
        %2468 = vmatprep.subr.mxu0 0.0
        %2469 = vmatpush1.msra.mxu0 0.0
        %2470 = vmatprep.subr.mxu0 0.0
        %2471 = vmatpush1.msra.mxu0 0.0
        %2472 = vmatprep.subr.mxu0 0.0
        %2473 = vmatpush1.msra.mxu0 0.0
        %2474 = vmatprep.subr.mxu0 0.0
        %2475 = vmatpush1.msra.mxu0 0.0
        %2476 = vmatprep.subr.mxu0 0.0
        %2477 = vmatpush1.msra.mxu0 0.0
        %2478 = vmatprep.subr.mxu0 0.0
        %2479 = vmatpush1.msra.mxu0 0.0
        %2480 = vmatprep.subr.mxu0 0.0
        %2481 = vmatpush1.msra.mxu0 0.0
        %2482 = vmatprep.subr.mxu0 0.0
        %2483 = vmatpush1.msra.mxu0 0.0
        %2484 = vmatprep.subr.mxu0 0.0
        %2485 = vmatpush1.msra.mxu0 0.0
        %2486 = vmatprep.subr.mxu0 0.0
        %2487 = vmatpush1.msra.mxu0 0.0
        %2488 = vmatprep.subr.mxu0 0.0
        %2489 = vmatpush1.msra.mxu0 0.0
        %2490 = vmatprep.subr.mxu0 0.0
        %2491 = vmatpush1.msra.mxu0 0.0
        %2492 = vmatprep.subr.mxu0 0.0
        %2493 = vmatpush1.msra.mxu0 0.0
        %2494 = vmatprep.subr.mxu0 0.0
        %2495 = vmatpush1.msra.mxu0 0.0
        %2496 = vmatprep.subr.mxu0 0.0
        %2497 = vmatpush1.msra.mxu0 0.0
        %2498 = vmatprep.subr.mxu0 0.0
        %2499 = vmatpush1.msra.mxu0 0.0
        %2500 = vmatprep.subr.mxu0 0.0
        %2501 = vmatpush1.msra.mxu0 0.0
        %2502 = vmatprep.subr.mxu0 0.0
        %2503 = vmatpush1.msra.mxu0 0.0
        %2504 = vmatprep.subr.mxu0 0.0
        %2505 = vmatpush1.msra.mxu0 0.0
        %2506 = vmatprep.subr.mxu0 0.0
        %2507 = vmatpush1.msra.mxu0 0.0
        %2508 = vmatprep.subr.mxu0 0.0
        %2509 = vmatpush1.msra.mxu0 0.0
        %2510 = vmatprep.subr.mxu0 0.0
        %2511 = vmatpush1.msra.mxu0 0.0
        %2512 = vmatprep.subr.mxu0 0.0
        %2513 = vmatpush1.msra.mxu0 0.0
        %2514 = vmatprep.subr.mxu0 0.0
        %2515 = vmatpush1.msra.mxu0 0.0
        %2516 = vmatprep.subr.mxu0 0.0
        %2517 = vmatpush1.msra.mxu0 0.0
        %2518 = vmatprep.subr.mxu0 0.0
        %2519 = vmatpush1.msra.mxu0 0.0
        %2520 = vmatprep.subr.mxu0 0.0
        %2521 = vmatpush1.msra.mxu0 0.0
        %2522 = vmatprep.subr.mxu0 0.0
        %2523 = vmatpush1.msra.mxu0 0.0
        %2524 = vmatprep.mubr.f32.mxu0 0.0
        %v2525 = vand.u32 %v2222, 4294901760
        %v2526 = vsub.f32 %v2222, %v2525
        %v2527 = vand.u32 %v2526, 4294901760
        %2528 = vmatmul.mubr.f32.gmra.mrb[0].mxu0 %v2527
        %v2529 = vpop.f32.mrb[0].mxu0
        %v2530 = vadd.f32 %v2455, %v2529
        %v2531 = vpop.f32.mrb[0].mxu0
        %2532 = vdwg.mxu0
        %2533 = vmatprep.subr.mxu0 0.0
        %v2534 = vand.u32 %v2194, 4294901760
        %v2535 = vsub.f32 %v2194, %v2534
        %v2536 = vand.u32 %v2535, 4294901760
        %2537 = vmatpush1.msra.mxu0 %v2536
        %2538 = vmatprep.subr.mxu0 0.0
        %v2539 = vand.u32 %v2195, 4294901760
        %v2540 = vsub.f32 %v2195, %v2539
        %v2541 = vand.u32 %v2540, 4294901760
        %2542 = vmatpush1.msra.mxu0 %v2541
        %2543 = vmatprep.subr.mxu0 0.0
        %2544 = vmatpush1.msra.mxu0 0.0
        %2545 = vmatprep.subr.mxu0 0.0
        %2546 = vmatpush1.msra.mxu0 0.0
        %2547 = vmatprep.subr.mxu0 0.0
        %2548 = vmatpush1.msra.mxu0 0.0
        %2549 = vmatprep.subr.mxu0 0.0
        %2550 = vmatpush1.msra.mxu0 0.0
        %2551 = vmatprep.subr.mxu0 0.0
        %2552 = vmatpush1.msra.mxu0 0.0
        %2553 = vmatprep.subr.mxu0 0.0
        %2554 = vmatpush1.msra.mxu0 0.0
        %2555 = vmatprep.subr.mxu0 0.0
        %2556 = vmatpush1.msra.mxu0 0.0
        %2557 = vmatprep.subr.mxu0 0.0
        %2558 = vmatpush1.msra.mxu0 0.0
        %2559 = vmatprep.subr.mxu0 0.0
        %2560 = vmatpush1.msra.mxu0 0.0
        %2561 = vmatprep.subr.mxu0 0.0
        %2562 = vmatpush1.msra.mxu0 0.0
        %2563 = vmatprep.subr.mxu0 0.0
        %2564 = vmatpush1.msra.mxu0 0.0
        %2565 = vmatprep.subr.mxu0 0.0
        %2566 = vmatpush1.msra.mxu0 0.0
        %2567 = vmatprep.subr.mxu0 0.0
        %2568 = vmatpush1.msra.mxu0 0.0
        %2569 = vmatprep.subr.mxu0 0.0
        %2570 = vmatpush1.msra.mxu0 0.0
        %2571 = vmatprep.subr.mxu0 0.0
        %2572 = vmatpush1.msra.mxu0 0.0
        %2573 = vmatprep.subr.mxu0 0.0
        %2574 = vmatpush1.msra.mxu0 0.0
        %2575 = vmatprep.subr.mxu0 0.0
        %2576 = vmatpush1.msra.mxu0 0.0
        %2577 = vmatprep.subr.mxu0 0.0
        %2578 = vmatpush1.msra.mxu0 0.0
        %2579 = vmatprep.subr.mxu0 0.0
        %2580 = vmatpush1.msra.mxu0 0.0
        %2581 = vmatprep.subr.mxu0 0.0
        %2582 = vmatpush1.msra.mxu0 0.0
        %2583 = vmatprep.subr.mxu0 0.0
        %2584 = vmatpush1.msra.mxu0 0.0
        %2585 = vmatprep.subr.mxu0 0.0
        %2586 = vmatpush1.msra.mxu0 0.0
        %2587 = vmatprep.subr.mxu0 0.0
        %2588 = vmatpush1.msra.mxu0 0.0
        %2589 = vmatprep.subr.mxu0 0.0
        %2590 = vmatpush1.msra.mxu0 0.0
        %2591 = vmatprep.subr.mxu0 0.0
        %2592 = vmatpush1.msra.mxu0 0.0
        %2593 = vmatprep.subr.mxu0 0.0
        %2594 = vmatpush1.msra.mxu0 0.0
        %2595 = vmatprep.subr.mxu0 0.0
        %2596 = vmatpush1.msra.mxu0 0.0
        %2597 = vmatprep.subr.mxu0 0.0
        %2598 = vmatpush1.msra.mxu0 0.0
        %2599 = vmatprep.subr.mxu0 0.0
        %2600 = vmatpush1.msra.mxu0 0.0
        %2601 = vmatprep.subr.mxu0 0.0
        %2602 = vmatpush1.msra.mxu0 0.0
        %2603 = vmatprep.mubr.f32.mxu0 0.0
        %v2604 = vand.u32 %v2222, 4294901760
        %2605 = vmatmul.mubr.f32.gmra.mrb[0].mxu0 %v2604
        %v2606 = vpop.f32.mrb[0].mxu0
        %v2607 = vadd.f32 %v2530, %v2606
        %v2608 = vpop.f32.mrb[0].mxu0
        %2609 = vdwg.mxu0
        %2610 = vmatprep.subr.mxu0 0.0
        %v2611 = vand.u32 %v2194, 4294901760
        %2612 = vmatpush1.msra.mxu0 %v2611
        %2613 = vmatprep.subr.mxu0 0.0
        %v2614 = vand.u32 %v2195, 4294901760
        %2615 = vmatpush1.msra.mxu0 %v2614
        %2616 = vmatprep.subr.mxu0 0.0
        %2617 = vmatpush1.msra.mxu0 0.0
        %2618 = vmatprep.subr.mxu0 0.0
        %2619 = vmatpush1.msra.mxu0 0.0
        %2620 = vmatprep.subr.mxu0 0.0
        %2621 = vmatpush1.msra.mxu0 0.0
        %2622 = vmatprep.subr.mxu0 0.0
        %2623 = vmatpush1.msra.mxu0 0.0
        %2624 = vmatprep.subr.mxu0 0.0
        %2625 = vmatpush1.msra.mxu0 0.0
        %2626 = vmatprep.subr.mxu0 0.0
        %2627 = vmatpush1.msra.mxu0 0.0
        %2628 = vmatprep.subr.mxu0 0.0
        %2629 = vmatpush1.msra.mxu0 0.0
        %2630 = vmatprep.subr.mxu0 0.0
        %2631 = vmatpush1.msra.mxu0 0.0
        %2632 = vmatprep.subr.mxu0 0.0
        %2633 = vmatpush1.msra.mxu0 0.0
        %2634 = vmatprep.subr.mxu0 0.0
        %2635 = vmatpush1.msra.mxu0 0.0
        %2636 = vmatprep.subr.mxu0 0.0
        %2637 = vmatpush1.msra.mxu0 0.0
        %2638 = vmatprep.subr.mxu0 0.0
        %2639 = vmatpush1.msra.mxu0 0.0
        %2640 = vmatprep.subr.mxu0 0.0
        %2641 = vmatpush1.msra.mxu0 0.0
        %2642 = vmatprep.subr.mxu0 0.0
        %2643 = vmatpush1.msra.mxu0 0.0
        %2644 = vmatprep.subr.mxu0 0.0
        %2645 = vmatpush1.msra.mxu0 0.0
        %2646 = vmatprep.subr.mxu0 0.0
        %2647 = vmatpush1.msra.mxu0 0.0
        %2648 = vmatprep.subr.mxu0 0.0
        %2649 = vmatpush1.msra.mxu0 0.0
        %2650 = vmatprep.subr.mxu0 0.0
        %2651 = vmatpush1.msra.mxu0 0.0
        %2652 = vmatprep.subr.mxu0 0.0
        %2653 = vmatpush1.msra.mxu0 0.0
        %2654 = vmatprep.subr.mxu0 0.0
        %2655 = vmatpush1.msra.mxu0 0.0
        %2656 = vmatprep.subr.mxu0 0.0
        %2657 = vmatpush1.msra.mxu0 0.0
        %2658 = vmatprep.subr.mxu0 0.0
        %2659 = vmatpush1.msra.mxu0 0.0
        %2660 = vmatprep.subr.mxu0 0.0
        %2661 = vmatpush1.msra.mxu0 0.0
        %2662 = vmatprep.subr.mxu0 0.0
        %2663 = vmatpush1.msra.mxu0 0.0
        %2664 = vmatprep.subr.mxu0 0.0
        %2665 = vmatpush1.msra.mxu0 0.0
        %2666 = vmatprep.subr.mxu0 0.0
        %2667 = vmatpush1.msra.mxu0 0.0
        %2668 = vmatprep.subr.mxu0 0.0
        %2669 = vmatpush1.msra.mxu0 0.0
        %2670 = vmatprep.subr.mxu0 0.0
        %2671 = vmatpush1.msra.mxu0 0.0
        %2672 = vmatprep.subr.mxu0 0.0
        %2673 = vmatpush1.msra.mxu0 0.0
        %2674 = vmatprep.subr.mxu0 0.0
        %2675 = vmatpush1.msra.mxu0 0.0
        %2676 = vmatprep.mubr.f32.mxu0 0.0
        %v2677 = vand.u32 %v2222, 4294901760
        %2678 = vmatmul.mubr.f32.gmra.mrb[0].mxu0 %v2677
        %v2679 = vpop.f32.mrb[0].mxu0
        %v2680 = vadd.f32 %v2607, %v2679
        %v2681 = vpop.f32.mrb[0].mxu0
        %2682 = vdwg.mxu0
        %2683 = vst [vmem:[%s311] sm:$0xff] %v2680
        %p2684 = scmp.eq.s32.totalorder %s26, 7
        // Predicated region
        $region49: #{tpu_custom_call.1} parent=43 // pred_check
          %p2685 = pneg %p2684
        $region50: #{tpu_custom_call.1} parent=43 // pred_check_branch
          %2687 = sbr.rel (%p2685) target = $region52
        $region51: #{tpu_custom_call.1} parent=43 // pred_region
          %v2688 = vld [vmem:[#allocation2 + $0x8] sm:$0xff]
          %2689 = vst.msk [vmem:[#allocation9] sm:$0xff] %vm374, %v2688
          %2690 = vst.msk [vmem:[#allocation6] sm:$0xff] %vm374, %v2121
          %2691 = vst.msk [vmem:[#allocation8] sm:$0xf] %vm1263, %v2130
          %2692 = vst.msk [vmem:[#allocation8 + $0x4] sm:$0xf] %vm1263, %v2131
          %2693 = vst.msk [vmem:[#allocation8 + $0x8] sm:$0xf] %vm1263, %v2132
          %2694 = vst.msk [vmem:[#allocation8 + $0xc] sm:$0xf] %vm1263, %v2133
          %2695 = vst.msk [vmem:[#allocation8 + $0x10] sm:$0xf] %vm1263, %v2134
          %2696 = vst.msk [vmem:[#allocation8 + $0x14] sm:$0xf] %vm1263, %v2135
          %2697 = vst.msk [vmem:[#allocation8 + $0x18] sm:$0xf] %vm1263, %v2136
          %2698 = vst.msk [vmem:[#allocation8 + $0x1c] sm:$0xf] %vm1263, %v2137
        $region52: #{tpu_custom_call.1} parent=43 // pred_fallthru
          _
        %2699 = vst.msk [vmem:[#allocation3] sm:$0xf] %vm1263, %v2130
        %2700 = vst.msk [vmem:[#allocation3 + $0x4] sm:$0xf] %vm1263, %v2131
        %2701 = vst.msk [vmem:[#allocation3 + $0x8] sm:$0xf] %vm1263, %v2132
        %2702 = vst.msk [vmem:[#allocation3 + $0xc] sm:$0xf] %vm1263, %v2133
        %2703 = vst.msk [vmem:[#allocation3 + $0x10] sm:$0xf] %vm1263, %v2134
        %2704 = vst.msk [vmem:[#allocation3 + $0x14] sm:$0xf] %vm1263, %v2135
        %2705 = vst.msk [vmem:[#allocation3 + $0x18] sm:$0xf] %vm1263, %v2136
        %2706 = vst.msk [vmem:[#allocation3 + $0x1c] sm:$0xf] %vm1263, %v2137
        %2707 = vst.msk [vmem:[#allocation2 + $0x8] sm:$0xff] %vm374, %v2121
        %s2708 = sand.u32 %s165, 1
        %s2709 = scalar_lea.sflag [#allocation5], %s2708
        %s2710 = sand.u32 %s165, 1
        %s2711 = smul.addr %s2710, 8
        %s2712 = scalar_lea.vmem [#allocation4], %s2711
        // Predicated region
        $region53: #{tpu_custom_call.1} parent=43 // pred_check
          %p2713 = pneg %p175
        $region54: #{tpu_custom_call.1} parent=43 // pred_check_branch
          %2715 = sbr.rel (%p2713) target = $region56
        $region55: #{tpu_custom_call.1} parent=43 // pred_region
          %s2717 = ssub.s32 128, 128
          %2718 = vsyncadd %s2709, %s2717
          %s2719 = smul.addr %s26, 128
          %s2720 = scalar_lea.hbm %s6, %s2719
          %s2722 = sshll.u32 %s2712, 4
          %s2723 = int_to_ptr.vmem [resolvable:$true] %s2722
          %2725 = dma.vmem_to_hbm [thread:$0]  %s2723, 128, %s2720, %s2709
        $region56: #{tpu_custom_call.1} parent=43 // pred_fallthru
          _
        // Predicated region
        $region57: #{tpu_custom_call.1} parent=43 // pred_check
          %p2726 = pneg %p196
        $region58: #{tpu_custom_call.1} parent=43 // pred_check_branch
          %2728 = sbr.rel (%p2726) target = $region60
        $region59: #{tpu_custom_call.1} parent=43 // pred_region
          %s2730 = ssub.s32 128, 128
          %2731 = vsyncadd [#allocation7], %s2730
          %s2733 = sshll.u32 [#allocation6], 4
          %s2734 = int_to_ptr.vmem [resolvable:$true] %s2733
          %2736 = dma.vmem_to_hbm [thread:$0]  %s2734, 128, %s7, [#allocation7]
        $region60: #{tpu_custom_call.1} parent=43 // pred_fallthru
          _
        // Predicated region
        $region61: #{tpu_custom_call.1} parent=43 // pred_check
          %p2737 = pneg %p217
        $region62: #{tpu_custom_call.1} parent=43 // pred_check_branch
          %2739 = sbr.rel (%p2737) target = $region64
        $region63: #{tpu_custom_call.1} parent=43 // pred_region
          %s2741 = ssub.s32 512, 512
          %2742 = vsyncadd [#allocation7], %s2741
          %s2743 = sshll.u32 [#allocation8], 4
          %s2744 = int_to_ptr.vmem [resolvable:$true] %s2743
          %2749 = dma.vmem_to_hbm [thread:$0]  %s2744, 512, %s8, [#allocation7], 64, 64, 4
        $region64: #{tpu_custom_call.1} parent=43 // pred_fallthru
          _
        // Predicated region
        $region65: #{tpu_custom_call.1} parent=43 // pred_check
          %p2750 = pneg %p238
        $region66: #{tpu_custom_call.1} parent=43 // pred_check_branch
          %2752 = sbr.rel (%p2750) target = $region68
        $region67: #{tpu_custom_call.1} parent=43 // pred_region
          %s2754 = ssub.s32 128, 128
          %2755 = vsyncadd [#allocation10], %s2754
          %s2757 = sshll.u32 [#allocation9], 4
          %s2758 = int_to_ptr.vmem [resolvable:$true] %s2757
          %2760 = dma.vmem_to_hbm [thread:$0]  %s2758, 128, %s9, [#allocation10]
        $region68: #{tpu_custom_call.1} parent=43 // pred_fallthru
          _
        // Predicated region
        $region69: #{tpu_custom_call.1} parent=43 // pred_check
          %p2761 = pneg %p196
        $region70: #{tpu_custom_call.1} parent=43 // pred_check_branch
          %2763 = sbr.rel (%p2761) target = $region72
        $region71: #{tpu_custom_call.1} parent=43 // pred_region
          %2764 = dma.done [#allocation7], 128
        $region72: #{tpu_custom_call.1} parent=43 // pred_fallthru
          _
        // Predicated region
        $region73: #{tpu_custom_call.1} parent=43 // pred_check
          %p2765 = pneg %p217
        $region74: #{tpu_custom_call.1} parent=43 // pred_check_branch
          %2767 = sbr.rel (%p2765) target = $region76
        $region75: #{tpu_custom_call.1} parent=43 // pred_region
          %2768 = dma.done [#allocation7], 512
        $region76: #{tpu_custom_call.1} parent=43 // pred_fallthru
          _
        // Predicated region
        $region77: #{tpu_custom_call.1} parent=43 // pred_check
          %p2769 = pneg %p238
        $region78: #{tpu_custom_call.1} parent=43 // pred_check_branch
          %2771 = sbr.rel (%p2769) target = $region80
        $region79: #{tpu_custom_call.1} parent=43 // pred_region
          %2772 = dma.done [#allocation10], 128
        $region80: #{tpu_custom_call.1} parent=43 // pred_fallthru
          _
      $region44: #{tpu_custom_call.1} parent=5 // pred_fallthru
        _
      %p2773 = scmp.le.s32.totalorder 2, %s21
      // Predicated region
      $region81: #{tpu_custom_call.1} parent=5 // pred_check
        %p2774 = pneg %p2773
      $region82: #{tpu_custom_call.1} parent=5 // pred_check_branch
        %2776 = sbr.rel (%p2774) target = $region84
      $region83: #{tpu_custom_call.1} parent=5 // pred_region
        %s2777 = ssub.s32 %s21, 2
        // Predicated region
        $region85: #{tpu_custom_call.1} parent=83 // pred_check
          %p2778 = pneg %p181
        $region86: #{tpu_custom_call.1} parent=83 // pred_check_branch
          %2780 = sbr.rel (%p2778) target = $region88
        $region87: #{tpu_custom_call.1} parent=83 // pred_region
          %s2781 = sand.u32 %s166, 1
          %s2782 = scalar_lea.sflag [#allocation5], %s2781
          %s2783 = sand.u32 %s166, 1
          %s2784 = smul.addr %s2783, 8
          %s2785 = scalar_lea.vmem [#allocation4], %s2784
          %2786 = dma.done %s2782, 128
        $region88: #{tpu_custom_call.1} parent=83 // pred_fallthru
          _
      $region84: #{tpu_custom_call.1} parent=5 // pred_fallthru
        _
    $region6: #{tpu_custom_call.1} parent=1 // loop_footer
      %s25 = sadd.s32 1, %s21
    $region7: #{tpu_custom_call.1} parent=1 // loop_footer_branch
      %20 = sbr.rel target = $region3
    $region8: #{tpu_custom_call.1} parent=1 // loop_exit
      _
    %2787 = vsyncpa [#allocation5], 1
    %s2788 = scalar_lea.sflag [#allocation5], 1
    %2789 = vsyncpa %s2788, 1
    %2790 = vsyncpa [#allocation7], 1
    %2791 = vsyncpa [#allocation10], 1

</llo_original>
